<compile_context>
chip_gen: v6e
topology: v6e:2x2x1
jax: 0.10.0
libtpu: 0.0.40
codegen_flags: <defaults>
</compile_context>

<pallas_src>
import functools

import jax
import jax.numpy as jnp
from jax.experimental import pallas as pl
from jax.experimental.pallas import tpu as pltpu


def _softplus(x):
    # matches torch.nn.Softplus(beta=1, threshold=20)
    return jnp.where(x > 20.0, x, jnp.log1p(jnp.exp(jnp.minimum(x, 20.0))))


# --------------------------------------------------------------------------- kernel


def pst_encoder_kernel(num_heads, softmax_bf16,
                       x_ref, w_ref, mask_ref, Wbig_ref, Wout_ref, vecs_ref,
                       o_ref):
    f32 = jnp.float32
    bf16 = jnp.bfloat16
    sdt = bf16 if softmax_bf16 else f32

    M = x_ref.shape[0]              # bb * N rows in this batch block
    D = Wout_ref.shape[0]           # E * num_heads
    P = Wout_ref.shape[1]           # lane-padded output width
    dh = D // num_heads

    vecs = vecs_ref[...]            # (8, VW) f32 packed small params
    bemb = vecs[0:1, :D]
    bq = vecs[1:2, :D]
    bk = vecs[2:3, :D]
    bv = vecs[3:4, :D]
    gamma = vecs[4:5, :D]
    beta = vecs[5:6, :D]
    bout = vecs[6:7, :P]

    # ---- one fused projection: x @ [Wemb | Wemb@Wq_f | Wemb@Wk_f | Wemb@Wv] ----
    big = jnp.dot(x_ref[...].astype(bf16), Wbig_ref[...],
                  preferred_element_type=f32)                    # (M, 4D) f32
    x_emb = big[:, 0:D] + bemb
    q = big[:, D:2 * D] + bq                                     # 1/sqrt(dh) folded
    k = big[:, 2 * D:3 * D] + bk
    v0 = big[:, 3 * D:4 * D] + bv                                # outer W_v(x)

    # ---- key padding penalty as a (1, M) lane row ------------------------------
    key_abs = jax.lax.dot_general(
        jnp.ones((1, D), bf16), jnp.abs(x_emb).astype(bf16),
        (((1,), (1,)), ((), ())), preferred_element_type=f32)    # (1, M)
    # block-diagonal mask (host-precomputed) + key-padding penalty
    pen = mask_ref[...] + jnp.where(key_abs == 0.0, -1e30, 0.0)  # (M, M) f32

    # ---- per-head softmax over keys, summed over heads (1/H cancels in num/den) -
    avg_p = jnp.zeros((M, M), f32)
    for h in range(num_heads):
        qh = q[:, h * dh:(h + 1) * dh].astype(bf16)              # (M, dh)
        kh = k[:, h * dh:(h + 1) * dh].astype(bf16)
        s = jax.lax.dot_general(qh, kh, (((1,), (1,)), ((), ())),
                                preferred_element_type=f32) + pen
        s = s - jnp.max(s, axis=-1, keepdims=True)               # keep f32 (mask-safe)
        e = jnp.exp(s.astype(sdt))                               # masked -> exactly 0
        l = jnp.sum(e.astype(f32), axis=-1, keepdims=True)       # f32 row-sum
        inv = pl.reciprocal(l, approx=True).astype(sdt)
        avg_p = avg_p + e * inv                                  # f32 accumulator
    avg_pb = avg_p.astype(bf16)                                  # (M, M)

    # ---- reweight by `weights`, renormalize, apply to W_v(x) -------------------
    #   att = (P @ (w*V)) / (P @ w), den matmul fused into the num matmul.
    w = w_ref[...]                                               # (M, 1) f32
    rhs = jnp.concatenate(
        [(v0 * w).astype(bf16),
         jnp.broadcast_to(w, (M, 128)).astype(bf16)], axis=1)    # (M, D+128)
    nd = jnp.dot(avg_pb, rhs, preferred_element_type=f32)        # (M, D+128)
    att = nd[:, 0:D] * pl.reciprocal(nd[:, D:D + 1], approx=True)

    # ---- residual + softplus + layernorm + lane-dense output projection --------
    xr = x_emb + _softplus(att)
    mu = jnp.mean(xr, axis=-1, keepdims=True)
    var = jnp.mean(jnp.square(xr - mu), axis=-1, keepdims=True)
    xn = (xr - mu) * jax.lax.rsqrt(var + 1e-5) * gamma + beta
    o_ref[...] = jnp.dot(xn.astype(bf16), Wout_ref[...],
                         preferred_element_type=f32) + bout      # (M, P)


# --------------------------------------------------------------------------- wrapper


def pst_encoder(x, weights, packed, num_heads, *, target_rows=128,
                softmax_bf16=True):
    """x: (B, N, E) f32, weights: (B, N, 1) f32, packed: dict from pack_params."""
    B, N, E = x.shape
    D = E * num_heads
    P = packed["Wout"].shape[1]
    VW = packed["vecs"].shape[1]

    # Largest bb dividing B with bb*N <= target_rows; prefer M % 128 == 0 (lane-
    # dense scores), else M % 8 == 0; fall back to the full array (always legal).
    cap = max(target_rows, N)
    bb = None
    for mod in (128, 8):
        for d in range(1, B + 1):
            if B % d == 0 and d * N <= cap and (d * N) % mod == 0:
                bb = d
        if bb is not None:
            break
    if bb is None:
        bb = B
    M = bb * N
    grid = (B // bb,)

    x2 = x.reshape(B * N, E)
    w2 = weights.reshape(B * N, 1)

    # Block-diagonal additive mask (0 within a sample, -1e30 across samples),
    # built once on the host instead of 2x (M,M) iota/compare/select per step.
    sid = jnp.arange(M, dtype=jnp.int32) // N
    blkmask = jnp.where(sid[:, None] == sid[None, :], 0.0, -1e30).astype(jnp.float32)

    kernel = functools.partial(pst_encoder_kernel, num_heads, softmax_bf16)
    out2 = pl.pallas_call(
        kernel,
        out_shape=jax.ShapeDtypeStruct((B * N, P), jnp.float32),
        grid=grid,
        in_specs=[
            pl.BlockSpec((M, E), lambda b: (b, 0)),          # x (flattened rows)
            pl.BlockSpec((M, 1), lambda b: (b, 0)),          # weights (flattened)
            pl.BlockSpec((M, M), lambda b: (0, 0)),          # block-diag mask (resident)
            pl.BlockSpec((E, 4 * D), lambda b: (0, 0)),      # fused emb+QKV weights (bf16)
            pl.BlockSpec((D, P), lambda b: (0, 0)),          # Wout, lane-padded (bf16)
            pl.BlockSpec((8, VW), lambda b: (0, 0)),         # packed biases/LN (f32)
        ],
        out_specs=pl.BlockSpec((M, P), lambda b: (b, 0)),
        compiler_params=pltpu.CompilerParams(
            dimension_semantics=("parallel",)),
    )(x2, w2, blkmask, packed["Wbig"], packed["Wout"], packed["vecs"])
    return out2[:, :E].reshape(B, N, E)


def pack_params(raw, num_heads):
    """Fuse Wq.Wiq / Wk.Wik (scale folded), fuse Wemb into QKV, pad Wout, pack vecs."""
    HI = jax.lax.Precision.HIGHEST
    dot = functools.partial(jnp.dot, precision=HI)
    D = raw["Wq"].shape[0]
    E = raw["Wemb"].shape[0]
    dh = D // num_heads
    scale = float(dh) ** -0.5

    # MultiheadAttention in_proj fused into the outer W_q / W_k (scale into Q).
    Wq_f = dot(raw["Wq"], raw["Wiq"]) * scale
    bq_f = (dot(raw["bq"], raw["Wiq"]) + raw["biq"]) * scale
    Wk_f = dot(raw["Wk"], raw["Wik"])
    bk_f = dot(raw["bk"], raw["Wik"]) + raw["bik"]

    Wqkv = jnp.concatenate([Wq_f, Wk_f, raw["Wv"]], axis=1)          # (D, 3D)
    bqkv = jnp.concatenate([bq_f, bk_f, raw["bv"]], axis=1)          # (1, 3D)

    # Fuse the embedding matmul: x @ [Wemb | Wemb@Wqkv] gives x_emb and qkv at once.
    Wbig = jnp.concatenate([raw["Wemb"], dot(raw["Wemb"], Wqkv)], axis=1)  # (E, 4D)
    bqkv_big = dot(raw["bemb"], Wqkv) + bqkv                         # (1, 3D)

    # Lane-dense output projection (pad columns up to a multiple of 128).
    P = -(-E // 128) * 128
    Wout = jnp.pad(raw["Wout"], ((0, 0), (0, P - E)))
    bout = jnp.pad(raw["bout"], ((0, 0), (0, P - E)))

    VW = max(D, P)

    def pad_row(v):
        return jnp.pad(v, ((0, 0), (0, VW - v.shape[1])))

    vecs = jnp.concatenate(
        [pad_row(raw["bemb"]),
         pad_row(bqkv_big[:, 0:D]),
         pad_row(bqkv_big[:, D:2 * D]),
         pad_row(bqkv_big[:, 2 * D:3 * D]),
         pad_row(raw["gamma"]),
         pad_row(raw["beta"]),
         pad_row(bout),
         jnp.zeros((1, VW), jnp.float32)], axis=0)                   # (8, VW)
    return {"Wbig": Wbig, "Wout": Wout, "vecs": vecs.astype(jnp.float32)}


def to_kernel_dtypes(packed):
    return {"Wbig": packed["Wbig"].astype(jnp.bfloat16),
            "Wout": packed["Wout"].astype(jnp.bfloat16),
            "vecs": packed["vecs"]}


# --------------------------------------------------------------------------- references


def ref_module(x, weights, raw, num_heads):
    """Direct f32 transcription of PeriodicSetTransformerEncoder.forward."""
    HI = jax.lax.Precision.HIGHEST
    f32 = jnp.float32
    B, N, E = x.shape
    D = E * num_heads
    dh = D // num_heads
    dot = functools.partial(jnp.dot, precision=HI, preferred_element_type=f32)

    x_emb = dot(x, raw["Wemb"]) + raw["bemb"]
    mask = jnp.sum(jnp.abs(x_emb), axis=-1) == 0.0                 # key_padding_mask
    q0 = dot(x_emb, raw["Wq"]) + raw["bq"]
    k0 = dot(x_emb, raw["Wk"]) + raw["bk"]
    v0 = dot(x_emb, raw["Wv"]) + raw["bv"]
    q = dot(q0, raw["Wiq"]) + raw["biq"]                           # MHA in_proj (q)
    k = dot(k0, raw["Wik"]) + raw["bik"]                           # MHA in_proj (k)
    qh = q.reshape(B, N, num_heads, dh).transpose(0, 2, 1, 3)
    kh = k.reshape(B, N, num_heads, dh).transpose(0, 2, 1, 3)
    s = jnp.einsum("bhid,bhjd->bhij", qh, kh, precision=HI) / jnp.sqrt(float(dh))
    s = jnp.where(mask[:, None, None, :], -1e30, s)
    p = jax.nn.softmax(s, axis=-1)
    aw = jnp.mean(p, axis=1)                                       # average heads
    aw = aw * jnp.transpose(weights, (0, 2, 1))
    aw = aw / jnp.sum(aw, axis=-1, keepdims=True)
    att = jnp.einsum("bij,bjd->bid", aw, v0, precision=HI)
    xr = x_emb + _softplus(att)
    mu = jnp.mean(xr, axis=-1, keepdims=True)
    var = jnp.mean(jnp.square(xr - mu), axis=-1, keepdims=True)
    xn = (xr - mu) * jax.lax.rsqrt(var + 1e-5) * raw["gamma"] + raw["beta"]
    return dot(xn, raw["Wout"]) + raw["bout"]


def ref_packed(x, weights, packed, num_heads, use_bf16):
    """Mirror of the kernel's fused algebra (mathematically == ref_module)."""
    HI = jax.lax.Precision.HIGHEST
    f32 = jnp.float32
    bf16 = jnp.bfloat16
    cdt = bf16 if use_bf16 else f32

    def mm(a, b):
        return jnp.dot(a.astype(cdt), b.astype(cdt),
                       preferred_element_type=f32, precision=HI)

    B, N, E = x.shape
    D = packed["Wout"].shape[0]
    P = packed["Wout"].shape[1]
    dh = D // num_heads
    vecs = packed["vecs"].astype(f32)

    x2 = x.reshape(B * N, E)
    big = mm(x2, packed["Wbig"])                                   # (B*N, 4D)
    x_emb = big[:, 0:D] + vecs[0:1, :D]
    q = big[:, D:2 * D] + vecs[1:2, :D]
    k = big[:, 2 * D:3 * D] + vecs[2:3, :D]
    v = big[:, 3 * D:4 * D] + vecs[3:4, :D]

    key_pad = (jnp.sum(jnp.abs(x_emb), axis=-1) == 0.0).reshape(B, 1, 1, N)
    q4 = q.reshape(B, N, num_heads, dh).transpose(0, 2, 1, 3).astype(cdt)
    k4 = k.reshape(B, N, num_heads, dh).transpose(0, 2, 1, 3).astype(cdt)
    s = jnp.einsum("bhid,bhjd->bhij", q4, k4,
                   preferred_element_type=f32, precision=HI)       # scale pre-folded
    s = jnp.where(key_pad, -1e30, s)
    s = s - jnp.max(s, axis=-1, keepdims=True)
    if use_bf16:
        e = jnp.exp(s.astype(bf16))
        l = jnp.sum(e.astype(f32), axis=-1, keepdims=True)
        p = (e * (1.0 / l).astype(bf16)).astype(f32)
    else:
        e = jnp.exp(s)
        p = e / jnp.sum(e, axis=-1, keepdims=True)
    sum_p = jnp.sum(p, axis=1)                                     # 1/H cancels in num/den

    v3 = v.reshape(B, N, D)
    w3 = weights.astype(f32)
    num = jnp.einsum("bij,bjd->bid", sum_p.astype(cdt), (v3 * w3).astype(cdt),
                     preferred_element_type=f32, precision=HI)
    den = jnp.einsum("bij,bjd->bid", sum_p.astype(cdt), w3.astype(cdt),
                     preferred_element_type=f32, precision=HI)
    att = num / den
    xr = x_emb.reshape(B, N, D) + _softplus(att)
    mu = jnp.mean(xr, axis=-1, keepdims=True)
    var = jnp.mean(jnp.square(xr - mu), axis=-1, keepdims=True)
    xn = (xr - mu) * jax.lax.rsqrt(var + 1e-5) * vecs[4:5, :D] + vecs[5:6, :D]
    out = mm(xn.reshape(B * N, D), packed["Wout"]) + vecs[6:7, :P]
    return out[:, :E].reshape(B, N, E)


def init_params(key, embedding_dim, num_heads):
    E = embedding_dim
    D = E * num_heads
    ks = jax.random.split(key, 9)

    def lin(k, fin, fout):
        kw, kb = jax.random.split(k)
        w = jax.random.normal(kw, (fin, fout), jnp.float32) / jnp.sqrt(float(fin))
        b = jax.random.normal(kb, (1, fout), jnp.float32) * 0.02
        return w, b

    Wemb, bemb = lin(ks[0], E, D)
    Wq, bq = lin(ks[1], D, D)
    Wk, bk = lin(ks[2], D, D)
    Wv, bv = lin(ks[3], D, D)
    Wiq, biq = lin(ks[4], D, D)       # MultiheadAttention in_proj, q slice
    Wik, bik = lin(ks[5], D, D)       # MultiheadAttention in_proj, k slice
    Wout, bout = lin(ks[6], D, E)
    gamma = 1.0 + 0.1 * jax.random.normal(ks[7], (1, D), jnp.float32)
    beta = 0.02 * jax.random.normal(ks[8], (1, D), jnp.float32)
    return dict(Wemb=Wemb, bemb=bemb, Wq=Wq, bq=bq, Wk=Wk, bk=bk, Wv=Wv, bv=bv,
                Wiq=Wiq, biq=biq, Wik=Wik, bik=bik,
                gamma=gamma, beta=beta, Wout=Wout, bout=bout)


if __name__ == "__main__":
    B, N, E, H = 64, 8, 32, 4         # embedding_dim=32, num_heads=4 -> D=128
    key = jax.random.PRNGKey(0)
    kx, kw, kp = jax.random.split(key, 3)
    x = jax.random.normal(kx, (B, N, E), jnp.float32)
    weights = jax.random.uniform(kw, (B, N, 1), jnp.float32, minval=0.1, maxval=1.0)
    raw = init_params(kp, E, H)

    packed_f32 = pack_params(raw, H)
    packed_bf16 = to_kernel_dtypes(packed_f32)

    out = jax.block_until_ready(pst_encoder(x, weights, packed_bf16, H))
    assert out.shape == (B, N, E)

    # Check 1: the fused/packed algebra equals the original module algebra (f32).
    r_mod = ref_module(x, weights, raw, H)
    r_pack = ref_packed(x, weights, packed_f32, H, use_bf16=False)
    err_algebra = float(jnp.max(jnp.abs(r_pack - r_mod)))
    assert err_algebra < 1e-3, f"fused algebra mismatch: {err_algebra}"

    # Check 2: the kernel matches the packed reference with matching bf16 numerics.
    r_bf16 = ref_packed(x, weights, packed_bf16, H, use_bf16=True)
    err = float(jnp.max(jnp.abs(out - r_bf16)))
    assert err < 2e-2, f"kernel mismatch vs reference: {err}"

    print("KERNEL_OK")
</pallas_src>

<mosaic_0001>
module attributes {stable_mosaic.version = 11 : i64} {
  func.func @pst_encoder_kernel(%arg0: i32, %arg1: memref<128x32xf32, #tpu.memory_space<vmem>>, %arg2: memref<128x1xf32, #tpu.memory_space<vmem>>, %arg3: memref<128x128xf32, #tpu.memory_space<vmem>>, %arg4: memref<32x512xbf16, #tpu.memory_space<vmem>>, %arg5: memref<128x128xbf16, #tpu.memory_space<vmem>>, %arg6: memref<8x128xf32, #tpu.memory_space<vmem>>, %arg7: memref<128x128xf32, #tpu.memory_space<vmem>>) attributes {dimension_semantics = [#tpu.dimension_semantics<parallel>], iteration_bounds = array<i64: 4>, scalar_prefetch = 0 : i64, scratch_operands = 0 : i64, tpu.core_type = #tpu.core_type<tc>, window_params = [{transform_indices = @transform_0, window_bounds = array<i64: 128, 32>}, {transform_indices = @transform_1, window_bounds = array<i64: 128, 1>}, {pipeline_mode = #tpu.pipeline_mode<synchronous>, transform_indices = @transform_2, window_bounds = array<i64: 128, 128>}, {pipeline_mode = #tpu.pipeline_mode<synchronous>, transform_indices = @transform_3, window_bounds = array<i64: 32, 512>}, {pipeline_mode = #tpu.pipeline_mode<synchronous>, transform_indices = @transform_4, window_bounds = array<i64: 128, 128>}, {pipeline_mode = #tpu.pipeline_mode<synchronous>, transform_indices = @transform_5, window_bounds = array<i64: 8, 128>}, {transform_indices = @transform_6, window_bounds = array<i64: 128, 128>}]} {
    %c0 = arith.constant 0 : index
    %c0_0 = arith.constant 0 : index
    %0 = vector.load %arg6[%c0, %c0_0] : memref<8x128xf32, #tpu.memory_space<vmem>>, vector<8x128xf32>
    %1 = vector.extract_strided_slice %0 {offsets = [0, 0], sizes = [1, 128], strides = [1, 1]} : vector<8x128xf32> to vector<1x128xf32>
    %2 = vector.extract_strided_slice %0 {offsets = [1, 0], sizes = [1, 128], strides = [1, 1]} : vector<8x128xf32> to vector<1x128xf32>
    %3 = vector.extract_strided_slice %0 {offsets = [2, 0], sizes = [1, 128], strides = [1, 1]} : vector<8x128xf32> to vector<1x128xf32>
    %4 = vector.extract_strided_slice %0 {offsets = [3, 0], sizes = [1, 128], strides = [1, 1]} : vector<8x128xf32> to vector<1x128xf32>
    %5 = vector.extract_strided_slice %0 {offsets = [4, 0], sizes = [1, 128], strides = [1, 1]} : vector<8x128xf32> to vector<1x128xf32>
    %6 = vector.extract_strided_slice %0 {offsets = [5, 0], sizes = [1, 128], strides = [1, 1]} : vector<8x128xf32> to vector<1x128xf32>
    %7 = vector.extract_strided_slice %0 {offsets = [6, 0], sizes = [1, 128], strides = [1, 1]} : vector<8x128xf32> to vector<1x128xf32>
    %c0_1 = arith.constant 0 : index
    %c0_2 = arith.constant 0 : index
    %8 = vector.load %arg1[%c0_1, %c0_2] : memref<128x32xf32, #tpu.memory_space<vmem>>, vector<128x32xf32>
    %9 = arith.truncf %8 : vector<128x32xf32> to vector<128x32xbf16>
    %c0_3 = arith.constant 0 : index
    %c0_4 = arith.constant 0 : index
    %10 = vector.load %arg4[%c0_3, %c0_4] : memref<32x512xbf16, #tpu.memory_space<vmem>>, vector<32x512xbf16>
    %cst = arith.constant dense<0.000000e+00> : vector<128x512xf32>
    %11 = tpu.matmul %9, %10, %cst {dimension_numbers = #tpu.dot_dimension_numbers<[1], [0], [0], [1], [0, 0, 1, 1], [], []>} : vector<128x32xbf16>, vector<32x512xbf16>, vector<128x512xf32> -> vector<128x512xf32>
    %12 = vector.extract_strided_slice %11 {offsets = [0, 0], sizes = [128, 128], strides = [1, 1]} : vector<128x512xf32> to vector<128x128xf32>
    %13 = vector.broadcast %1 : vector<1x128xf32> to vector<128x128xf32>
    %14 = arith.addf %12, %13 : vector<128x128xf32>
    %15 = vector.extract_strided_slice %11 {offsets = [0, 128], sizes = [128, 128], strides = [1, 1]} : vector<128x512xf32> to vector<128x128xf32>
    %16 = vector.broadcast %2 : vector<1x128xf32> to vector<128x128xf32>
    %17 = arith.addf %15, %16 : vector<128x128xf32>
    %18 = vector.extract_strided_slice %11 {offsets = [0, 256], sizes = [128, 128], strides = [1, 1]} : vector<128x512xf32> to vector<128x128xf32>
    %19 = vector.broadcast %3 : vector<1x128xf32> to vector<128x128xf32>
    %20 = arith.addf %18, %19 : vector<128x128xf32>
    %21 = vector.extract_strided_slice %11 {offsets = [0, 384], sizes = [128, 128], strides = [1, 1]} : vector<128x512xf32> to vector<128x128xf32>
    %22 = vector.broadcast %4 : vector<1x128xf32> to vector<128x128xf32>
    %23 = arith.addf %21, %22 : vector<128x128xf32>
    %cst_5 = arith.constant 1.000000e+00 : bf16
    %24 = vector.broadcast %cst_5 : bf16 to vector<1x128xbf16>
    %25 = math.absf %14 : vector<128x128xf32>
    %26 = arith.truncf %25 : vector<128x128xf32> to vector<128x128xbf16>
    %cst_6 = arith.constant dense<0.000000e+00> : vector<1x128xf32>
    %27 = tpu.matmul %24, %26, %cst_6 {dimension_numbers = #tpu.dot_dimension_numbers<[1], [1], [0], [0], [0, 0, 1, 0], [], []>} : vector<1x128xbf16>, vector<128x128xbf16>, vector<1x128xf32> -> vector<1x128xf32>
    %c0_7 = arith.constant 0 : index
    %c0_8 = arith.constant 0 : index
    %28 = vector.load %arg3[%c0_7, %c0_8] : memref<128x128xf32, #tpu.memory_space<vmem>>, vector<128x128xf32>
    %cst_9 = arith.constant 0.000000e+00 : f32
    %29 = vector.broadcast %cst_9 : f32 to vector<1x128xf32>
    %30 = arith.cmpf oeq, %27, %29 : vector<1x128xf32>
    %cst_10 = arith.constant -1.000000e+30 : f32
    %cst_11 = arith.constant 0.000000e+00 : f32
    %31 = vector.broadcast %cst_10 : f32 to vector<1x128xf32>
    %32 = vector.broadcast %cst_11 : f32 to vector<1x128xf32>
    %33 = arith.select %30, %31, %32 : vector<1x128xi1>, vector<1x128xf32>
    %34 = vector.broadcast %33 : vector<1x128xf32> to vector<128x128xf32>
    %35 = arith.addf %28, %34 : vector<128x128xf32>
    %cst_12 = arith.constant 0.000000e+00 : f32
    %36 = vector.broadcast %cst_12 : f32 to vector<128x128xf32>
    %37 = vector.extract_strided_slice %17 {offsets = [0, 0], sizes = [128, 32], strides = [1, 1]} : vector<128x128xf32> to vector<128x32xf32>
    %38 = arith.truncf %37 : vector<128x32xf32> to vector<128x32xbf16>
    %39 = vector.extract_strided_slice %20 {offsets = [0, 0], sizes = [128, 32], strides = [1, 1]} : vector<128x128xf32> to vector<128x32xf32>
    %40 = arith.truncf %39 : vector<128x32xf32> to vector<128x32xbf16>
    %cst_13 = arith.constant dense<0.000000e+00> : vector<128x128xf32>
    %41 = tpu.matmul %38, %40, %cst_13 {dimension_numbers = #tpu.dot_dimension_numbers<[1], [1], [0], [0], [0, 0, 1, 0], [], []>} : vector<128x32xbf16>, vector<128x32xbf16>, vector<128x128xf32> -> vector<128x128xf32>
    %42 = arith.addf %41, %35 : vector<128x128xf32>
    %cst_14 = arith.constant dense<0xFF800000> : vector<128xf32>
    %43 = vector.multi_reduction <maximumf>, %42, %cst_14 [1] : vector<128x128xf32> to vector<128xf32>
    %44 = vector.shape_cast %43 : vector<128xf32> to vector<128x1xf32>
    %45 = vector.broadcast %44 : vector<128x1xf32> to vector<128x128xf32>
    %46 = arith.subf %42, %45 : vector<128x128xf32>
    %47 = arith.truncf %46 : vector<128x128xf32> to vector<128x128xbf16>
    %48 = math.exp %47 : vector<128x128xbf16>
    %49 = arith.extf %48 : vector<128x128xbf16> to vector<128x128xf32>
    %cst_15 = arith.constant dense<0.000000e+00> : vector<128xf32>
    %50 = vector.multi_reduction <add>, %49, %cst_15 [1] : vector<128x128xf32> to vector<128xf32>
    %51 = vector.shape_cast %50 : vector<128xf32> to vector<128x1xf32>
    %52 = tpu.reciprocal %51 {approx = true} : vector<128x1xf32> -> vector<128x1xf32>
    %53 = arith.truncf %52 : vector<128x1xf32> to vector<128x1xbf16>
    %54 = vector.broadcast %53 : vector<128x1xbf16> to vector<128x128xbf16>
    %55 = arith.mulf %48, %54 : vector<128x128xbf16>
    %56 = arith.extf %55 : vector<128x128xbf16> to vector<128x128xf32>
    %57 = arith.addf %36, %56 : vector<128x128xf32>
    %58 = vector.extract_strided_slice %17 {offsets = [0, 32], sizes = [128, 32], strides = [1, 1]} : vector<128x128xf32> to vector<128x32xf32>
    %59 = arith.truncf %58 : vector<128x32xf32> to vector<128x32xbf16>
    %60 = vector.extract_strided_slice %20 {offsets = [0, 32], sizes = [128, 32], strides = [1, 1]} : vector<128x128xf32> to vector<128x32xf32>
    %61 = arith.truncf %60 : vector<128x32xf32> to vector<128x32xbf16>
    %cst_16 = arith.constant dense<0.000000e+00> : vector<128x128xf32>
    %62 = tpu.matmul %59, %61, %cst_16 {dimension_numbers = #tpu.dot_dimension_numbers<[1], [1], [0], [0], [0, 0, 1, 0], [], []>} : vector<128x32xbf16>, vector<128x32xbf16>, vector<128x128xf32> -> vector<128x128xf32>
    %63 = arith.addf %62, %35 : vector<128x128xf32>
    %cst_17 = arith.constant dense<0xFF800000> : vector<128xf32>
    %64 = vector.multi_reduction <maximumf>, %63, %cst_17 [1] : vector<128x128xf32> to vector<128xf32>
    %65 = vector.shape_cast %64 : vector<128xf32> to vector<128x1xf32>
    %66 = vector.broadcast %65 : vector<128x1xf32> to vector<128x128xf32>
    %67 = arith.subf %63, %66 : vector<128x128xf32>
    %68 = arith.truncf %67 : vector<128x128xf32> to vector<128x128xbf16>
    %69 = math.exp %68 : vector<128x128xbf16>
    %70 = arith.extf %69 : vector<128x128xbf16> to vector<128x128xf32>
    %cst_18 = arith.constant dense<0.000000e+00> : vector<128xf32>
    %71 = vector.multi_reduction <add>, %70, %cst_18 [1] : vector<128x128xf32> to vector<128xf32>
    %72 = vector.shape_cast %71 : vector<128xf32> to vector<128x1xf32>
    %73 = tpu.reciprocal %72 {approx = true} : vector<128x1xf32> -> vector<128x1xf32>
    %74 = arith.truncf %73 : vector<128x1xf32> to vector<128x1xbf16>
    %75 = vector.broadcast %74 : vector<128x1xbf16> to vector<128x128xbf16>
    %76 = arith.mulf %69, %75 : vector<128x128xbf16>
    %77 = arith.extf %76 : vector<128x128xbf16> to vector<128x128xf32>
    %78 = arith.addf %57, %77 : vector<128x128xf32>
    %79 = vector.extract_strided_slice %17 {offsets = [0, 64], sizes = [128, 32], strides = [1, 1]} : vector<128x128xf32> to vector<128x32xf32>
    %80 = arith.truncf %79 : vector<128x32xf32> to vector<128x32xbf16>
    %81 = vector.extract_strided_slice %20 {offsets = [0, 64], sizes = [128, 32], strides = [1, 1]} : vector<128x128xf32> to vector<128x32xf32>
    %82 = arith.truncf %81 : vector<128x32xf32> to vector<128x32xbf16>
    %cst_19 = arith.constant dense<0.000000e+00> : vector<128x128xf32>
    %83 = tpu.matmul %80, %82, %cst_19 {dimension_numbers = #tpu.dot_dimension_numbers<[1], [1], [0], [0], [0, 0, 1, 0], [], []>} : vector<128x32xbf16>, vector<128x32xbf16>, vector<128x128xf32> -> vector<128x128xf32>
    %84 = arith.addf %83, %35 : vector<128x128xf32>
    %cst_20 = arith.constant dense<0xFF800000> : vector<128xf32>
    %85 = vector.multi_reduction <maximumf>, %84, %cst_20 [1] : vector<128x128xf32> to vector<128xf32>
    %86 = vector.shape_cast %85 : vector<128xf32> to vector<128x1xf32>
    %87 = vector.broadcast %86 : vector<128x1xf32> to vector<128x128xf32>
    %88 = arith.subf %84, %87 : vector<128x128xf32>
    %89 = arith.truncf %88 : vector<128x128xf32> to vector<128x128xbf16>
    %90 = math.exp %89 : vector<128x128xbf16>
    %91 = arith.extf %90 : vector<128x128xbf16> to vector<128x128xf32>
    %cst_21 = arith.constant dense<0.000000e+00> : vector<128xf32>
    %92 = vector.multi_reduction <add>, %91, %cst_21 [1] : vector<128x128xf32> to vector<128xf32>
    %93 = vector.shape_cast %92 : vector<128xf32> to vector<128x1xf32>
    %94 = tpu.reciprocal %93 {approx = true} : vector<128x1xf32> -> vector<128x1xf32>
    %95 = arith.truncf %94 : vector<128x1xf32> to vector<128x1xbf16>
    %96 = vector.broadcast %95 : vector<128x1xbf16> to vector<128x128xbf16>
    %97 = arith.mulf %90, %96 : vector<128x128xbf16>
    %98 = arith.extf %97 : vector<128x128xbf16> to vector<128x128xf32>
    %99 = arith.addf %78, %98 : vector<128x128xf32>
    %100 = vector.extract_strided_slice %17 {offsets = [0, 96], sizes = [128, 32], strides = [1, 1]} : vector<128x128xf32> to vector<128x32xf32>
    %101 = arith.truncf %100 : vector<128x32xf32> to vector<128x32xbf16>
    %102 = vector.extract_strided_slice %20 {offsets = [0, 96], sizes = [128, 32], strides = [1, 1]} : vector<128x128xf32> to vector<128x32xf32>
    %103 = arith.truncf %102 : vector<128x32xf32> to vector<128x32xbf16>
    %cst_22 = arith.constant dense<0.000000e+00> : vector<128x128xf32>
    %104 = tpu.matmul %101, %103, %cst_22 {dimension_numbers = #tpu.dot_dimension_numbers<[1], [1], [0], [0], [0, 0, 1, 0], [], []>} : vector<128x32xbf16>, vector<128x32xbf16>, vector<128x128xf32> -> vector<128x128xf32>
    %105 = arith.addf %104, %35 : vector<128x128xf32>
    %cst_23 = arith.constant dense<0xFF800000> : vector<128xf32>
    %106 = vector.multi_reduction <maximumf>, %105, %cst_23 [1] : vector<128x128xf32> to vector<128xf32>
    %107 = vector.shape_cast %106 : vector<128xf32> to vector<128x1xf32>
    %108 = vector.broadcast %107 : vector<128x1xf32> to vector<128x128xf32>
    %109 = arith.subf %105, %108 : vector<128x128xf32>
    %110 = arith.truncf %109 : vector<128x128xf32> to vector<128x128xbf16>
    %111 = math.exp %110 : vector<128x128xbf16>
    %112 = arith.extf %111 : vector<128x128xbf16> to vector<128x128xf32>
    %cst_24 = arith.constant dense<0.000000e+00> : vector<128xf32>
    %113 = vector.multi_reduction <add>, %112, %cst_24 [1] : vector<128x128xf32> to vector<128xf32>
    %114 = vector.shape_cast %113 : vector<128xf32> to vector<128x1xf32>
    %115 = tpu.reciprocal %114 {approx = true} : vector<128x1xf32> -> vector<128x1xf32>
    %116 = arith.truncf %115 : vector<128x1xf32> to vector<128x1xbf16>
    %117 = vector.broadcast %116 : vector<128x1xbf16> to vector<128x128xbf16>
    %118 = arith.mulf %111, %117 : vector<128x128xbf16>
    %119 = arith.extf %118 : vector<128x128xbf16> to vector<128x128xf32>
    %120 = arith.addf %99, %119 : vector<128x128xf32>
    %121 = arith.truncf %120 : vector<128x128xf32> to vector<128x128xbf16>
    %c0_25 = arith.constant 0 : index
    %c0_26 = arith.constant 0 : index
    %122 = vector.load %arg2[%c0_25, %c0_26] : memref<128x1xf32, #tpu.memory_space<vmem>>, vector<128x1xf32>
    %123 = vector.broadcast %122 : vector<128x1xf32> to vector<128x128xf32>
    %124 = arith.mulf %23, %123 : vector<128x128xf32>
    %125 = arith.truncf %124 : vector<128x128xf32> to vector<128x128xbf16>
    %126 = vector.shape_cast %122 : vector<128x1xf32> to vector<128x1xf32>
    %127 = vector.broadcast %126 : vector<128x1xf32> to vector<128x128xf32>
    %128 = arith.truncf %127 : vector<128x128xf32> to vector<128x128xbf16>
    %129 = tpu.concatenate %125, %128 in 1 : vector<128x128xbf16>, vector<128x128xbf16> -> vector<128x256xbf16>
    %cst_27 = arith.constant dense<0.000000e+00> : vector<128x256xf32>
    %130 = tpu.matmul %121, %129, %cst_27 {dimension_numbers = #tpu.dot_dimension_numbers<[1], [0], [0], [1], [0, 0, 1, 1], [], []>} : vector<128x128xbf16>, vector<128x256xbf16>, vector<128x256xf32> -> vector<128x256xf32>
    %131 = vector.extract_strided_slice %130 {offsets = [0, 0], sizes = [128, 128], strides = [1, 1]} : vector<128x256xf32> to vector<128x128xf32>
    %132 = vector.extract_strided_slice %130 {offsets = [0, 128], sizes = [128, 1], strides = [1, 1]} : vector<128x256xf32> to vector<128x1xf32>
    %133 = tpu.reciprocal %132 {approx = true} : vector<128x1xf32> -> vector<128x1xf32>
    %134 = vector.broadcast %133 : vector<128x1xf32> to vector<128x128xf32>
    %135 = arith.mulf %131, %134 : vector<128x128xf32>
    %cst_28 = arith.constant 2.000000e+01 : f32
    %136 = vector.broadcast %cst_28 : f32 to vector<128x128xf32>
    %137 = arith.cmpf ogt, %135, %136 : vector<128x128xf32>
    %cst_29 = arith.constant 2.000000e+01 : f32
    %138 = vector.broadcast %cst_29 : f32 to vector<128x128xf32>
    %139 = arith.minimumf %135, %138 : vector<128x128xf32>
    %140 = math.exp %139 : vector<128x128xf32>
    %141 = math.log1p %140 : vector<128x128xf32>
    %142 = arith.select %137, %135, %141 : vector<128x128xi1>, vector<128x128xf32>
    %143 = arith.addf %14, %142 : vector<128x128xf32>
    %cst_30 = arith.constant dense<0.000000e+00> : vector<128xf32>
    %144 = vector.multi_reduction <add>, %143, %cst_30 [1] : vector<128x128xf32> to vector<128xf32>
    %145 = vector.shape_cast %144 : vector<128xf32> to vector<128x1xf32>
    %cst_31 = arith.constant 1.280000e+02 : f32
    %146 = vector.broadcast %cst_31 : f32 to vector<128x1xf32>
    %147 = arith.divf %145, %146 : vector<128x1xf32>
    %148 = vector.broadcast %147 : vector<128x1xf32> to vector<128x128xf32>
    %149 = arith.subf %143, %148 : vector<128x128xf32>
    %150 = arith.mulf %149, %149 : vector<128x128xf32>
    %cst_32 = arith.constant dense<0.000000e+00> : vector<128xf32>
    %151 = vector.multi_reduction <add>, %150, %cst_32 [1] : vector<128x128xf32> to vector<128xf32>
    %152 = vector.shape_cast %151 : vector<128xf32> to vector<128x1xf32>
    %cst_33 = arith.constant 1.280000e+02 : f32
    %153 = vector.broadcast %cst_33 : f32 to vector<128x1xf32>
    %154 = arith.divf %152, %153 : vector<128x1xf32>
    %155 = vector.broadcast %147 : vector<128x1xf32> to vector<128x128xf32>
    %156 = arith.subf %143, %155 : vector<128x128xf32>
    %cst_34 = arith.constant 9.99999974E-6 : f32
    %157 = vector.broadcast %cst_34 : f32 to vector<128x1xf32>
    %158 = arith.addf %154, %157 : vector<128x1xf32>
    %159 = math.rsqrt %158 : vector<128x1xf32>
    %160 = vector.broadcast %159 : vector<128x1xf32> to vector<128x128xf32>
    %161 = arith.mulf %156, %160 : vector<128x128xf32>
    %162 = vector.broadcast %5 : vector<1x128xf32> to vector<128x128xf32>
    %163 = arith.mulf %161, %162 : vector<128x128xf32>
    %164 = vector.broadcast %6 : vector<1x128xf32> to vector<128x128xf32>
    %165 = arith.addf %163, %164 : vector<128x128xf32>
    %166 = arith.truncf %165 : vector<128x128xf32> to vector<128x128xbf16>
    %c0_35 = arith.constant 0 : index
    %c0_36 = arith.constant 0 : index
    %167 = vector.load %arg5[%c0_35, %c0_36] : memref<128x128xbf16, #tpu.memory_space<vmem>>, vector<128x128xbf16>
    %cst_37 = arith.constant dense<0.000000e+00> : vector<128x128xf32>
    %168 = tpu.matmul %166, %167, %cst_37 {dimension_numbers = #tpu.dot_dimension_numbers<[1], [0], [0], [1], [0, 0, 1, 1], [], []>} : vector<128x128xbf16>, vector<128x128xbf16>, vector<128x128xf32> -> vector<128x128xf32>
    %169 = vector.broadcast %7 : vector<1x128xf32> to vector<128x128xf32>
    %170 = arith.addf %168, %169 : vector<128x128xf32>
    %c0_38 = arith.constant 0 : index
    %c0_39 = arith.constant 0 : index
    %171 = vector.load %arg7[%c0_38, %c0_39] : memref<128x128xf32, #tpu.memory_space<vmem>>, vector<128x128xf32>
    tpu.vector_store %arg7[%c0_38, %c0_39], %170 {strides = array<i32>} : memref<128x128xf32, #tpu.memory_space<vmem>>, vector<128x128xf32>,
    return
  }
  func.func @transform_0(%arg0: i32) -> (i32, i32) {
    %c0_i32 = arith.constant 0 : i32
    %c0_i32_0 = arith.constant 0 : i32
    return %arg0, %c0_i32 : i32, i32
  }
  func.func @transform_1(%arg0: i32) -> (i32, i32) {
    %c0_i32 = arith.constant 0 : i32
    %c0_i32_0 = arith.constant 0 : i32
    return %arg0, %c0_i32 : i32, i32
  }
  func.func @transform_2(%arg0: i32) -> (i32, i32) {
    %c0_i32 = arith.constant 0 : i32
    %c0_i32_0 = arith.constant 0 : i32
    %c0_i32_1 = arith.constant 0 : i32
    return %c0_i32, %c0_i32_0 : i32, i32
  }
  func.func @transform_3(%arg0: i32) -> (i32, i32) {
    %c0_i32 = arith.constant 0 : i32
    %c0_i32_0 = arith.constant 0 : i32
    %c0_i32_1 = arith.constant 0 : i32
    return %c0_i32, %c0_i32_0 : i32, i32
  }
  func.func @transform_4(%arg0: i32) -> (i32, i32) {
    %c0_i32 = arith.constant 0 : i32
    %c0_i32_0 = arith.constant 0 : i32
    %c0_i32_1 = arith.constant 0 : i32
    return %c0_i32, %c0_i32_0 : i32, i32
  }
  func.func @transform_5(%arg0: i32) -> (i32, i32) {
    %c0_i32 = arith.constant 0 : i32
    %c0_i32_0 = arith.constant 0 : i32
    %c0_i32_1 = arith.constant 0 : i32
    return %c0_i32, %c0_i32_0 : i32, i32
  }
  func.func @transform_6(%arg0: i32) -> (i32, i32) {
    %c0_i32 = arith.constant 0 : i32
    %c0_i32_0 = arith.constant 0 : i32
    return %arg0, %c0_i32 : i32, i32
  }
}

</mosaic_0001>

<llo_original>
// kernel: tpu_custom_call.1
$region0: #{tpu_custom_call.1}
  #allocation0 [shape = 'u32[]', space=smem, size = 0x4, offset = 0x4, fixed_abs, tag = 'smem constant byte address 0x4 - core index']
  #allocation1 [shape = 'u32[144,128]{1,0:T(1,128)}', space=vmem, size = 0x12000, scoped, tag = 'internal scratch']
  %s0 = inlined_call_operand.vmem [shape: f32[512,32], index: 0, kind: input, shape index: {}]
  %s1 = inlined_call_operand.vmem [shape: f32[512,1], index: 1, kind: input, shape index: {}]
  %s2 = inlined_call_operand.vmem [shape: f32[128,128], index: 2, kind: input, shape index: {}]
  %s3 = inlined_call_operand.vmem [shape: bf16[32,512], index: 3, kind: input, shape index: {}]
  %s4 = inlined_call_operand.vmem [shape: bf16[128,128], index: 4, kind: input, shape index: {}]
  %s5 = inlined_call_operand.vmem [shape: f32[8,128], index: 5, kind: input, shape index: {}]
  %s6 = inlined_call_operand.hbm [shape: f32[512,128], index: 6, kind: output, shape index: {}]
  %s7 = sld [smem:[#allocation0]]
  $region57: #{tpu_custom_call.1} parent=0
    _
  %s9 = ssub.s32 1, %s7
  %s10 = scalar_select 0, %s9, %s7
  $region1: #{tpu_custom_call.1} parent=0
    #allocation2 [shape = 'u8[131072]{0}', space=vmem, size = 0x20000, scoped, tag = 'output window, operand 0']
    #allocation3 [shape = 's32[2]{0}', space=sflag, size = 0x8, scoped, tag = 'scoped memory for tpu_custom_call.1']
    %11 = vsyncpa [#allocation3], 0
    %s12 = scalar_lea.sflag [#allocation3], 1
    %13 = vsyncpa %s12, 0
    loop: start=0, step=1, limit=6
    $region2: #{tpu_custom_call.1} parent=1 // loop_pre_header
      _
    $region3: #{tpu_custom_call.1} parent=1 // loop_header
      %s15 = sphi 0, %s19
      %p16 = scmp.ge.s32.totalorder %s15, 6
      %s25 = sphi 0, %s27
      %s28 = sphi 0, %s25
      %s29 = sphi 0, %s28
      %s45 = sphi 0, %s29
      %s51 = sphi 0, %s53
      %s54 = sphi 0, %s51
      %s55 = sphi 0, %s54
      %s71 = sphi 0, %s55
      %s75 = sphi 0, %s75
      %s77 = sphi 0, %s75
      %s78 = sphi 0, %s77
      %s92 = sphi 0, %s78
      %s96 = sphi 0, %s96
      %s98 = sphi 0, %s96
      %s99 = sphi 0, %s98
      %s113 = sphi 0, %s99
      %s117 = sphi 0, %s117
      %s119 = sphi 0, %s117
      %s120 = sphi 0, %s119
      %s134 = sphi 0, %s120
      %s138 = sphi 0, %s138
      %s140 = sphi 0, %s138
      %s141 = sphi 0, %s140
      %s155 = sphi 0, %s141
      %s161 = sphi 0, %s163
      %s164 = sphi 0, %s161
      %s165 = sphi 0, %s164
      %s181 = sphi 0, %s165
    $region4: #{tpu_custom_call.1} parent=1 // loop_header_branch
      %18 = sbr.rel (%p16) target = $region8
    $region5: #{tpu_custom_call.1} parent=1 // loop_body
      %s20 = ssub.s32 %s15, 1
      %s21 = ssub.s32 %s15, 2
      %s22 = sadd.s32 %s15, 1
      %s23 = ssub.s32 %s15, %s22
      %p24 = scmp.eq.s32.totalorder %s23, 0
      %s26 = sadd.s32 %s25, 1
      %s27 = scalar_select %p24, %s25, %s26
      %p30 = pneg %p24
      %p31 = scmp.eq.s32.totalorder %s15, 3
      %p32 = por %p30, %p31
      %p33 = scmp.ne.s32.totalorder %s25, %s28
      %p34 = scmp.eq.s32.totalorder %s15, 0
      %p35 = por %p33, %p34
      %p36 = scmp.ne.s32.totalorder %s25, %s28
      %p37 = scmp.eq.s32.totalorder %s20, 3
      %p38 = por %p36, %p37
      %p39 = scmp.ne.s32.totalorder %s28, %s29
      %p40 = scmp.eq.s32.totalorder %s20, 0
      %p41 = por %p39, %p40
      %p42 = scmp.ne.s32.totalorder %s28, %s29
      %p43 = scmp.eq.s32.totalorder %s21, 3
      %p44 = por %p42, %p43
      %p46 = scmp.ne.s32.totalorder %s29, %s45
      %p47 = scmp.eq.s32.totalorder %s21, 0
      %p48 = por %p46, %p47
      %s49 = ssub.s32 %s15, %s22
      %p50 = scmp.eq.s32.totalorder %s49, 0
      %s52 = sadd.s32 %s51, 1
      %s53 = scalar_select %p50, %s51, %s52
      %p56 = pneg %p50
      %p57 = scmp.eq.s32.totalorder %s15, 3
      %p58 = por %p56, %p57
      %p59 = scmp.ne.s32.totalorder %s51, %s54
      %p60 = scmp.eq.s32.totalorder %s15, 0
      %p61 = por %p59, %p60
      %p62 = scmp.ne.s32.totalorder %s51, %s54
      %p63 = scmp.eq.s32.totalorder %s20, 3
      %p64 = por %p62, %p63
      %p65 = scmp.ne.s32.totalorder %s54, %s55
      %p66 = scmp.eq.s32.totalorder %s20, 0
      %p67 = por %p65, %p66
      %p68 = scmp.ne.s32.totalorder %s54, %s55
      %p69 = scmp.eq.s32.totalorder %s21, 3
      %p70 = por %p68, %p69
      %p72 = scmp.ne.s32.totalorder %s55, %s71
      %p73 = scmp.eq.s32.totalorder %s21, 0
      %p74 = por %p72, %p73
      %s76 = sadd.s32 %s75, 1
      %p79 = scmp.eq.s32.totalorder %s15, 3
      %p80 = scmp.ne.s32.totalorder %s75, %s77
      %p81 = scmp.eq.s32.totalorder %s15, 0
      %p82 = por %p80, %p81
      %p83 = scmp.ne.s32.totalorder %s75, %s77
      %p84 = scmp.eq.s32.totalorder %s20, 3
      %p85 = por %p83, %p84
      %p86 = scmp.ne.s32.totalorder %s77, %s78
      %p87 = scmp.eq.s32.totalorder %s20, 0
      %p88 = por %p86, %p87
      %p89 = scmp.ne.s32.totalorder %s77, %s78
      %p90 = scmp.eq.s32.totalorder %s21, 3
      %p91 = por %p89, %p90
      %p93 = scmp.ne.s32.totalorder %s78, %s92
      %p94 = scmp.eq.s32.totalorder %s21, 0
      %p95 = por %p93, %p94
      %s97 = sadd.s32 %s96, 1
      %p100 = scmp.eq.s32.totalorder %s15, 3
      %p101 = scmp.ne.s32.totalorder %s96, %s98
      %p102 = scmp.eq.s32.totalorder %s15, 0
      %p103 = por %p101, %p102
      %p104 = scmp.ne.s32.totalorder %s96, %s98
      %p105 = scmp.eq.s32.totalorder %s20, 3
      %p106 = por %p104, %p105
      %p107 = scmp.ne.s32.totalorder %s98, %s99
      %p108 = scmp.eq.s32.totalorder %s20, 0
      %p109 = por %p107, %p108
      %p110 = scmp.ne.s32.totalorder %s98, %s99
      %p111 = scmp.eq.s32.totalorder %s21, 3
      %p112 = por %p110, %p111
      %p114 = scmp.ne.s32.totalorder %s99, %s113
      %p115 = scmp.eq.s32.totalorder %s21, 0
      %p116 = por %p114, %p115
      %s118 = sadd.s32 %s117, 1
      %p121 = scmp.eq.s32.totalorder %s15, 3
      %p122 = scmp.ne.s32.totalorder %s117, %s119
      %p123 = scmp.eq.s32.totalorder %s15, 0
      %p124 = por %p122, %p123
      %p125 = scmp.ne.s32.totalorder %s117, %s119
      %p126 = scmp.eq.s32.totalorder %s20, 3
      %p127 = por %p125, %p126
      %p128 = scmp.ne.s32.totalorder %s119, %s120
      %p129 = scmp.eq.s32.totalorder %s20, 0
      %p130 = por %p128, %p129
      %p131 = scmp.ne.s32.totalorder %s119, %s120
      %p132 = scmp.eq.s32.totalorder %s21, 3
      %p133 = por %p131, %p132
      %p135 = scmp.ne.s32.totalorder %s120, %s134
      %p136 = scmp.eq.s32.totalorder %s21, 0
      %p137 = por %p135, %p136
      %s139 = sadd.s32 %s138, 1
      %p142 = scmp.eq.s32.totalorder %s15, 3
      %p143 = scmp.ne.s32.totalorder %s138, %s140
      %p144 = scmp.eq.s32.totalorder %s15, 0
      %p145 = por %p143, %p144
      %p146 = scmp.ne.s32.totalorder %s138, %s140
      %p147 = scmp.eq.s32.totalorder %s20, 3
      %p148 = por %p146, %p147
      %p149 = scmp.ne.s32.totalorder %s140, %s141
      %p150 = scmp.eq.s32.totalorder %s20, 0
      %p151 = por %p149, %p150
      %p152 = scmp.ne.s32.totalorder %s140, %s141
      %p153 = scmp.eq.s32.totalorder %s21, 3
      %p154 = por %p152, %p153
      %p156 = scmp.ne.s32.totalorder %s141, %s155
      %p157 = scmp.eq.s32.totalorder %s21, 0
      %p158 = por %p156, %p157
      %s159 = ssub.s32 %s15, %s22
      %p160 = scmp.eq.s32.totalorder %s159, 0
      %s162 = sadd.s32 %s161, 1
      %s163 = scalar_select %p160, %s161, %s162
      %p166 = pneg %p160
      %p167 = scmp.eq.s32.totalorder %s15, 3
      %p168 = por %p166, %p167
      %p169 = scmp.ne.s32.totalorder %s161, %s164
      %p170 = scmp.eq.s32.totalorder %s15, 0
      %p171 = por %p169, %p170
      %p172 = scmp.ne.s32.totalorder %s161, %s164
      %p173 = scmp.eq.s32.totalorder %s20, 3
      %p174 = por %p172, %p173
      %p175 = scmp.ne.s32.totalorder %s164, %s165
      %p176 = scmp.eq.s32.totalorder %s20, 0
      %p177 = por %p175, %p176
      %p178 = scmp.ne.s32.totalorder %s164, %s165
      %p179 = scmp.eq.s32.totalorder %s21, 3
      %p180 = por %p178, %p179
      %p182 = scmp.ne.s32.totalorder %s165, %s181
      %p183 = scmp.eq.s32.totalorder %s21, 0
      %p184 = por %p182, %p183
      %p185 = scmp.le.s32.totalorder 1, %s15
      %p186 = scmp.lt.s32.totalorder %s15, 5
      %p187 = pnand %p185, %p186
      %p188 = pneg %p187
      // Predicated region
      $region9: #{tpu_custom_call.1} parent=5 // pred_check
        _
      $region10: #{tpu_custom_call.1} parent=5 // pred_check_branch
        %190 = sbr.rel (%p187) target = $region12
      $region11: #{tpu_custom_call.1} parent=5 // pred_region
        %s191 = ssub.s32 %s15, 1
        // Predicated region
        $region13: #{tpu_custom_call.1} parent=11 // pred_check
          %p192 = pneg %p88
        $region14: #{tpu_custom_call.1} parent=11 // pred_check_branch
          %194 = sbr.rel (%p192) target = $region16
        $region15: #{tpu_custom_call.1} parent=11 // pred_region
          _
        $region16: #{tpu_custom_call.1} parent=11 // pred_fallthru
          _
        // Predicated region
        $region17: #{tpu_custom_call.1} parent=11 // pred_check
          %p195 = pneg %p109
        $region18: #{tpu_custom_call.1} parent=11 // pred_check_branch
          %197 = sbr.rel (%p195) target = $region20
        $region19: #{tpu_custom_call.1} parent=11 // pred_region
          _
        $region20: #{tpu_custom_call.1} parent=11 // pred_fallthru
          _
        // Predicated region
        $region21: #{tpu_custom_call.1} parent=11 // pred_check
          %p198 = pneg %p130
        $region22: #{tpu_custom_call.1} parent=11 // pred_check_branch
          %200 = sbr.rel (%p198) target = $region24
        $region23: #{tpu_custom_call.1} parent=11 // pred_region
          _
        $region24: #{tpu_custom_call.1} parent=11 // pred_fallthru
          _
        // Predicated region
        $region25: #{tpu_custom_call.1} parent=11 // pred_check
          %p201 = pneg %p151
        $region26: #{tpu_custom_call.1} parent=11 // pred_check_branch
          %203 = sbr.rel (%p201) target = $region28
        $region27: #{tpu_custom_call.1} parent=11 // pred_region
          _
        $region28: #{tpu_custom_call.1} parent=11 // pred_fallthru
          _
      $region12: #{tpu_custom_call.1} parent=5 // pred_fallthru
        _
      %p204 = scmp.lt.s32.totalorder %s15, 4
      // Predicated region
      $region29: #{tpu_custom_call.1} parent=5 // pred_check
        %p205 = pneg %p204
      $region30: #{tpu_custom_call.1} parent=5 // pred_check_branch
        %207 = sbr.rel (%p205) target = $region32
      $region31: #{tpu_custom_call.1} parent=5 // pred_region
        // Predicated region
        $region33: #{tpu_custom_call.1} parent=31 // pred_check
          %p208 = pneg %p35
        $region34: #{tpu_custom_call.1} parent=31 // pred_check_branch
          %210 = sbr.rel (%p208) target = $region36
        $region35: #{tpu_custom_call.1} parent=31 // pred_region
          %s211 = smul.u32 16, %s15
          %p212 = scmp.lt.s32.totalorder %s211, 63
          %s213 = scalar_select %p212, %s211, 63
          %s214 = smul.addr %s213, 8
          %s215 = scalar_lea.vmem %s0, %s214
          %s216 = smul.u32 16, %s15
        $region36: #{tpu_custom_call.1} parent=31 // pred_fallthru
          _
        // Predicated region
        $region37: #{tpu_custom_call.1} parent=31 // pred_check
          %p217 = pneg %p61
        $region38: #{tpu_custom_call.1} parent=31 // pred_check_branch
          %219 = sbr.rel (%p217) target = $region40
        $region39: #{tpu_custom_call.1} parent=31 // pred_region
          %s220 = smul.u32 16, %s15
          %p221 = scmp.lt.s32.totalorder %s220, 63
          %s222 = scalar_select %p221, %s220, 63
          %s223 = smul.addr %s222, 8
          %s224 = scalar_lea.vmem %s1, %s223
          %s225 = smul.u32 16, %s15
        $region40: #{tpu_custom_call.1} parent=31 // pred_fallthru
          _
      $region32: #{tpu_custom_call.1} parent=5 // pred_fallthru
        _
      %p226 = scmp.le.s32.totalorder 1, %s15
      %p227 = scmp.lt.s32.totalorder %s15, 5
      %p228 = pnand %p226, %p227
      %p229 = pneg %p228
      // Predicated region
      $region41: #{tpu_custom_call.1} parent=5 // pred_check
        _
      $region42: #{tpu_custom_call.1} parent=5 // pred_check_branch
        %231 = sbr.rel (%p228) target = $region44
      $region43: #{tpu_custom_call.1} parent=5 // pred_region
        %s232 = ssub.s32 %s15, 1
        %s233 = smul.u32 16, %s20
        %p234 = scmp.lt.s32.totalorder %s233, 63
        %s235 = scalar_select %p234, %s233, 63
        %s236 = smul.addr %s235, 8
        %s237 = scalar_lea.vmem %s0, %s236
        %p238 = pneg %p41
        %p239 = pneg %p38
        %s240 = smul.u32 16, %s20
        %p241 = scmp.lt.s32.totalorder %s240, 63
        %s242 = scalar_select %p241, %s240, 63
        %s243 = smul.addr %s242, 8
        %s244 = scalar_lea.vmem %s1, %s243
        %p245 = pneg %p67
        %p246 = pneg %p64
        %p247 = pneg %p88
        %p248 = pneg %p85
        %p249 = pneg %p109
        %p250 = pneg %p106
        %p251 = pneg %p130
        %p252 = pneg %p127
        %p253 = pneg %p151
        %p254 = pneg %p148
        %p255 = pneg %p177
        %p256 = pneg %p174
        %s257 = sand.u32 %s164, 1
        %s258 = scalar_lea.sflag [#allocation3], %s257
        %s259 = sand.u32 %s164, 1
        %s260 = smul.addr %s259, 128
        %s261 = scalar_lea.vmem [#allocation2], %s260
        %s262 = smul.u32 16, %s20
        %p263 = scmp.lt.s32.totalorder %s262, 63
        %s264 = scalar_select %p263, %s262, 63
        %s265 = smul.addr %s264, 8
        %s266 = scalar_lea.vmem %s0, %s265
        %s267 = smul.u32 16, %s20
        %s268 = smul.u32 16, %s20
        %p269 = scmp.lt.s32.totalorder %s268, 63
        %s270 = scalar_select %p269, %s268, 63
        %s271 = smul.addr %s270, 8
        %s272 = scalar_lea.vmem %s1, %s271
        %s273 = smul.u32 16, %s20
        %s274 = smul.u32 16, %s20
        %v277 = vld [vmem:[%s5] sm:$0xff]
        %v278 = vld [vmem:[%s266] sm:$0xff]
        %v279 = vld [vmem:[%s266 + $0x8] sm:$0xff]
        %v280 = vld [vmem:[%s266 + $0x10] sm:$0xff]
        %v281 = vld [vmem:[%s266 + $0x18] sm:$0xff]
        %v282 = vld [vmem:[%s266 + $0x20] sm:$0xff]
        %v283 = vld [vmem:[%s266 + $0x28] sm:$0xff]
        %v284 = vld [vmem:[%s266 + $0x30] sm:$0xff]
        %v285 = vld [vmem:[%s266 + $0x38] sm:$0xff]
        %v286 = vld [vmem:[%s266 + $0x40] sm:$0xff]
        %v287 = vld [vmem:[%s266 + $0x48] sm:$0xff]
        %v288 = vld [vmem:[%s266 + $0x50] sm:$0xff]
        %v289 = vld [vmem:[%s266 + $0x58] sm:$0xff]
        %v290 = vld [vmem:[%s266 + $0x60] sm:$0xff]
        %v291 = vld [vmem:[%s266 + $0x68] sm:$0xff]
        %v292 = vld [vmem:[%s266 + $0x70] sm:$0xff]
        %v293 = vld [vmem:[%s266 + $0x78] sm:$0xff]
        %v294 = vpack.c.bf16 %v279, %v278
        %v295 = vpack.c.bf16 %v281, %v280
        %v296 = vpack.c.bf16 %v283, %v282
        %v297 = vpack.c.bf16 %v285, %v284
        %v298 = vpack.c.bf16 %v287, %v286
        %v299 = vpack.c.bf16 %v289, %v288
        %v300 = vpack.c.bf16 %v291, %v290
        %v301 = vpack.c.bf16 %v293, %v292
        %v302 = vld [vmem:[%s3] sm:$0xff]
        %v303 = vld [vmem:[%s3 + $0x8] sm:$0xff]
        %v304 = vld [vmem:[%s3 + $0x10] sm:$0xff]
        %v305 = vld [vmem:[%s3 + $0x18] sm:$0xff]
        %v306 = vld [vmem:[%s3 + $0x20] sm:$0xff]
        %v307 = vld [vmem:[%s3 + $0x28] sm:$0xff]
        %v308 = vld [vmem:[%s3 + $0x30] sm:$0xff]
        %v309 = vld [vmem:[%s3 + $0x38] sm:$0xff]
        %v318 = vunpack.c.l.b16 %v302
        %v319 = vunpack.c.h.b16 %v302
        %v320 = vunpack.c.l.b16 %v303
        %v321 = vunpack.c.h.b16 %v303
        %v322 = vunpack.c.l.b16 %v304
        %v323 = vunpack.c.h.b16 %v304
        %v324 = vunpack.c.l.b16 %v305
        %v325 = vunpack.c.h.b16 %v305
        %v326 = vunpack.c.l.b16 %v306
        %v327 = vunpack.c.h.b16 %v306
        %v328 = vunpack.c.l.b16 %v307
        %v329 = vunpack.c.h.b16 %v307
        %v330 = vunpack.c.l.b16 %v308
        %v331 = vunpack.c.h.b16 %v308
        %v332 = vunpack.c.l.b16 %v309
        %v333 = vunpack.c.h.b16 %v309
        %v334 = vpack.c.b16 %v322, %v318
        %v335 = vpack.c.b16 %v323, %v319
        %v336 = vpack.c.b16 %v324, %v320
        %v337 = vpack.c.b16 %v325, %v321
        %v338 = vpack.c.b16 %v330, %v326
        %v339 = vpack.c.b16 %v331, %v327
        %v340 = vpack.c.b16 %v332, %v328
        %v341 = vpack.c.b16 %v333, %v329
        %vm350 = vcmask 261120
        %v352 = vsel %vm350, %v294, 0
        %v355 = vsel %vm350, %v295, 0
        %v358 = vsel %vm350, %v296, 0
        %v361 = vsel %vm350, %v297, 0
        %v364 = vsel %vm350, %v298, 0
        %v367 = vsel %vm350, %v299, 0
        %v370 = vsel %vm350, %v300, 0
        %v373 = vsel %vm350, %v301, 0
        %375 = vmatprep.subr.bf16.mxu0 0
        %376 = vmatpush1.bf16.msra.mxu0 0
        %377 = vmatprep.subr.bf16.mxu0 0
        %378 = vmatpush1.bf16.msra.mxu0 0
        %379 = vmatprep.subr.bf16.mxu0 0
        %380 = vmatpush1.bf16.msra.mxu0 0
        %381 = vmatprep.subr.bf16.mxu0 0
        %382 = vmatpush1.bf16.msra.mxu0 0
        %383 = vmatprep.subr.bf16.mxu0 0
        %384 = vmatpush1.bf16.msra.mxu0 0
        %385 = vmatprep.subr.bf16.mxu0 0
        %386 = vmatpush1.bf16.msra.mxu0 0
        %387 = vmatprep.subr.bf16.mxu0 %v339
        %388 = vmatpush1.bf16.msra.mxu0 %v338
        %389 = vmatprep.subr.bf16.mxu0 %v335
        %390 = vmatpush1.bf16.msra.mxu0 %v334
        %391 = vmatprep.subr.bf16.mxu0 0
        %392 = vmatpush2.bf16.msra.mxu0 0
        %393 = vmatprep.subr.bf16.mxu0 0
        %394 = vmatpush2.bf16.msra.mxu0 0
        %395 = vmatprep.subr.bf16.mxu0 0
        %396 = vmatpush2.bf16.msra.mxu0 0
        %397 = vmatprep.subr.bf16.mxu0 0
        %398 = vmatpush2.bf16.msra.mxu0 0
        %399 = vmatprep.subr.bf16.mxu0 0
        %400 = vmatpush2.bf16.msra.mxu0 0
        %401 = vmatprep.subr.bf16.mxu0 0
        %402 = vmatpush2.bf16.msra.mxu0 0
        %403 = vmatprep.subr.bf16.mxu0 0
        %404 = vmatpush2.bf16.msra.mxu0 0
        %405 = vmatprep.subr.bf16.mxu0 0
        %406 = vmatpush2.bf16.msra.mxu0 0
        %407 = vmatprep.mubr.bf16.mxu0 0
        %408 = vmatmul.mubr.bf16.gmra.mxu0 %v352
        %v409 = vpop.f32.mrf.mxu0
        %v410 = vadd.f32 0.0, %v409
        %v411 = vpop.f32.mrf.mxu0
        %v412 = vadd.f32 0.0, %v411
        %v413 = vpop.f32.mrf.mxu0
        %v414 = vadd.f32 0.0, %v413
        %v415 = vpop.f32.mrf.mxu0
        %v416 = vadd.f32 0.0, %v415
        %417 = vmatprep.mubr.bf16.mxu0 0
        %418 = vmatmul.mubr.bf16.gmra.mxu0 %v355
        %v419 = vpop.f32.mrf.mxu0
        %v420 = vadd.f32 0.0, %v419
        %v421 = vpop.f32.mrf.mxu0
        %v422 = vadd.f32 0.0, %v421
        %v423 = vpop.f32.mrf.mxu0
        %v424 = vadd.f32 0.0, %v423
        %v425 = vpop.f32.mrf.mxu0
        %v426 = vadd.f32 0.0, %v425
        %427 = vmatprep.mubr.bf16.mxu0 0
        %428 = vmatmul.mubr.bf16.gmra.mxu0 %v358
        %v429 = vpop.f32.mrf.mxu0
        %v430 = vadd.f32 0.0, %v429
        %v431 = vpop.f32.mrf.mxu0
        %v432 = vadd.f32 0.0, %v431
        %v433 = vpop.f32.mrf.mxu0
        %v434 = vadd.f32 0.0, %v433
        %v435 = vpop.f32.mrf.mxu0
        %v436 = vadd.f32 0.0, %v435
        %437 = vmatprep.mubr.bf16.mxu0 0
        %438 = vmatmul.mubr.bf16.gmra.mxu0 %v361
        %v439 = vpop.f32.mrf.mxu0
        %v440 = vadd.f32 0.0, %v439
        %v441 = vpop.f32.mrf.mxu0
        %v442 = vadd.f32 0.0, %v441
        %v443 = vpop.f32.mrf.mxu0
        %v444 = vadd.f32 0.0, %v443
        %v445 = vpop.f32.mrf.mxu0
        %v446 = vadd.f32 0.0, %v445
        %447 = vmatprep.mubr.bf16.mxu0 0
        %448 = vmatmul.mubr.bf16.gmra.mxu0 %v364
        %v449 = vpop.f32.mrf.mxu0
        %v450 = vadd.f32 0.0, %v449
        %v451 = vpop.f32.mrf.mxu0
        %v452 = vadd.f32 0.0, %v451
        %v453 = vpop.f32.mrf.mxu0
        %v454 = vadd.f32 0.0, %v453
        %v455 = vpop.f32.mrf.mxu0
        %v456 = vadd.f32 0.0, %v455
        %457 = vmatprep.mubr.bf16.mxu0 0
        %458 = vmatmul.mubr.bf16.gmra.mxu0 %v367
        %v459 = vpop.f32.mrf.mxu0
        %v460 = vadd.f32 0.0, %v459
        %v461 = vpop.f32.mrf.mxu0
        %v462 = vadd.f32 0.0, %v461
        %v463 = vpop.f32.mrf.mxu0
        %v464 = vadd.f32 0.0, %v463
        %v465 = vpop.f32.mrf.mxu0
        %v466 = vadd.f32 0.0, %v465
        %467 = vmatprep.mubr.bf16.mxu0 0
        %468 = vmatmul.mubr.bf16.gmra.mxu0 %v370
        %v469 = vpop.f32.mrf.mxu0
        %v470 = vadd.f32 0.0, %v469
        %v471 = vpop.f32.mrf.mxu0
        %v472 = vadd.f32 0.0, %v471
        %v473 = vpop.f32.mrf.mxu0
        %v474 = vadd.f32 0.0, %v473
        %v475 = vpop.f32.mrf.mxu0
        %v476 = vadd.f32 0.0, %v475
        %477 = vmatprep.mubr.bf16.mxu0 0
        %478 = vmatmul.mubr.bf16.gmra.mxu0 %v373
        %v479 = vpop.f32.mrf.mxu0
        %v480 = vadd.f32 0.0, %v479
        %v481 = vpop.f32.mrf.mxu0
        %v482 = vadd.f32 0.0, %v481
        %v483 = vpop.f32.mrf.mxu0
        %v484 = vadd.f32 0.0, %v483
        %v485 = vpop.f32.mrf.mxu0
        %v486 = vadd.f32 0.0, %v485
        %487 = vdwg.mxu0
        %488 = vmatprep.subr.bf16.mxu0 0
        %489 = vmatpush1.bf16.msra.mxu0 0
        %490 = vmatprep.subr.bf16.mxu0 0
        %491 = vmatpush1.bf16.msra.mxu0 0
        %492 = vmatprep.subr.bf16.mxu0 0
        %493 = vmatpush1.bf16.msra.mxu0 0
        %494 = vmatprep.subr.bf16.mxu0 0
        %495 = vmatpush1.bf16.msra.mxu0 0
        %496 = vmatprep.subr.bf16.mxu0 0
        %497 = vmatpush1.bf16.msra.mxu0 0
        %498 = vmatprep.subr.bf16.mxu0 0
        %499 = vmatpush1.bf16.msra.mxu0 0
        %500 = vmatprep.subr.bf16.mxu0 %v341
        %501 = vmatpush1.bf16.msra.mxu0 %v340
        %502 = vmatprep.subr.bf16.mxu0 %v337
        %503 = vmatpush1.bf16.msra.mxu0 %v336
        %504 = vmatprep.subr.bf16.mxu0 0
        %505 = vmatpush2.bf16.msra.mxu0 0
        %506 = vmatprep.subr.bf16.mxu0 0
        %507 = vmatpush2.bf16.msra.mxu0 0
        %508 = vmatprep.subr.bf16.mxu0 0
        %509 = vmatpush2.bf16.msra.mxu0 0
        %510 = vmatprep.subr.bf16.mxu0 0
        %511 = vmatpush2.bf16.msra.mxu0 0
        %512 = vmatprep.subr.bf16.mxu0 0
        %513 = vmatpush2.bf16.msra.mxu0 0
        %514 = vmatprep.subr.bf16.mxu0 0
        %515 = vmatpush2.bf16.msra.mxu0 0
        %516 = vmatprep.subr.bf16.mxu0 0
        %517 = vmatpush2.bf16.msra.mxu0 0
        %518 = vmatprep.subr.bf16.mxu0 0
        %519 = vmatpush2.bf16.msra.mxu0 0
        %520 = vmatprep.mubr.bf16.mxu0 0
        %521 = vmatmul.mubr.bf16.gmra.mxu0 %v352
        %v522 = vpop.f32.mrf.mxu0
        %v523 = vadd.f32 0.0, %v522
        %v524 = vpop.f32.mrf.mxu0
        %v525 = vadd.f32 0.0, %v524
        %v526 = vpop.f32.mrf.mxu0
        %v527 = vadd.f32 0.0, %v526
        %v528 = vpop.f32.mrf.mxu0
        %v529 = vadd.f32 0.0, %v528
        %530 = vmatprep.mubr.bf16.mxu0 0
        %531 = vmatmul.mubr.bf16.gmra.mxu0 %v355
        %v532 = vpop.f32.mrf.mxu0
        %v533 = vadd.f32 0.0, %v532
        %v534 = vpop.f32.mrf.mxu0
        %v535 = vadd.f32 0.0, %v534
        %v536 = vpop.f32.mrf.mxu0
        %v537 = vadd.f32 0.0, %v536
        %v538 = vpop.f32.mrf.mxu0
        %v539 = vadd.f32 0.0, %v538
        %540 = vmatprep.mubr.bf16.mxu0 0
        %541 = vmatmul.mubr.bf16.gmra.mxu0 %v358
        %v542 = vpop.f32.mrf.mxu0
        %v543 = vadd.f32 0.0, %v542
        %v544 = vpop.f32.mrf.mxu0
        %v545 = vadd.f32 0.0, %v544
        %v546 = vpop.f32.mrf.mxu0
        %v547 = vadd.f32 0.0, %v546
        %v548 = vpop.f32.mrf.mxu0
        %v549 = vadd.f32 0.0, %v548
        %550 = vmatprep.mubr.bf16.mxu0 0
        %551 = vmatmul.mubr.bf16.gmra.mxu0 %v361
        %v552 = vpop.f32.mrf.mxu0
        %v553 = vadd.f32 0.0, %v552
        %v554 = vpop.f32.mrf.mxu0
        %v555 = vadd.f32 0.0, %v554
        %v556 = vpop.f32.mrf.mxu0
        %v557 = vadd.f32 0.0, %v556
        %v558 = vpop.f32.mrf.mxu0
        %v559 = vadd.f32 0.0, %v558
        %560 = vmatprep.mubr.bf16.mxu0 0
        %561 = vmatmul.mubr.bf16.gmra.mxu0 %v364
        %v562 = vpop.f32.mrf.mxu0
        %v563 = vadd.f32 0.0, %v562
        %v564 = vpop.f32.mrf.mxu0
        %v565 = vadd.f32 0.0, %v564
        %v566 = vpop.f32.mrf.mxu0
        %v567 = vadd.f32 0.0, %v566
        %v568 = vpop.f32.mrf.mxu0
        %v569 = vadd.f32 0.0, %v568
        %570 = vmatprep.mubr.bf16.mxu0 0
        %571 = vmatmul.mubr.bf16.gmra.mxu0 %v367
        %v572 = vpop.f32.mrf.mxu0
        %v573 = vadd.f32 0.0, %v572
        %v574 = vpop.f32.mrf.mxu0
        %v575 = vadd.f32 0.0, %v574
        %v576 = vpop.f32.mrf.mxu0
        %v577 = vadd.f32 0.0, %v576
        %v578 = vpop.f32.mrf.mxu0
        %v579 = vadd.f32 0.0, %v578
        %580 = vmatprep.mubr.bf16.mxu0 0
        %581 = vmatmul.mubr.bf16.gmra.mxu0 %v370
        %v582 = vpop.f32.mrf.mxu0
        %v583 = vadd.f32 0.0, %v582
        %v584 = vpop.f32.mrf.mxu0
        %v585 = vadd.f32 0.0, %v584
        %v586 = vpop.f32.mrf.mxu0
        %v587 = vadd.f32 0.0, %v586
        %v588 = vpop.f32.mrf.mxu0
        %v589 = vadd.f32 0.0, %v588
        %590 = vmatprep.mubr.bf16.mxu0 0
        %591 = vmatmul.mubr.bf16.gmra.mxu0 %v373
        %v592 = vpop.f32.mrf.mxu0
        %v593 = vadd.f32 0.0, %v592
        %v594 = vpop.f32.mrf.mxu0
        %v595 = vadd.f32 0.0, %v594
        %v596 = vpop.f32.mrf.mxu0
        %v597 = vadd.f32 0.0, %v596
        %v598 = vpop.f32.mrf.mxu0
        %v599 = vadd.f32 0.0, %v598
        %600 = vdwg.mxu0
        %v601 = vlaneseq
        %v602 = vshrl.u32 %v601, 7
        %v603 = vsub.s32 0, %v602
        %v604 = vrot.slane %v277, %v603
        %v605 = vadd.f32 %v410, %v604
        %v606 = vadd.f32 %v414, %v604
        %v607 = vadd.f32 %v420, %v604
        %v608 = vadd.f32 %v424, %v604
        %v609 = vadd.f32 %v430, %v604
        %v610 = vadd.f32 %v434, %v604
        %v611 = vadd.f32 %v440, %v604
        %v612 = vadd.f32 %v444, %v604
        %v613 = vadd.f32 %v450, %v604
        %v614 = vadd.f32 %v454, %v604
        %v615 = vadd.f32 %v460, %v604
        %v616 = vadd.f32 %v464, %v604
        %v617 = vadd.f32 %v470, %v604
        %v618 = vadd.f32 %v474, %v604
        %v619 = vadd.f32 %v480, %v604
        %v620 = vadd.f32 %v484, %v604
        %v621 = vlaneseq
        %v622 = vshrl.u32 %v621, 7
        %v623 = vsub.s32 1, %v622
        %v624 = vrot.slane %v277, %v623
        %v625 = vadd.f32 %v412, %v624
        %v626 = vadd.f32 %v416, %v624
        %v627 = vadd.f32 %v422, %v624
        %v628 = vadd.f32 %v426, %v624
        %v629 = vadd.f32 %v432, %v624
        %v630 = vadd.f32 %v436, %v624
        %v631 = vadd.f32 %v442, %v624
        %v632 = vadd.f32 %v446, %v624
        %v633 = vadd.f32 %v452, %v624
        %v634 = vadd.f32 %v456, %v624
        %v635 = vadd.f32 %v462, %v624
        %v636 = vadd.f32 %v466, %v624
        %v637 = vadd.f32 %v472, %v624
        %v638 = vadd.f32 %v476, %v624
        %v639 = vadd.f32 %v482, %v624
        %v640 = vadd.f32 %v486, %v624
        %v641 = vlaneseq
        %v642 = vshrl.u32 %v641, 7
        %v643 = vsub.s32 2, %v642
        %v644 = vrot.slane %v277, %v643
        %v645 = vadd.f32 %v523, %v644
        %v646 = vadd.f32 %v527, %v644
        %v647 = vadd.f32 %v533, %v644
        %v648 = vadd.f32 %v537, %v644
        %v649 = vadd.f32 %v543, %v644
        %v650 = vadd.f32 %v547, %v644
        %v651 = vadd.f32 %v553, %v644
        %v652 = vadd.f32 %v557, %v644
        %v653 = vadd.f32 %v563, %v644
        %v654 = vadd.f32 %v567, %v644
        %v655 = vadd.f32 %v573, %v644
        %v656 = vadd.f32 %v577, %v644
        %v657 = vadd.f32 %v583, %v644
        %v658 = vadd.f32 %v587, %v644
        %v659 = vadd.f32 %v593, %v644
        %v660 = vadd.f32 %v597, %v644
        %v661 = vlaneseq
        %v662 = vshrl.u32 %v661, 7
        %v663 = vsub.s32 3, %v662
        %v664 = vrot.slane %v277, %v663
        %v665 = vadd.f32 %v525, %v664
        %v666 = vadd.f32 %v529, %v664
        %v667 = vadd.f32 %v535, %v664
        %v668 = vadd.f32 %v539, %v664
        %v669 = vadd.f32 %v545, %v664
        %v670 = vadd.f32 %v549, %v664
        %v671 = vadd.f32 %v555, %v664
        %v672 = vadd.f32 %v559, %v664
        %v673 = vadd.f32 %v565, %v664
        %v674 = vadd.f32 %v569, %v664
        %v675 = vadd.f32 %v575, %v664
        %v676 = vadd.f32 %v579, %v664
        %v677 = vadd.f32 %v585, %v664
        %v678 = vadd.f32 %v589, %v664
        %v679 = vadd.f32 %v595, %v664
        %v680 = vadd.f32 %v599, %v664
        %v681 = vand.u32 2147483647, %v605
        %v682 = vand.u32 2147483647, %v606
        %v683 = vand.u32 2147483647, %v607
        %v684 = vand.u32 2147483647, %v608
        %v685 = vand.u32 2147483647, %v609
        %v686 = vand.u32 2147483647, %v610
        %v687 = vand.u32 2147483647, %v611
        %v688 = vand.u32 2147483647, %v612
        %v689 = vand.u32 2147483647, %v613
        %v690 = vand.u32 2147483647, %v614
        %v691 = vand.u32 2147483647, %v615
        %v692 = vand.u32 2147483647, %v616
        %v693 = vand.u32 2147483647, %v617
        %v694 = vand.u32 2147483647, %v618
        %v695 = vand.u32 2147483647, %v619
        %v696 = vand.u32 2147483647, %v620
        %v697 = vpack.c.bf16 %v682, %v681
        %v698 = vpack.c.bf16 %v684, %v683
        %v699 = vpack.c.bf16 %v686, %v685
        %v700 = vpack.c.bf16 %v688, %v687
        %v701 = vpack.c.bf16 %v690, %v689
        %v702 = vpack.c.bf16 %v692, %v691
        %v703 = vpack.c.bf16 %v694, %v693
        %v704 = vpack.c.bf16 %v696, %v695
        %705 = vmatprep.subr.bf16.mxu0 0
        %706 = vmatpush1.bf16.xpose.msra.mxu0 %v704
        %707 = vmatprep.subr.bf16.mxu0 0
        %708 = vmatpush1.bf16.xpose.msra.mxu0 %v703
        %709 = vmatprep.subr.bf16.mxu0 0
        %710 = vmatpush1.bf16.xpose.msra.mxu0 %v702
        %711 = vmatprep.subr.bf16.mxu0 0
        %712 = vmatpush1.bf16.xpose.msra.mxu0 %v701
        %713 = vmatprep.subr.bf16.mxu0 0
        %714 = vmatpush1.bf16.xpose.msra.mxu0 %v700
        %715 = vmatprep.subr.bf16.mxu0 0
        %716 = vmatpush1.bf16.xpose.msra.mxu0 %v699
        %717 = vmatprep.subr.bf16.mxu0 0
        %718 = vmatpush1.bf16.xpose.msra.mxu0 %v698
        %719 = vmatprep.subr.bf16.mxu0 0
        %720 = vmatpush1.bf16.xpose.msra.mxu0 %v697
        %721 = vmatprep.subr.bf16.mxu0 0
        %722 = vmatpush2.bf16.xpose.msra.mxu0 0
        %723 = vmatprep.subr.bf16.mxu0 0
        %724 = vmatpush2.bf16.xpose.msra.mxu0 0
        %725 = vmatprep.subr.bf16.mxu0 0
        %726 = vmatpush2.bf16.xpose.msra.mxu0 0
        %727 = vmatprep.subr.bf16.mxu0 0
        %728 = vmatpush2.bf16.xpose.msra.mxu0 0
        %729 = vmatprep.subr.bf16.mxu0 0
        %730 = vmatpush2.bf16.xpose.msra.mxu0 0
        %731 = vmatprep.subr.bf16.mxu0 0
        %732 = vmatpush2.bf16.xpose.msra.mxu0 0
        %733 = vmatprep.subr.bf16.mxu0 0
        %734 = vmatpush2.bf16.xpose.msra.mxu0 0
        %735 = vmatprep.subr.bf16.mxu0 0
        %736 = vmatpush2.bf16.xpose.msra.mxu0 0
        %737 = vmatprep.mubr.bf16.mxu0 0
        %738 = vmatmul.mubr.bf16.gmra.mxu0 1065369472
        %v739 = vpop.f32.mrf.mxu0
        %v740 = vadd.f32 0.0, %v739
        %v741 = vpop.f32.mrf.mxu0
        %v742 = vpop.f32.mrf.mxu0
        %v743 = vpop.f32.mrf.mxu0
        %744 = vdwg.mxu0
        %v745 = vld [vmem:[%s2] sm:$0xff]
        %v746 = vld [vmem:[%s2 + $0x8] sm:$0xff]
        %v747 = vld [vmem:[%s2 + $0x10] sm:$0xff]
        %v748 = vld [vmem:[%s2 + $0x18] sm:$0xff]
        %v749 = vld [vmem:[%s2 + $0x20] sm:$0xff]
        %v750 = vld [vmem:[%s2 + $0x28] sm:$0xff]
        %v751 = vld [vmem:[%s2 + $0x30] sm:$0xff]
        %v752 = vld [vmem:[%s2 + $0x38] sm:$0xff]
        %v753 = vld [vmem:[%s2 + $0x40] sm:$0xff]
        %v754 = vld [vmem:[%s2 + $0x48] sm:$0xff]
        %v755 = vld [vmem:[%s2 + $0x50] sm:$0xff]
        %v756 = vld [vmem:[%s2 + $0x58] sm:$0xff]
        %v757 = vld [vmem:[%s2 + $0x60] sm:$0xff]
        %v758 = vld [vmem:[%s2 + $0x68] sm:$0xff]
        %v759 = vld [vmem:[%s2 + $0x70] sm:$0xff]
        %v760 = vld [vmem:[%s2 + $0x78] sm:$0xff]
        %vm761 = vcmp.eq.f32.partialorder %v740, 0.0
        %v762 = vsel %vm761, -1e+30, 0.0
        %v763 = vlaneseq
        %v764 = vshrl.u32 %v763, 7
        %v765 = vsub.s32 0, %v764
        %v766 = vrot.slane %v762, %v765
        %v767 = vadd.f32 %v745, %v766
        %v768 = vadd.f32 %v746, %v766
        %v769 = vadd.f32 %v747, %v766
        %v770 = vadd.f32 %v748, %v766
        %v771 = vadd.f32 %v749, %v766
        %v772 = vadd.f32 %v750, %v766
        %v773 = vadd.f32 %v751, %v766
        %v774 = vadd.f32 %v752, %v766
        %v775 = vadd.f32 %v753, %v766
        %v776 = vadd.f32 %v754, %v766
        %v777 = vadd.f32 %v755, %v766
        %v778 = vadd.f32 %v756, %v766
        %v779 = vadd.f32 %v757, %v766
        %v780 = vadd.f32 %v758, %v766
        %v781 = vadd.f32 %v759, %v766
        %v782 = vadd.f32 %v760, %v766
        %v783 = vpack.c.bf16 %v626, %v625
        %v784 = vpack.c.bf16 %v628, %v627
        %v785 = vpack.c.bf16 %v630, %v629
        %v786 = vpack.c.bf16 %v632, %v631
        %v787 = vpack.c.bf16 %v634, %v633
        %v788 = vpack.c.bf16 %v636, %v635
        %v789 = vpack.c.bf16 %v638, %v637
        %v790 = vpack.c.bf16 %v640, %v639
        %v791 = vpack.c.bf16 %v646, %v645
        %v792 = vpack.c.bf16 %v648, %v647
        %v793 = vpack.c.bf16 %v650, %v649
        %v794 = vpack.c.bf16 %v652, %v651
        %v795 = vpack.c.bf16 %v654, %v653
        %v796 = vpack.c.bf16 %v656, %v655
        %v797 = vpack.c.bf16 %v658, %v657
        %v798 = vpack.c.bf16 %v660, %v659
        %v800 = vsel %vm350, %v783, 0
        %v803 = vsel %vm350, %v784, 0
        %v806 = vsel %vm350, %v785, 0
        %v809 = vsel %vm350, %v786, 0
        %v812 = vsel %vm350, %v787, 0
        %v815 = vsel %vm350, %v788, 0
        %v818 = vsel %vm350, %v789, 0
        %v821 = vsel %vm350, %v790, 0
        %v824 = vsel %vm350, %v791, 0
        %v827 = vsel %vm350, %v792, 0
        %v830 = vsel %vm350, %v793, 0
        %v833 = vsel %vm350, %v794, 0
        %v836 = vsel %vm350, %v795, 0
        %v839 = vsel %vm350, %v796, 0
        %v842 = vsel %vm350, %v797, 0
        %v845 = vsel %vm350, %v798, 0
        %847 = vmatprep.subr.bf16.mxu0 0
        %848 = vmatpush1.bf16.xpose.msra.mxu0 %v845
        %849 = vmatprep.subr.bf16.mxu0 0
        %850 = vmatpush1.bf16.xpose.msra.mxu0 %v842
        %851 = vmatprep.subr.bf16.mxu0 0
        %852 = vmatpush1.bf16.xpose.msra.mxu0 %v839
        %853 = vmatprep.subr.bf16.mxu0 0
        %854 = vmatpush1.bf16.xpose.msra.mxu0 %v836
        %855 = vmatprep.subr.bf16.mxu0 0
        %856 = vmatpush1.bf16.xpose.msra.mxu0 %v833
        %857 = vmatprep.subr.bf16.mxu0 0
        %858 = vmatpush1.bf16.xpose.msra.mxu0 %v830
        %859 = vmatprep.subr.bf16.mxu0 0
        %860 = vmatpush1.bf16.xpose.msra.mxu0 %v827
        %861 = vmatprep.subr.bf16.mxu0 0
        %862 = vmatpush1.bf16.xpose.msra.mxu0 %v824
        %863 = vmatprep.subr.bf16.mxu0 0
        %864 = vmatpush2.bf16.xpose.msra.mxu0 0
        %865 = vmatprep.subr.bf16.mxu0 0
        %866 = vmatpush2.bf16.xpose.msra.mxu0 0
        %867 = vmatprep.subr.bf16.mxu0 0
        %868 = vmatpush2.bf16.xpose.msra.mxu0 0
        %869 = vmatprep.subr.bf16.mxu0 0
        %870 = vmatpush2.bf16.xpose.msra.mxu0 0
        %871 = vmatprep.subr.bf16.mxu0 0
        %872 = vmatpush2.bf16.xpose.msra.mxu0 0
        %873 = vmatprep.subr.bf16.mxu0 0
        %874 = vmatpush2.bf16.xpose.msra.mxu0 0
        %875 = vmatprep.subr.bf16.mxu0 0
        %876 = vmatpush2.bf16.xpose.msra.mxu0 0
        %877 = vmatprep.subr.bf16.mxu0 0
        %878 = vmatpush2.bf16.xpose.msra.mxu0 0
        %879 = vmatprep.mubr.bf16.mxu0 0
        %880 = vmatmul.mubr.bf16.gmra.mxu0 %v800
        %v881 = vpop.f32.mrf.mxu0
        %v882 = vadd.f32 %v767, %v881
        %v883 = vpop.f32.mrf.mxu0
        %v884 = vpop.f32.mrf.mxu0
        %v885 = vadd.f32 %v768, %v884
        %v886 = vpop.f32.mrf.mxu0
        %887 = vmatprep.mubr.bf16.mxu0 0
        %888 = vmatmul.mubr.bf16.gmra.mxu0 %v803
        %v889 = vpop.f32.mrf.mxu0
        %v890 = vadd.f32 %v769, %v889
        %v891 = vpop.f32.mrf.mxu0
        %v892 = vpop.f32.mrf.mxu0
        %v893 = vadd.f32 %v770, %v892
        %v894 = vpop.f32.mrf.mxu0
        %895 = vmatprep.mubr.bf16.mxu0 0
        %896 = vmatmul.mubr.bf16.gmra.mxu0 %v806
        %v897 = vpop.f32.mrf.mxu0
        %v898 = vadd.f32 %v771, %v897
        %v899 = vpop.f32.mrf.mxu0
        %v900 = vpop.f32.mrf.mxu0
        %v901 = vadd.f32 %v772, %v900
        %v902 = vpop.f32.mrf.mxu0
        %903 = vmatprep.mubr.bf16.mxu0 0
        %904 = vmatmul.mubr.bf16.gmra.mxu0 %v809
        %v905 = vpop.f32.mrf.mxu0
        %v906 = vadd.f32 %v773, %v905
        %v907 = vpop.f32.mrf.mxu0
        %v908 = vpop.f32.mrf.mxu0
        %v909 = vadd.f32 %v774, %v908
        %v910 = vpop.f32.mrf.mxu0
        %911 = vmatprep.mubr.bf16.mxu0 0
        %912 = vmatmul.mubr.bf16.gmra.mxu0 %v812
        %v913 = vpop.f32.mrf.mxu0
        %v914 = vadd.f32 %v775, %v913
        %v915 = vpop.f32.mrf.mxu0
        %v916 = vpop.f32.mrf.mxu0
        %v917 = vadd.f32 %v776, %v916
        %v918 = vpop.f32.mrf.mxu0
        %919 = vmatprep.mubr.bf16.mxu0 0
        %920 = vmatmul.mubr.bf16.gmra.mxu0 %v815
        %v921 = vpop.f32.mrf.mxu0
        %v922 = vadd.f32 %v777, %v921
        %v923 = vpop.f32.mrf.mxu0
        %v924 = vpop.f32.mrf.mxu0
        %v925 = vadd.f32 %v778, %v924
        %v926 = vpop.f32.mrf.mxu0
        %927 = vmatprep.mubr.bf16.mxu0 0
        %928 = vmatmul.mubr.bf16.gmra.mxu0 %v818
        %v929 = vpop.f32.mrf.mxu0
        %v930 = vadd.f32 %v779, %v929
        %v931 = vpop.f32.mrf.mxu0
        %v932 = vpop.f32.mrf.mxu0
        %v933 = vadd.f32 %v780, %v932
        %v934 = vpop.f32.mrf.mxu0
        %935 = vmatprep.mubr.bf16.mxu0 0
        %936 = vmatmul.mubr.bf16.gmra.mxu0 %v821
        %v937 = vpop.f32.mrf.mxu0
        %v938 = vadd.f32 %v781, %v937
        %v939 = vpop.f32.mrf.mxu0
        %v940 = vpop.f32.mrf.mxu0
        %v941 = vadd.f32 %v782, %v940
        %v942 = vpop.f32.mrf.mxu0
        %943 = vdwg.mxu0
        %944 = vmax.xlane.f32.xlu0 %v882
        %v945 = vpop.xlane.xlu0 %944
        %946 = vmax.xlane.f32.xlu0 %v885
        %v947 = vpop.xlane.xlu0 %946
        %948 = vmax.xlane.f32.xlu0 %v890
        %v949 = vpop.xlane.xlu0 %948
        %950 = vmax.xlane.f32.xlu0 %v893
        %v951 = vpop.xlane.xlu0 %950
        %952 = vmax.xlane.f32.xlu0 %v898
        %v953 = vpop.xlane.xlu0 %952
        %954 = vmax.xlane.f32.xlu0 %v901
        %v955 = vpop.xlane.xlu0 %954
        %956 = vmax.xlane.f32.xlu0 %v906
        %v957 = vpop.xlane.xlu0 %956
        %958 = vmax.xlane.f32.xlu0 %v909
        %v959 = vpop.xlane.xlu0 %958
        %960 = vmax.xlane.f32.xlu0 %v914
        %v961 = vpop.xlane.xlu0 %960
        %962 = vmax.xlane.f32.xlu0 %v917
        %v963 = vpop.xlane.xlu0 %962
        %964 = vmax.xlane.f32.xlu0 %v922
        %v965 = vpop.xlane.xlu0 %964
        %966 = vmax.xlane.f32.xlu0 %v925
        %v967 = vpop.xlane.xlu0 %966
        %968 = vmax.xlane.f32.xlu0 %v930
        %v969 = vpop.xlane.xlu0 %968
        %970 = vmax.xlane.f32.xlu0 %v933
        %v971 = vpop.xlane.xlu0 %970
        %972 = vmax.xlane.f32.xlu0 %v938
        %v973 = vpop.xlane.xlu0 %972
        %974 = vmax.xlane.f32.xlu0 %v941
        %v975 = vpop.xlane.xlu0 %974
        %v976 = vsub.f32 %v882, %v945
        %v977 = vsub.f32 %v885, %v947
        %v978 = vsub.f32 %v890, %v949
        %v979 = vsub.f32 %v893, %v951
        %v980 = vsub.f32 %v898, %v953
        %v981 = vsub.f32 %v901, %v955
        %v982 = vsub.f32 %v906, %v957
        %v983 = vsub.f32 %v909, %v959
        %v984 = vsub.f32 %v914, %v961
        %v985 = vsub.f32 %v917, %v963
        %v986 = vsub.f32 %v922, %v965
        %v987 = vsub.f32 %v925, %v967
        %v988 = vsub.f32 %v930, %v969
        %v989 = vsub.f32 %v933, %v971
        %v990 = vsub.f32 %v938, %v973
        %v991 = vsub.f32 %v941, %v975
        %v992 = vpack.c.bf16 %v977, %v976
        %v993 = vpack.c.bf16 %v979, %v978
        %v994 = vpack.c.bf16 %v981, %v980
        %v995 = vpack.c.bf16 %v983, %v982
        %v996 = vpack.c.bf16 %v985, %v984
        %v997 = vpack.c.bf16 %v987, %v986
        %v998 = vpack.c.bf16 %v989, %v988
        %v999 = vpack.c.bf16 %v991, %v990
        %v1001 = vmul.bf16 %v992, 1069105081
        %v1002 = vpow.bf16.pop %v1001
        %v1004 = vmul.bf16 %v993, 1069105081
        %v1005 = vpow.bf16.pop %v1004
        %v1007 = vmul.bf16 %v994, 1069105081
        %v1008 = vpow.bf16.pop %v1007
        %v1010 = vmul.bf16 %v995, 1069105081
        %v1011 = vpow.bf16.pop %v1010
        %v1013 = vmul.bf16 %v996, 1069105081
        %v1014 = vpow.bf16.pop %v1013
        %v1016 = vmul.bf16 %v997, 1069105081
        %v1017 = vpow.bf16.pop %v1016
        %v1019 = vmul.bf16 %v998, 1069105081
        %v1020 = vpow.bf16.pop %v1019
        %v1022 = vmul.bf16 %v999, 1069105081
        %v1023 = vpow.bf16.pop %v1022
        %v1024 = vunpack.c.l.bf16 %v1002
        %v1025 = vunpack.c.h.bf16 %v1002
        %v1026 = vunpack.c.l.bf16 %v1005
        %v1027 = vunpack.c.h.bf16 %v1005
        %v1028 = vunpack.c.l.bf16 %v1008
        %v1029 = vunpack.c.h.bf16 %v1008
        %v1030 = vunpack.c.l.bf16 %v1011
        %v1031 = vunpack.c.h.bf16 %v1011
        %v1032 = vunpack.c.l.bf16 %v1014
        %v1033 = vunpack.c.h.bf16 %v1014
        %v1034 = vunpack.c.l.bf16 %v1017
        %v1035 = vunpack.c.h.bf16 %v1017
        %v1036 = vunpack.c.l.bf16 %v1020
        %v1037 = vunpack.c.h.bf16 %v1020
        %v1038 = vunpack.c.l.bf16 %v1023
        %v1039 = vunpack.c.h.bf16 %v1023
        %1040 = vadd.xlane.f32.xlu0 %v1024
        %v1041 = vpop.xlane.xlu0 %1040
        %1042 = vadd.xlane.f32.xlu0 %v1025
        %v1043 = vpop.xlane.xlu0 %1042
        %1044 = vadd.xlane.f32.xlu0 %v1026
        %v1045 = vpop.xlane.xlu0 %1044
        %1046 = vadd.xlane.f32.xlu0 %v1027
        %v1047 = vpop.xlane.xlu0 %1046
        %1048 = vadd.xlane.f32.xlu0 %v1028
        %v1049 = vpop.xlane.xlu0 %1048
        %1050 = vadd.xlane.f32.xlu0 %v1029
        %v1051 = vpop.xlane.xlu0 %1050
        %1052 = vadd.xlane.f32.xlu0 %v1030
        %v1053 = vpop.xlane.xlu0 %1052
        %1054 = vadd.xlane.f32.xlu0 %v1031
        %v1055 = vpop.xlane.xlu0 %1054
        %1056 = vadd.xlane.f32.xlu0 %v1032
        %v1057 = vpop.xlane.xlu0 %1056
        %1058 = vadd.xlane.f32.xlu0 %v1033
        %v1059 = vpop.xlane.xlu0 %1058
        %1060 = vadd.xlane.f32.xlu0 %v1034
        %v1061 = vpop.xlane.xlu0 %1060
        %1062 = vadd.xlane.f32.xlu0 %v1035
        %v1063 = vpop.xlane.xlu0 %1062
        %1064 = vadd.xlane.f32.xlu0 %v1036
        %v1065 = vpop.xlane.xlu0 %1064
        %1066 = vadd.xlane.f32.xlu0 %v1037
        %v1067 = vpop.xlane.xlu0 %1066
        %1068 = vadd.xlane.f32.xlu0 %v1038
        %v1069 = vpop.xlane.xlu0 %1068
        %1070 = vadd.xlane.f32.xlu0 %v1039
        %v1071 = vpop.xlane.xlu0 %1070
        %v1072 = vrcp.pop %v1041
        %v1073 = vrcp.pop %v1043
        %v1074 = vrcp.pop %v1045
        %v1075 = vrcp.pop %v1047
        %v1076 = vrcp.pop %v1049
        %v1077 = vrcp.pop %v1051
        %v1078 = vrcp.pop %v1053
        %v1079 = vrcp.pop %v1055
        %v1080 = vrcp.pop %v1057
        %v1081 = vrcp.pop %v1059
        %v1082 = vrcp.pop %v1061
        %v1083 = vrcp.pop %v1063
        %v1084 = vrcp.pop %v1065
        %v1085 = vrcp.pop %v1067
        %v1086 = vrcp.pop %v1069
        %v1087 = vrcp.pop %v1071
        %v1088 = vpack.c.bf16 %v1073, %v1072
        %v1089 = vpack.c.bf16 %v1075, %v1074
        %v1090 = vpack.c.bf16 %v1077, %v1076
        %v1091 = vpack.c.bf16 %v1079, %v1078
        %v1092 = vpack.c.bf16 %v1081, %v1080
        %v1093 = vpack.c.bf16 %v1083, %v1082
        %v1094 = vpack.c.bf16 %v1085, %v1084
        %v1095 = vpack.c.bf16 %v1087, %v1086
        %v1096 = vmul.bf16 %v1002, %v1088
        %v1097 = vmul.bf16 %v1005, %v1089
        %v1098 = vmul.bf16 %v1008, %v1090
        %v1099 = vmul.bf16 %v1011, %v1091
        %v1100 = vmul.bf16 %v1014, %v1092
        %v1101 = vmul.bf16 %v1017, %v1093
        %v1102 = vmul.bf16 %v1020, %v1094
        %v1103 = vmul.bf16 %v1023, %v1095
        %v1104 = vunpack.c.l.bf16 %v1096
        %v1105 = vunpack.c.h.bf16 %v1096
        %v1106 = vunpack.c.l.bf16 %v1097
        %v1107 = vunpack.c.h.bf16 %v1097
        %v1108 = vunpack.c.l.bf16 %v1098
        %v1109 = vunpack.c.h.bf16 %v1098
        %v1110 = vunpack.c.l.bf16 %v1099
        %v1111 = vunpack.c.h.bf16 %v1099
        %v1112 = vunpack.c.l.bf16 %v1100
        %v1113 = vunpack.c.h.bf16 %v1100
        %v1114 = vunpack.c.l.bf16 %v1101
        %v1115 = vunpack.c.h.bf16 %v1101
        %v1116 = vunpack.c.l.bf16 %v1102
        %v1117 = vunpack.c.h.bf16 %v1102
        %v1118 = vunpack.c.l.bf16 %v1103
        %v1119 = vunpack.c.h.bf16 %v1103
        %v1120 = vadd.f32 %v1104, 0.0
        %v1121 = vadd.f32 %v1105, 0.0
        %v1122 = vadd.f32 %v1106, 0.0
        %v1123 = vadd.f32 %v1107, 0.0
        %v1124 = vadd.f32 %v1108, 0.0
        %v1125 = vadd.f32 %v1109, 0.0
        %v1126 = vadd.f32 %v1110, 0.0
        %v1127 = vadd.f32 %v1111, 0.0
        %v1128 = vadd.f32 %v1112, 0.0
        %v1129 = vadd.f32 %v1113, 0.0
        %v1130 = vadd.f32 %v1114, 0.0
        %v1131 = vadd.f32 %v1115, 0.0
        %v1132 = vadd.f32 %v1116, 0.0
        %v1133 = vadd.f32 %v1117, 0.0
        %v1134 = vadd.f32 %v1118, 0.0
        %v1135 = vadd.f32 %v1119, 0.0
        %1144 = vrot.lane.b32.xlu0 %v783, 96
        %v1145 = vpop.permute.xlu0 %1144
        %1146 = vrot.lane.b32.xlu0 %v784, 96
        %v1147 = vpop.permute.xlu0 %1146
        %1148 = vrot.lane.b32.xlu0 %v785, 96
        %v1149 = vpop.permute.xlu0 %1148
        %1150 = vrot.lane.b32.xlu0 %v786, 96
        %v1151 = vpop.permute.xlu0 %1150
        %1152 = vrot.lane.b32.xlu0 %v787, 96
        %v1153 = vpop.permute.xlu0 %1152
        %1154 = vrot.lane.b32.xlu0 %v788, 96
        %v1155 = vpop.permute.xlu0 %1154
        %1156 = vrot.lane.b32.xlu0 %v789, 96
        %v1157 = vpop.permute.xlu0 %1156
        %1158 = vrot.lane.b32.xlu0 %v790, 96
        %v1159 = vpop.permute.xlu0 %1158
        %1168 = vrot.lane.b32.xlu0 %v791, 96
        %v1169 = vpop.permute.xlu0 %1168
        %1170 = vrot.lane.b32.xlu0 %v792, 96
        %v1171 = vpop.permute.xlu0 %1170
        %1172 = vrot.lane.b32.xlu0 %v793, 96
        %v1173 = vpop.permute.xlu0 %1172
        %1174 = vrot.lane.b32.xlu0 %v794, 96
        %v1175 = vpop.permute.xlu0 %1174
        %1176 = vrot.lane.b32.xlu0 %v795, 96
        %v1177 = vpop.permute.xlu0 %1176
        %1178 = vrot.lane.b32.xlu0 %v796, 96
        %v1179 = vpop.permute.xlu0 %1178
        %1180 = vrot.lane.b32.xlu0 %v797, 96
        %v1181 = vpop.permute.xlu0 %1180
        %1182 = vrot.lane.b32.xlu0 %v798, 96
        %v1183 = vpop.permute.xlu0 %1182
        %v1185 = vsel %vm350, %v1145, 0
        %v1188 = vsel %vm350, %v1147, 0
        %v1191 = vsel %vm350, %v1149, 0
        %v1194 = vsel %vm350, %v1151, 0
        %v1197 = vsel %vm350, %v1153, 0
        %v1200 = vsel %vm350, %v1155, 0
        %v1203 = vsel %vm350, %v1157, 0
        %v1206 = vsel %vm350, %v1159, 0
        %v1209 = vsel %vm350, %v1169, 0
        %v1212 = vsel %vm350, %v1171, 0
        %v1215 = vsel %vm350, %v1173, 0
        %v1218 = vsel %vm350, %v1175, 0
        %v1221 = vsel %vm350, %v1177, 0
        %v1224 = vsel %vm350, %v1179, 0
        %v1227 = vsel %vm350, %v1181, 0
        %v1230 = vsel %vm350, %v1183, 0
        %1232 = vmatprep.subr.bf16.mxu0 0
        %1233 = vmatpush1.bf16.xpose.msra.mxu0 %v1230
        %1234 = vmatprep.subr.bf16.mxu0 0
        %1235 = vmatpush1.bf16.xpose.msra.mxu0 %v1227
        %1236 = vmatprep.subr.bf16.mxu0 0
        %1237 = vmatpush1.bf16.xpose.msra.mxu0 %v1224
        %1238 = vmatprep.subr.bf16.mxu0 0
        %1239 = vmatpush1.bf16.xpose.msra.mxu0 %v1221
        %1240 = vmatprep.subr.bf16.mxu0 0
        %1241 = vmatpush1.bf16.xpose.msra.mxu0 %v1218
        %1242 = vmatprep.subr.bf16.mxu0 0
        %1243 = vmatpush1.bf16.xpose.msra.mxu0 %v1215
        %1244 = vmatprep.subr.bf16.mxu0 0
        %1245 = vmatpush1.bf16.xpose.msra.mxu0 %v1212
        %1246 = vmatprep.subr.bf16.mxu0 0
        %1247 = vmatpush1.bf16.xpose.msra.mxu0 %v1209
        %1248 = vmatprep.subr.bf16.mxu0 0
        %1249 = vmatpush2.bf16.xpose.msra.mxu0 0
        %1250 = vmatprep.subr.bf16.mxu0 0
        %1251 = vmatpush2.bf16.xpose.msra.mxu0 0
        %1252 = vmatprep.subr.bf16.mxu0 0
        %1253 = vmatpush2.bf16.xpose.msra.mxu0 0
        %1254 = vmatprep.subr.bf16.mxu0 0
        %1255 = vmatpush2.bf16.xpose.msra.mxu0 0
        %1256 = vmatprep.subr.bf16.mxu0 0
        %1257 = vmatpush2.bf16.xpose.msra.mxu0 0
        %1258 = vmatprep.subr.bf16.mxu0 0
        %1259 = vmatpush2.bf16.xpose.msra.mxu0 0
        %1260 = vmatprep.subr.bf16.mxu0 0
        %1261 = vmatpush2.bf16.xpose.msra.mxu0 0
        %1262 = vmatprep.subr.bf16.mxu0 0
        %1263 = vmatpush2.bf16.xpose.msra.mxu0 0
        %1264 = vmatprep.mubr.bf16.mxu0 0
        %1265 = vmatmul.mubr.bf16.gmra.mxu0 %v1185
        %v1266 = vpop.f32.mrf.mxu0
        %v1267 = vadd.f32 %v767, %v1266
        %v1268 = vpop.f32.mrf.mxu0
        %v1269 = vpop.f32.mrf.mxu0
        %v1270 = vadd.f32 %v768, %v1269
        %v1271 = vpop.f32.mrf.mxu0
        %1272 = vmatprep.mubr.bf16.mxu0 0
        %1273 = vmatmul.mubr.bf16.gmra.mxu0 %v1188
        %v1274 = vpop.f32.mrf.mxu0
        %v1275 = vadd.f32 %v769, %v1274
        %v1276 = vpop.f32.mrf.mxu0
        %v1277 = vpop.f32.mrf.mxu0
        %v1278 = vadd.f32 %v770, %v1277
        %v1279 = vpop.f32.mrf.mxu0
        %1280 = vmatprep.mubr.bf16.mxu0 0
        %1281 = vmatmul.mubr.bf16.gmra.mxu0 %v1191
        %v1282 = vpop.f32.mrf.mxu0
        %v1283 = vadd.f32 %v771, %v1282
        %v1284 = vpop.f32.mrf.mxu0
        %v1285 = vpop.f32.mrf.mxu0
        %v1286 = vadd.f32 %v772, %v1285
        %v1287 = vpop.f32.mrf.mxu0
        %1288 = vmatprep.mubr.bf16.mxu0 0
        %1289 = vmatmul.mubr.bf16.gmra.mxu0 %v1194
        %v1290 = vpop.f32.mrf.mxu0
        %v1291 = vadd.f32 %v773, %v1290
        %v1292 = vpop.f32.mrf.mxu0
        %v1293 = vpop.f32.mrf.mxu0
        %v1294 = vadd.f32 %v774, %v1293
        %v1295 = vpop.f32.mrf.mxu0
        %1296 = vmatprep.mubr.bf16.mxu0 0
        %1297 = vmatmul.mubr.bf16.gmra.mxu0 %v1197
        %v1298 = vpop.f32.mrf.mxu0
        %v1299 = vadd.f32 %v775, %v1298
        %v1300 = vpop.f32.mrf.mxu0
        %v1301 = vpop.f32.mrf.mxu0
        %v1302 = vadd.f32 %v776, %v1301
        %v1303 = vpop.f32.mrf.mxu0
        %1304 = vmatprep.mubr.bf16.mxu0 0
        %1305 = vmatmul.mubr.bf16.gmra.mxu0 %v1200
        %v1306 = vpop.f32.mrf.mxu0
        %v1307 = vadd.f32 %v777, %v1306
        %v1308 = vpop.f32.mrf.mxu0
        %v1309 = vpop.f32.mrf.mxu0
        %v1310 = vadd.f32 %v778, %v1309
        %v1311 = vpop.f32.mrf.mxu0
        %1312 = vmatprep.mubr.bf16.mxu0 0
        %1313 = vmatmul.mubr.bf16.gmra.mxu0 %v1203
        %v1314 = vpop.f32.mrf.mxu0
        %v1315 = vadd.f32 %v779, %v1314
        %v1316 = vpop.f32.mrf.mxu0
        %v1317 = vpop.f32.mrf.mxu0
        %v1318 = vadd.f32 %v780, %v1317
        %v1319 = vpop.f32.mrf.mxu0
        %1320 = vmatprep.mubr.bf16.mxu0 0
        %1321 = vmatmul.mubr.bf16.gmra.mxu0 %v1206
        %v1322 = vpop.f32.mrf.mxu0
        %v1323 = vadd.f32 %v781, %v1322
        %v1324 = vpop.f32.mrf.mxu0
        %v1325 = vpop.f32.mrf.mxu0
        %v1326 = vadd.f32 %v782, %v1325
        %v1327 = vpop.f32.mrf.mxu0
        %1328 = vdwg.mxu0
        %1329 = vmax.xlane.f32.xlu0 %v1267
        %v1330 = vpop.xlane.xlu0 %1329
        %1331 = vmax.xlane.f32.xlu0 %v1270
        %v1332 = vpop.xlane.xlu0 %1331
        %1333 = vmax.xlane.f32.xlu0 %v1275
        %v1334 = vpop.xlane.xlu0 %1333
        %1335 = vmax.xlane.f32.xlu0 %v1278
        %v1336 = vpop.xlane.xlu0 %1335
        %1337 = vmax.xlane.f32.xlu0 %v1283
        %v1338 = vpop.xlane.xlu0 %1337
        %1339 = vmax.xlane.f32.xlu0 %v1286
        %v1340 = vpop.xlane.xlu0 %1339
        %1341 = vmax.xlane.f32.xlu0 %v1291
        %v1342 = vpop.xlane.xlu0 %1341
        %1343 = vmax.xlane.f32.xlu0 %v1294
        %v1344 = vpop.xlane.xlu0 %1343
        %1345 = vmax.xlane.f32.xlu0 %v1299
        %v1346 = vpop.xlane.xlu0 %1345
        %1347 = vmax.xlane.f32.xlu0 %v1302
        %v1348 = vpop.xlane.xlu0 %1347
        %1349 = vmax.xlane.f32.xlu0 %v1307
        %v1350 = vpop.xlane.xlu0 %1349
        %1351 = vmax.xlane.f32.xlu0 %v1310
        %v1352 = vpop.xlane.xlu0 %1351
        %1353 = vmax.xlane.f32.xlu0 %v1315
        %v1354 = vpop.xlane.xlu0 %1353
        %1355 = vmax.xlane.f32.xlu0 %v1318
        %v1356 = vpop.xlane.xlu0 %1355
        %1357 = vmax.xlane.f32.xlu0 %v1323
        %v1358 = vpop.xlane.xlu0 %1357
        %1359 = vmax.xlane.f32.xlu0 %v1326
        %v1360 = vpop.xlane.xlu0 %1359
        %v1361 = vsub.f32 %v1267, %v1330
        %v1362 = vsub.f32 %v1270, %v1332
        %v1363 = vsub.f32 %v1275, %v1334
        %v1364 = vsub.f32 %v1278, %v1336
        %v1365 = vsub.f32 %v1283, %v1338
        %v1366 = vsub.f32 %v1286, %v1340
        %v1367 = vsub.f32 %v1291, %v1342
        %v1368 = vsub.f32 %v1294, %v1344
        %v1369 = vsub.f32 %v1299, %v1346
        %v1370 = vsub.f32 %v1302, %v1348
        %v1371 = vsub.f32 %v1307, %v1350
        %v1372 = vsub.f32 %v1310, %v1352
        %v1373 = vsub.f32 %v1315, %v1354
        %v1374 = vsub.f32 %v1318, %v1356
        %v1375 = vsub.f32 %v1323, %v1358
        %v1376 = vsub.f32 %v1326, %v1360
        %v1377 = vpack.c.bf16 %v1362, %v1361
        %v1378 = vpack.c.bf16 %v1364, %v1363
        %v1379 = vpack.c.bf16 %v1366, %v1365
        %v1380 = vpack.c.bf16 %v1368, %v1367
        %v1381 = vpack.c.bf16 %v1370, %v1369
        %v1382 = vpack.c.bf16 %v1372, %v1371
        %v1383 = vpack.c.bf16 %v1374, %v1373
        %v1384 = vpack.c.bf16 %v1376, %v1375
        %v1386 = vmul.bf16 %v1377, 1069105081
        %v1387 = vpow.bf16.pop %v1386
        %v1389 = vmul.bf16 %v1378, 1069105081
        %v1390 = vpow.bf16.pop %v1389
        %v1392 = vmul.bf16 %v1379, 1069105081
        %v1393 = vpow.bf16.pop %v1392
        %v1395 = vmul.bf16 %v1380, 1069105081
        %v1396 = vpow.bf16.pop %v1395
        %v1398 = vmul.bf16 %v1381, 1069105081
        %v1399 = vpow.bf16.pop %v1398
        %v1401 = vmul.bf16 %v1382, 1069105081
        %v1402 = vpow.bf16.pop %v1401
        %v1404 = vmul.bf16 %v1383, 1069105081
        %v1405 = vpow.bf16.pop %v1404
        %v1407 = vmul.bf16 %v1384, 1069105081
        %v1408 = vpow.bf16.pop %v1407
        %v1409 = vunpack.c.l.bf16 %v1387
        %v1410 = vunpack.c.h.bf16 %v1387
        %v1411 = vunpack.c.l.bf16 %v1390
        %v1412 = vunpack.c.h.bf16 %v1390
        %v1413 = vunpack.c.l.bf16 %v1393
        %v1414 = vunpack.c.h.bf16 %v1393
        %v1415 = vunpack.c.l.bf16 %v1396
        %v1416 = vunpack.c.h.bf16 %v1396
        %v1417 = vunpack.c.l.bf16 %v1399
        %v1418 = vunpack.c.h.bf16 %v1399
        %v1419 = vunpack.c.l.bf16 %v1402
        %v1420 = vunpack.c.h.bf16 %v1402
        %v1421 = vunpack.c.l.bf16 %v1405
        %v1422 = vunpack.c.h.bf16 %v1405
        %v1423 = vunpack.c.l.bf16 %v1408
        %v1424 = vunpack.c.h.bf16 %v1408
        %1425 = vadd.xlane.f32.xlu0 %v1409
        %v1426 = vpop.xlane.xlu0 %1425
        %1427 = vadd.xlane.f32.xlu0 %v1410
        %v1428 = vpop.xlane.xlu0 %1427
        %1429 = vadd.xlane.f32.xlu0 %v1411
        %v1430 = vpop.xlane.xlu0 %1429
        %1431 = vadd.xlane.f32.xlu0 %v1412
        %v1432 = vpop.xlane.xlu0 %1431
        %1433 = vadd.xlane.f32.xlu0 %v1413
        %v1434 = vpop.xlane.xlu0 %1433
        %1435 = vadd.xlane.f32.xlu0 %v1414
        %v1436 = vpop.xlane.xlu0 %1435
        %1437 = vadd.xlane.f32.xlu0 %v1415
        %v1438 = vpop.xlane.xlu0 %1437
        %1439 = vadd.xlane.f32.xlu0 %v1416
        %v1440 = vpop.xlane.xlu0 %1439
        %1441 = vadd.xlane.f32.xlu0 %v1417
        %v1442 = vpop.xlane.xlu0 %1441
        %1443 = vadd.xlane.f32.xlu0 %v1418
        %v1444 = vpop.xlane.xlu0 %1443
        %1445 = vadd.xlane.f32.xlu0 %v1419
        %v1446 = vpop.xlane.xlu0 %1445
        %1447 = vadd.xlane.f32.xlu0 %v1420
        %v1448 = vpop.xlane.xlu0 %1447
        %1449 = vadd.xlane.f32.xlu0 %v1421
        %v1450 = vpop.xlane.xlu0 %1449
        %1451 = vadd.xlane.f32.xlu0 %v1422
        %v1452 = vpop.xlane.xlu0 %1451
        %1453 = vadd.xlane.f32.xlu0 %v1423
        %v1454 = vpop.xlane.xlu0 %1453
        %1455 = vadd.xlane.f32.xlu0 %v1424
        %v1456 = vpop.xlane.xlu0 %1455
        %v1457 = vrcp.pop %v1426
        %v1458 = vrcp.pop %v1428
        %v1459 = vrcp.pop %v1430
        %v1460 = vrcp.pop %v1432
        %v1461 = vrcp.pop %v1434
        %v1462 = vrcp.pop %v1436
        %v1463 = vrcp.pop %v1438
        %v1464 = vrcp.pop %v1440
        %v1465 = vrcp.pop %v1442
        %v1466 = vrcp.pop %v1444
        %v1467 = vrcp.pop %v1446
        %v1468 = vrcp.pop %v1448
        %v1469 = vrcp.pop %v1450
        %v1470 = vrcp.pop %v1452
        %v1471 = vrcp.pop %v1454
        %v1472 = vrcp.pop %v1456
        %v1473 = vpack.c.bf16 %v1458, %v1457
        %v1474 = vpack.c.bf16 %v1460, %v1459
        %v1475 = vpack.c.bf16 %v1462, %v1461
        %v1476 = vpack.c.bf16 %v1464, %v1463
        %v1477 = vpack.c.bf16 %v1466, %v1465
        %v1478 = vpack.c.bf16 %v1468, %v1467
        %v1479 = vpack.c.bf16 %v1470, %v1469
        %v1480 = vpack.c.bf16 %v1472, %v1471
        %v1481 = vmul.bf16 %v1387, %v1473
        %v1482 = vmul.bf16 %v1390, %v1474
        %v1483 = vmul.bf16 %v1393, %v1475
        %v1484 = vmul.bf16 %v1396, %v1476
        %v1485 = vmul.bf16 %v1399, %v1477
        %v1486 = vmul.bf16 %v1402, %v1478
        %v1487 = vmul.bf16 %v1405, %v1479
        %v1488 = vmul.bf16 %v1408, %v1480
        %v1489 = vunpack.c.l.bf16 %v1481
        %v1490 = vunpack.c.h.bf16 %v1481
        %v1491 = vunpack.c.l.bf16 %v1482
        %v1492 = vunpack.c.h.bf16 %v1482
        %v1493 = vunpack.c.l.bf16 %v1483
        %v1494 = vunpack.c.h.bf16 %v1483
        %v1495 = vunpack.c.l.bf16 %v1484
        %v1496 = vunpack.c.h.bf16 %v1484
        %v1497 = vunpack.c.l.bf16 %v1485
        %v1498 = vunpack.c.h.bf16 %v1485
        %v1499 = vunpack.c.l.bf16 %v1486
        %v1500 = vunpack.c.h.bf16 %v1486
        %v1501 = vunpack.c.l.bf16 %v1487
        %v1502 = vunpack.c.h.bf16 %v1487
        %v1503 = vunpack.c.l.bf16 %v1488
        %v1504 = vunpack.c.h.bf16 %v1488
        %v1505 = vadd.f32 %v1120, %v1489
        %v1506 = vadd.f32 %v1121, %v1490
        %v1507 = vadd.f32 %v1122, %v1491
        %v1508 = vadd.f32 %v1123, %v1492
        %v1509 = vadd.f32 %v1124, %v1493
        %v1510 = vadd.f32 %v1125, %v1494
        %v1511 = vadd.f32 %v1126, %v1495
        %v1512 = vadd.f32 %v1127, %v1496
        %v1513 = vadd.f32 %v1128, %v1497
        %v1514 = vadd.f32 %v1129, %v1498
        %v1515 = vadd.f32 %v1130, %v1499
        %v1516 = vadd.f32 %v1131, %v1500
        %v1517 = vadd.f32 %v1132, %v1501
        %v1518 = vadd.f32 %v1133, %v1502
        %v1519 = vadd.f32 %v1134, %v1503
        %v1520 = vadd.f32 %v1135, %v1504
        %1521 = vrot.lane.b32.xlu0 %v783, 64
        %v1522 = vpop.permute.xlu0 %1521
        %1523 = vrot.lane.b32.xlu0 %v784, 64
        %v1524 = vpop.permute.xlu0 %1523
        %1525 = vrot.lane.b32.xlu0 %v785, 64
        %v1526 = vpop.permute.xlu0 %1525
        %1527 = vrot.lane.b32.xlu0 %v786, 64
        %v1528 = vpop.permute.xlu0 %1527
        %1529 = vrot.lane.b32.xlu0 %v787, 64
        %v1530 = vpop.permute.xlu0 %1529
        %1531 = vrot.lane.b32.xlu0 %v788, 64
        %v1532 = vpop.permute.xlu0 %1531
        %1533 = vrot.lane.b32.xlu0 %v789, 64
        %v1534 = vpop.permute.xlu0 %1533
        %1535 = vrot.lane.b32.xlu0 %v790, 64
        %v1536 = vpop.permute.xlu0 %1535
        %1537 = vrot.lane.b32.xlu0 %v791, 64
        %v1538 = vpop.permute.xlu0 %1537
        %1539 = vrot.lane.b32.xlu0 %v792, 64
        %v1540 = vpop.permute.xlu0 %1539
        %1541 = vrot.lane.b32.xlu0 %v793, 64
        %v1542 = vpop.permute.xlu0 %1541
        %1543 = vrot.lane.b32.xlu0 %v794, 64
        %v1544 = vpop.permute.xlu0 %1543
        %1545 = vrot.lane.b32.xlu0 %v795, 64
        %v1546 = vpop.permute.xlu0 %1545
        %1547 = vrot.lane.b32.xlu0 %v796, 64
        %v1548 = vpop.permute.xlu0 %1547
        %1549 = vrot.lane.b32.xlu0 %v797, 64
        %v1550 = vpop.permute.xlu0 %1549
        %1551 = vrot.lane.b32.xlu0 %v798, 64
        %v1552 = vpop.permute.xlu0 %1551
        %v1554 = vsel %vm350, %v1522, 0
        %v1557 = vsel %vm350, %v1524, 0
        %v1560 = vsel %vm350, %v1526, 0
        %v1563 = vsel %vm350, %v1528, 0
        %v1566 = vsel %vm350, %v1530, 0
        %v1569 = vsel %vm350, %v1532, 0
        %v1572 = vsel %vm350, %v1534, 0
        %v1575 = vsel %vm350, %v1536, 0
        %v1578 = vsel %vm350, %v1538, 0
        %v1581 = vsel %vm350, %v1540, 0
        %v1584 = vsel %vm350, %v1542, 0
        %v1587 = vsel %vm350, %v1544, 0
        %v1590 = vsel %vm350, %v1546, 0
        %v1593 = vsel %vm350, %v1548, 0
        %v1596 = vsel %vm350, %v1550, 0
        %v1599 = vsel %vm350, %v1552, 0
        %1601 = vmatprep.subr.bf16.mxu0 0
        %1602 = vmatpush1.bf16.xpose.msra.mxu0 %v1599
        %1603 = vmatprep.subr.bf16.mxu0 0
        %1604 = vmatpush1.bf16.xpose.msra.mxu0 %v1596
        %1605 = vmatprep.subr.bf16.mxu0 0
        %1606 = vmatpush1.bf16.xpose.msra.mxu0 %v1593
        %1607 = vmatprep.subr.bf16.mxu0 0
        %1608 = vmatpush1.bf16.xpose.msra.mxu0 %v1590
        %1609 = vmatprep.subr.bf16.mxu0 0
        %1610 = vmatpush1.bf16.xpose.msra.mxu0 %v1587
        %1611 = vmatprep.subr.bf16.mxu0 0
        %1612 = vmatpush1.bf16.xpose.msra.mxu0 %v1584
        %1613 = vmatprep.subr.bf16.mxu0 0
        %1614 = vmatpush1.bf16.xpose.msra.mxu0 %v1581
        %1615 = vmatprep.subr.bf16.mxu0 0
        %1616 = vmatpush1.bf16.xpose.msra.mxu0 %v1578
        %1617 = vmatprep.subr.bf16.mxu0 0
        %1618 = vmatpush2.bf16.xpose.msra.mxu0 0
        %1619 = vmatprep.subr.bf16.mxu0 0
        %1620 = vmatpush2.bf16.xpose.msra.mxu0 0
        %1621 = vmatprep.subr.bf16.mxu0 0
        %1622 = vmatpush2.bf16.xpose.msra.mxu0 0
        %1623 = vmatprep.subr.bf16.mxu0 0
        %1624 = vmatpush2.bf16.xpose.msra.mxu0 0
        %1625 = vmatprep.subr.bf16.mxu0 0
        %1626 = vmatpush2.bf16.xpose.msra.mxu0 0
        %1627 = vmatprep.subr.bf16.mxu0 0
        %1628 = vmatpush2.bf16.xpose.msra.mxu0 0
        %1629 = vmatprep.subr.bf16.mxu0 0
        %1630 = vmatpush2.bf16.xpose.msra.mxu0 0
        %1631 = vmatprep.subr.bf16.mxu0 0
        %1632 = vmatpush2.bf16.xpose.msra.mxu0 0
        %1633 = vmatprep.mubr.bf16.mxu0 0
        %1634 = vmatmul.mubr.bf16.gmra.mxu0 %v1554
        %v1635 = vpop.f32.mrf.mxu0
        %v1636 = vadd.f32 %v767, %v1635
        %v1637 = vpop.f32.mrf.mxu0
        %v1638 = vpop.f32.mrf.mxu0
        %v1639 = vadd.f32 %v768, %v1638
        %v1640 = vpop.f32.mrf.mxu0
        %1641 = vmatprep.mubr.bf16.mxu0 0
        %1642 = vmatmul.mubr.bf16.gmra.mxu0 %v1557
        %v1643 = vpop.f32.mrf.mxu0
        %v1644 = vadd.f32 %v769, %v1643
        %v1645 = vpop.f32.mrf.mxu0
        %v1646 = vpop.f32.mrf.mxu0
        %v1647 = vadd.f32 %v770, %v1646
        %v1648 = vpop.f32.mrf.mxu0
        %1649 = vmatprep.mubr.bf16.mxu0 0
        %1650 = vmatmul.mubr.bf16.gmra.mxu0 %v1560
        %v1651 = vpop.f32.mrf.mxu0
        %v1652 = vadd.f32 %v771, %v1651
        %v1653 = vpop.f32.mrf.mxu0
        %v1654 = vpop.f32.mrf.mxu0
        %v1655 = vadd.f32 %v772, %v1654
        %v1656 = vpop.f32.mrf.mxu0
        %1657 = vmatprep.mubr.bf16.mxu0 0
        %1658 = vmatmul.mubr.bf16.gmra.mxu0 %v1563
        %v1659 = vpop.f32.mrf.mxu0
        %v1660 = vadd.f32 %v773, %v1659
        %v1661 = vpop.f32.mrf.mxu0
        %v1662 = vpop.f32.mrf.mxu0
        %v1663 = vadd.f32 %v774, %v1662
        %v1664 = vpop.f32.mrf.mxu0
        %1665 = vmatprep.mubr.bf16.mxu0 0
        %1666 = vmatmul.mubr.bf16.gmra.mxu0 %v1566
        %v1667 = vpop.f32.mrf.mxu0
        %v1668 = vadd.f32 %v775, %v1667
        %v1669 = vpop.f32.mrf.mxu0
        %v1670 = vpop.f32.mrf.mxu0
        %v1671 = vadd.f32 %v776, %v1670
        %v1672 = vpop.f32.mrf.mxu0
        %1673 = vmatprep.mubr.bf16.mxu0 0
        %1674 = vmatmul.mubr.bf16.gmra.mxu0 %v1569
        %v1675 = vpop.f32.mrf.mxu0
        %v1676 = vadd.f32 %v777, %v1675
        %v1677 = vpop.f32.mrf.mxu0
        %v1678 = vpop.f32.mrf.mxu0
        %v1679 = vadd.f32 %v778, %v1678
        %v1680 = vpop.f32.mrf.mxu0
        %1681 = vmatprep.mubr.bf16.mxu0 0
        %1682 = vmatmul.mubr.bf16.gmra.mxu0 %v1572
        %v1683 = vpop.f32.mrf.mxu0
        %v1684 = vadd.f32 %v779, %v1683
        %v1685 = vpop.f32.mrf.mxu0
        %v1686 = vpop.f32.mrf.mxu0
        %v1687 = vadd.f32 %v780, %v1686
        %v1688 = vpop.f32.mrf.mxu0
        %1689 = vmatprep.mubr.bf16.mxu0 0
        %1690 = vmatmul.mubr.bf16.gmra.mxu0 %v1575
        %v1691 = vpop.f32.mrf.mxu0
        %v1692 = vadd.f32 %v781, %v1691
        %v1693 = vpop.f32.mrf.mxu0
        %v1694 = vpop.f32.mrf.mxu0
        %v1695 = vadd.f32 %v782, %v1694
        %v1696 = vpop.f32.mrf.mxu0
        %1697 = vdwg.mxu0
        %1698 = vmax.xlane.f32.xlu0 %v1636
        %v1699 = vpop.xlane.xlu0 %1698
        %1700 = vmax.xlane.f32.xlu0 %v1639
        %v1701 = vpop.xlane.xlu0 %1700
        %1702 = vmax.xlane.f32.xlu0 %v1644
        %v1703 = vpop.xlane.xlu0 %1702
        %1704 = vmax.xlane.f32.xlu0 %v1647
        %v1705 = vpop.xlane.xlu0 %1704
        %1706 = vmax.xlane.f32.xlu0 %v1652
        %v1707 = vpop.xlane.xlu0 %1706
        %1708 = vmax.xlane.f32.xlu0 %v1655
        %v1709 = vpop.xlane.xlu0 %1708
        %1710 = vmax.xlane.f32.xlu0 %v1660
        %v1711 = vpop.xlane.xlu0 %1710
        %1712 = vmax.xlane.f32.xlu0 %v1663
        %v1713 = vpop.xlane.xlu0 %1712
        %1714 = vmax.xlane.f32.xlu0 %v1668
        %v1715 = vpop.xlane.xlu0 %1714
        %1716 = vmax.xlane.f32.xlu0 %v1671
        %v1717 = vpop.xlane.xlu0 %1716
        %1718 = vmax.xlane.f32.xlu0 %v1676
        %v1719 = vpop.xlane.xlu0 %1718
        %1720 = vmax.xlane.f32.xlu0 %v1679
        %v1721 = vpop.xlane.xlu0 %1720
        %1722 = vmax.xlane.f32.xlu0 %v1684
        %v1723 = vpop.xlane.xlu0 %1722
        %1724 = vmax.xlane.f32.xlu0 %v1687
        %v1725 = vpop.xlane.xlu0 %1724
        %1726 = vmax.xlane.f32.xlu0 %v1692
        %v1727 = vpop.xlane.xlu0 %1726
        %1728 = vmax.xlane.f32.xlu0 %v1695
        %v1729 = vpop.xlane.xlu0 %1728
        %v1730 = vsub.f32 %v1636, %v1699
        %v1731 = vsub.f32 %v1639, %v1701
        %v1732 = vsub.f32 %v1644, %v1703
        %v1733 = vsub.f32 %v1647, %v1705
        %v1734 = vsub.f32 %v1652, %v1707
        %v1735 = vsub.f32 %v1655, %v1709
        %v1736 = vsub.f32 %v1660, %v1711
        %v1737 = vsub.f32 %v1663, %v1713
        %v1738 = vsub.f32 %v1668, %v1715
        %v1739 = vsub.f32 %v1671, %v1717
        %v1740 = vsub.f32 %v1676, %v1719
        %v1741 = vsub.f32 %v1679, %v1721
        %v1742 = vsub.f32 %v1684, %v1723
        %v1743 = vsub.f32 %v1687, %v1725
        %v1744 = vsub.f32 %v1692, %v1727
        %v1745 = vsub.f32 %v1695, %v1729
        %v1746 = vpack.c.bf16 %v1731, %v1730
        %v1747 = vpack.c.bf16 %v1733, %v1732
        %v1748 = vpack.c.bf16 %v1735, %v1734
        %v1749 = vpack.c.bf16 %v1737, %v1736
        %v1750 = vpack.c.bf16 %v1739, %v1738
        %v1751 = vpack.c.bf16 %v1741, %v1740
        %v1752 = vpack.c.bf16 %v1743, %v1742
        %v1753 = vpack.c.bf16 %v1745, %v1744
        %v1755 = vmul.bf16 %v1746, 1069105081
        %v1756 = vpow.bf16.pop %v1755
        %v1758 = vmul.bf16 %v1747, 1069105081
        %v1759 = vpow.bf16.pop %v1758
        %v1761 = vmul.bf16 %v1748, 1069105081
        %v1762 = vpow.bf16.pop %v1761
        %v1764 = vmul.bf16 %v1749, 1069105081
        %v1765 = vpow.bf16.pop %v1764
        %v1767 = vmul.bf16 %v1750, 1069105081
        %v1768 = vpow.bf16.pop %v1767
        %v1770 = vmul.bf16 %v1751, 1069105081
        %v1771 = vpow.bf16.pop %v1770
        %v1773 = vmul.bf16 %v1752, 1069105081
        %v1774 = vpow.bf16.pop %v1773
        %v1776 = vmul.bf16 %v1753, 1069105081
        %v1777 = vpow.bf16.pop %v1776
        %v1778 = vunpack.c.l.bf16 %v1756
        %v1779 = vunpack.c.h.bf16 %v1756
        %v1780 = vunpack.c.l.bf16 %v1759
        %v1781 = vunpack.c.h.bf16 %v1759
        %v1782 = vunpack.c.l.bf16 %v1762
        %v1783 = vunpack.c.h.bf16 %v1762
        %v1784 = vunpack.c.l.bf16 %v1765
        %v1785 = vunpack.c.h.bf16 %v1765
        %v1786 = vunpack.c.l.bf16 %v1768
        %v1787 = vunpack.c.h.bf16 %v1768
        %v1788 = vunpack.c.l.bf16 %v1771
        %v1789 = vunpack.c.h.bf16 %v1771
        %v1790 = vunpack.c.l.bf16 %v1774
        %v1791 = vunpack.c.h.bf16 %v1774
        %v1792 = vunpack.c.l.bf16 %v1777
        %v1793 = vunpack.c.h.bf16 %v1777
        %1794 = vadd.xlane.f32.xlu0 %v1778
        %v1795 = vpop.xlane.xlu0 %1794
        %1796 = vadd.xlane.f32.xlu0 %v1779
        %v1797 = vpop.xlane.xlu0 %1796
        %1798 = vadd.xlane.f32.xlu0 %v1780
        %v1799 = vpop.xlane.xlu0 %1798
        %1800 = vadd.xlane.f32.xlu0 %v1781
        %v1801 = vpop.xlane.xlu0 %1800
        %1802 = vadd.xlane.f32.xlu0 %v1782
        %v1803 = vpop.xlane.xlu0 %1802
        %1804 = vadd.xlane.f32.xlu0 %v1783
        %v1805 = vpop.xlane.xlu0 %1804
        %1806 = vadd.xlane.f32.xlu0 %v1784
        %v1807 = vpop.xlane.xlu0 %1806
        %1808 = vadd.xlane.f32.xlu0 %v1785
        %v1809 = vpop.xlane.xlu0 %1808
        %1810 = vadd.xlane.f32.xlu0 %v1786
        %v1811 = vpop.xlane.xlu0 %1810
        %1812 = vadd.xlane.f32.xlu0 %v1787
        %v1813 = vpop.xlane.xlu0 %1812
        %1814 = vadd.xlane.f32.xlu0 %v1788
        %v1815 = vpop.xlane.xlu0 %1814
        %1816 = vadd.xlane.f32.xlu0 %v1789
        %v1817 = vpop.xlane.xlu0 %1816
        %1818 = vadd.xlane.f32.xlu0 %v1790
        %v1819 = vpop.xlane.xlu0 %1818
        %1820 = vadd.xlane.f32.xlu0 %v1791
        %v1821 = vpop.xlane.xlu0 %1820
        %1822 = vadd.xlane.f32.xlu0 %v1792
        %v1823 = vpop.xlane.xlu0 %1822
        %1824 = vadd.xlane.f32.xlu0 %v1793
        %v1825 = vpop.xlane.xlu0 %1824
        %v1826 = vrcp.pop %v1795
        %v1827 = vrcp.pop %v1797
        %v1828 = vrcp.pop %v1799
        %v1829 = vrcp.pop %v1801
        %v1830 = vrcp.pop %v1803
        %v1831 = vrcp.pop %v1805
        %v1832 = vrcp.pop %v1807
        %v1833 = vrcp.pop %v1809
        %v1834 = vrcp.pop %v1811
        %v1835 = vrcp.pop %v1813
        %v1836 = vrcp.pop %v1815
        %v1837 = vrcp.pop %v1817
        %v1838 = vrcp.pop %v1819
        %v1839 = vrcp.pop %v1821
        %v1840 = vrcp.pop %v1823
        %v1841 = vrcp.pop %v1825
        %v1842 = vpack.c.bf16 %v1827, %v1826
        %v1843 = vpack.c.bf16 %v1829, %v1828
        %v1844 = vpack.c.bf16 %v1831, %v1830
        %v1845 = vpack.c.bf16 %v1833, %v1832
        %v1846 = vpack.c.bf16 %v1835, %v1834
        %v1847 = vpack.c.bf16 %v1837, %v1836
        %v1848 = vpack.c.bf16 %v1839, %v1838
        %v1849 = vpack.c.bf16 %v1841, %v1840
        %v1850 = vmul.bf16 %v1756, %v1842
        %v1851 = vmul.bf16 %v1759, %v1843
        %v1852 = vmul.bf16 %v1762, %v1844
        %v1853 = vmul.bf16 %v1765, %v1845
        %v1854 = vmul.bf16 %v1768, %v1846
        %v1855 = vmul.bf16 %v1771, %v1847
        %v1856 = vmul.bf16 %v1774, %v1848
        %v1857 = vmul.bf16 %v1777, %v1849
        %v1858 = vunpack.c.l.bf16 %v1850
        %v1859 = vunpack.c.h.bf16 %v1850
        %v1860 = vunpack.c.l.bf16 %v1851
        %v1861 = vunpack.c.h.bf16 %v1851
        %v1862 = vunpack.c.l.bf16 %v1852
        %v1863 = vunpack.c.h.bf16 %v1852
        %v1864 = vunpack.c.l.bf16 %v1853
        %v1865 = vunpack.c.h.bf16 %v1853
        %v1866 = vunpack.c.l.bf16 %v1854
        %v1867 = vunpack.c.h.bf16 %v1854
        %v1868 = vunpack.c.l.bf16 %v1855
        %v1869 = vunpack.c.h.bf16 %v1855
        %v1870 = vunpack.c.l.bf16 %v1856
        %v1871 = vunpack.c.h.bf16 %v1856
        %v1872 = vunpack.c.l.bf16 %v1857
        %v1873 = vunpack.c.h.bf16 %v1857
        %v1874 = vadd.f32 %v1505, %v1858
        %v1875 = vadd.f32 %v1506, %v1859
        %v1876 = vadd.f32 %v1507, %v1860
        %v1877 = vadd.f32 %v1508, %v1861
        %v1878 = vadd.f32 %v1509, %v1862
        %v1879 = vadd.f32 %v1510, %v1863
        %v1880 = vadd.f32 %v1511, %v1864
        %v1881 = vadd.f32 %v1512, %v1865
        %v1882 = vadd.f32 %v1513, %v1866
        %v1883 = vadd.f32 %v1514, %v1867
        %v1884 = vadd.f32 %v1515, %v1868
        %v1885 = vadd.f32 %v1516, %v1869
        %v1886 = vadd.f32 %v1517, %v1870
        %v1887 = vadd.f32 %v1518, %v1871
        %v1888 = vadd.f32 %v1519, %v1872
        %v1889 = vadd.f32 %v1520, %v1873
        %1890 = vrot.lane.b32.xlu0 %v783, 32
        %v1891 = vpop.permute.xlu0 %1890
        %1892 = vrot.lane.b32.xlu0 %v784, 32
        %v1893 = vpop.permute.xlu0 %1892
        %1894 = vrot.lane.b32.xlu0 %v785, 32
        %v1895 = vpop.permute.xlu0 %1894
        %1896 = vrot.lane.b32.xlu0 %v786, 32
        %v1897 = vpop.permute.xlu0 %1896
        %1898 = vrot.lane.b32.xlu0 %v787, 32
        %v1899 = vpop.permute.xlu0 %1898
        %1900 = vrot.lane.b32.xlu0 %v788, 32
        %v1901 = vpop.permute.xlu0 %1900
        %1902 = vrot.lane.b32.xlu0 %v789, 32
        %v1903 = vpop.permute.xlu0 %1902
        %1904 = vrot.lane.b32.xlu0 %v790, 32
        %v1905 = vpop.permute.xlu0 %1904
        %1906 = vrot.lane.b32.xlu0 %v791, 32
        %v1907 = vpop.permute.xlu0 %1906
        %1908 = vrot.lane.b32.xlu0 %v792, 32
        %v1909 = vpop.permute.xlu0 %1908
        %1910 = vrot.lane.b32.xlu0 %v793, 32
        %v1911 = vpop.permute.xlu0 %1910
        %1912 = vrot.lane.b32.xlu0 %v794, 32
        %v1913 = vpop.permute.xlu0 %1912
        %1914 = vrot.lane.b32.xlu0 %v795, 32
        %v1915 = vpop.permute.xlu0 %1914
        %1916 = vrot.lane.b32.xlu0 %v796, 32
        %v1917 = vpop.permute.xlu0 %1916
        %1918 = vrot.lane.b32.xlu0 %v797, 32
        %v1919 = vpop.permute.xlu0 %1918
        %1920 = vrot.lane.b32.xlu0 %v798, 32
        %v1921 = vpop.permute.xlu0 %1920
        %v1923 = vsel %vm350, %v1891, 0
        %v1926 = vsel %vm350, %v1893, 0
        %v1929 = vsel %vm350, %v1895, 0
        %v1932 = vsel %vm350, %v1897, 0
        %v1935 = vsel %vm350, %v1899, 0
        %v1938 = vsel %vm350, %v1901, 0
        %v1941 = vsel %vm350, %v1903, 0
        %v1944 = vsel %vm350, %v1905, 0
        %v1947 = vsel %vm350, %v1907, 0
        %v1950 = vsel %vm350, %v1909, 0
        %v1953 = vsel %vm350, %v1911, 0
        %v1956 = vsel %vm350, %v1913, 0
        %v1959 = vsel %vm350, %v1915, 0
        %v1962 = vsel %vm350, %v1917, 0
        %v1965 = vsel %vm350, %v1919, 0
        %v1968 = vsel %vm350, %v1921, 0
        %1970 = vmatprep.subr.bf16.mxu0 0
        %1971 = vmatpush1.bf16.xpose.msra.mxu0 %v1968
        %1972 = vmatprep.subr.bf16.mxu0 0
        %1973 = vmatpush1.bf16.xpose.msra.mxu0 %v1965
        %1974 = vmatprep.subr.bf16.mxu0 0
        %1975 = vmatpush1.bf16.xpose.msra.mxu0 %v1962
        %1976 = vmatprep.subr.bf16.mxu0 0
        %1977 = vmatpush1.bf16.xpose.msra.mxu0 %v1959
        %1978 = vmatprep.subr.bf16.mxu0 0
        %1979 = vmatpush1.bf16.xpose.msra.mxu0 %v1956
        %1980 = vmatprep.subr.bf16.mxu0 0
        %1981 = vmatpush1.bf16.xpose.msra.mxu0 %v1953
        %1982 = vmatprep.subr.bf16.mxu0 0
        %1983 = vmatpush1.bf16.xpose.msra.mxu0 %v1950
        %1984 = vmatprep.subr.bf16.mxu0 0
        %1985 = vmatpush1.bf16.xpose.msra.mxu0 %v1947
        %1986 = vmatprep.subr.bf16.mxu0 0
        %1987 = vmatpush2.bf16.xpose.msra.mxu0 0
        %1988 = vmatprep.subr.bf16.mxu0 0
        %1989 = vmatpush2.bf16.xpose.msra.mxu0 0
        %1990 = vmatprep.subr.bf16.mxu0 0
        %1991 = vmatpush2.bf16.xpose.msra.mxu0 0
        %1992 = vmatprep.subr.bf16.mxu0 0
        %1993 = vmatpush2.bf16.xpose.msra.mxu0 0
        %1994 = vmatprep.subr.bf16.mxu0 0
        %1995 = vmatpush2.bf16.xpose.msra.mxu0 0
        %1996 = vmatprep.subr.bf16.mxu0 0
        %1997 = vmatpush2.bf16.xpose.msra.mxu0 0
        %1998 = vmatprep.subr.bf16.mxu0 0
        %1999 = vmatpush2.bf16.xpose.msra.mxu0 0
        %2000 = vmatprep.subr.bf16.mxu0 0
        %2001 = vmatpush2.bf16.xpose.msra.mxu0 0
        %2002 = vmatprep.mubr.bf16.mxu0 0
        %2003 = vmatmul.mubr.bf16.gmra.mxu0 %v1923
        %v2004 = vpop.f32.mrf.mxu0
        %v2005 = vadd.f32 %v767, %v2004
        %v2006 = vpop.f32.mrf.mxu0
        %v2007 = vpop.f32.mrf.mxu0
        %v2008 = vadd.f32 %v768, %v2007
        %v2009 = vpop.f32.mrf.mxu0
        %2010 = vmatprep.mubr.bf16.mxu0 0
        %2011 = vmatmul.mubr.bf16.gmra.mxu0 %v1926
        %v2012 = vpop.f32.mrf.mxu0
        %v2013 = vadd.f32 %v769, %v2012
        %v2014 = vpop.f32.mrf.mxu0
        %v2015 = vpop.f32.mrf.mxu0
        %v2016 = vadd.f32 %v770, %v2015
        %v2017 = vpop.f32.mrf.mxu0
        %2018 = vmatprep.mubr.bf16.mxu0 0
        %2019 = vmatmul.mubr.bf16.gmra.mxu0 %v1929
        %v2020 = vpop.f32.mrf.mxu0
        %v2021 = vadd.f32 %v771, %v2020
        %v2022 = vpop.f32.mrf.mxu0
        %v2023 = vpop.f32.mrf.mxu0
        %v2024 = vadd.f32 %v772, %v2023
        %v2025 = vpop.f32.mrf.mxu0
        %2026 = vmatprep.mubr.bf16.mxu0 0
        %2027 = vmatmul.mubr.bf16.gmra.mxu0 %v1932
        %v2028 = vpop.f32.mrf.mxu0
        %v2029 = vadd.f32 %v773, %v2028
        %v2030 = vpop.f32.mrf.mxu0
        %v2031 = vpop.f32.mrf.mxu0
        %v2032 = vadd.f32 %v774, %v2031
        %v2033 = vpop.f32.mrf.mxu0
        %2034 = vmatprep.mubr.bf16.mxu0 0
        %2035 = vmatmul.mubr.bf16.gmra.mxu0 %v1935
        %v2036 = vpop.f32.mrf.mxu0
        %v2037 = vadd.f32 %v775, %v2036
        %v2038 = vpop.f32.mrf.mxu0
        %v2039 = vpop.f32.mrf.mxu0
        %v2040 = vadd.f32 %v776, %v2039
        %v2041 = vpop.f32.mrf.mxu0
        %2042 = vmatprep.mubr.bf16.mxu0 0
        %2043 = vmatmul.mubr.bf16.gmra.mxu0 %v1938
        %v2044 = vpop.f32.mrf.mxu0
        %v2045 = vadd.f32 %v777, %v2044
        %v2046 = vpop.f32.mrf.mxu0
        %v2047 = vpop.f32.mrf.mxu0
        %v2048 = vadd.f32 %v778, %v2047
        %v2049 = vpop.f32.mrf.mxu0
        %2050 = vmatprep.mubr.bf16.mxu0 0
        %2051 = vmatmul.mubr.bf16.gmra.mxu0 %v1941
        %v2052 = vpop.f32.mrf.mxu0
        %v2053 = vadd.f32 %v779, %v2052
        %v2054 = vpop.f32.mrf.mxu0
        %v2055 = vpop.f32.mrf.mxu0
        %v2056 = vadd.f32 %v780, %v2055
        %v2057 = vpop.f32.mrf.mxu0
        %2058 = vmatprep.mubr.bf16.mxu0 0
        %2059 = vmatmul.mubr.bf16.gmra.mxu0 %v1944
        %v2060 = vpop.f32.mrf.mxu0
        %v2061 = vadd.f32 %v781, %v2060
        %v2062 = vpop.f32.mrf.mxu0
        %v2063 = vpop.f32.mrf.mxu0
        %v2064 = vadd.f32 %v782, %v2063
        %v2065 = vpop.f32.mrf.mxu0
        %2066 = vdwg.mxu0
        %2067 = vmax.xlane.f32.xlu0 %v2005
        %v2068 = vpop.xlane.xlu0 %2067
        %2069 = vmax.xlane.f32.xlu0 %v2008
        %v2070 = vpop.xlane.xlu0 %2069
        %2071 = vmax.xlane.f32.xlu0 %v2013
        %v2072 = vpop.xlane.xlu0 %2071
        %2073 = vmax.xlane.f32.xlu0 %v2016
        %v2074 = vpop.xlane.xlu0 %2073
        %2075 = vmax.xlane.f32.xlu0 %v2021
        %v2076 = vpop.xlane.xlu0 %2075
        %2077 = vmax.xlane.f32.xlu0 %v2024
        %v2078 = vpop.xlane.xlu0 %2077
        %2079 = vmax.xlane.f32.xlu0 %v2029
        %v2080 = vpop.xlane.xlu0 %2079
        %2081 = vmax.xlane.f32.xlu0 %v2032
        %v2082 = vpop.xlane.xlu0 %2081
        %2083 = vmax.xlane.f32.xlu0 %v2037
        %v2084 = vpop.xlane.xlu0 %2083
        %2085 = vmax.xlane.f32.xlu0 %v2040
        %v2086 = vpop.xlane.xlu0 %2085
        %2087 = vmax.xlane.f32.xlu0 %v2045
        %v2088 = vpop.xlane.xlu0 %2087
        %2089 = vmax.xlane.f32.xlu0 %v2048
        %v2090 = vpop.xlane.xlu0 %2089
        %2091 = vmax.xlane.f32.xlu0 %v2053
        %v2092 = vpop.xlane.xlu0 %2091
        %2093 = vmax.xlane.f32.xlu0 %v2056
        %v2094 = vpop.xlane.xlu0 %2093
        %2095 = vmax.xlane.f32.xlu0 %v2061
        %v2096 = vpop.xlane.xlu0 %2095
        %2097 = vmax.xlane.f32.xlu0 %v2064
        %v2098 = vpop.xlane.xlu0 %2097
        %v2099 = vsub.f32 %v2005, %v2068
        %v2100 = vsub.f32 %v2008, %v2070
        %v2101 = vsub.f32 %v2013, %v2072
        %v2102 = vsub.f32 %v2016, %v2074
        %v2103 = vsub.f32 %v2021, %v2076
        %v2104 = vsub.f32 %v2024, %v2078
        %v2105 = vsub.f32 %v2029, %v2080
        %v2106 = vsub.f32 %v2032, %v2082
        %v2107 = vsub.f32 %v2037, %v2084
        %v2108 = vsub.f32 %v2040, %v2086
        %v2109 = vsub.f32 %v2045, %v2088
        %v2110 = vsub.f32 %v2048, %v2090
        %v2111 = vsub.f32 %v2053, %v2092
        %v2112 = vsub.f32 %v2056, %v2094
        %v2113 = vsub.f32 %v2061, %v2096
        %v2114 = vsub.f32 %v2064, %v2098
        %v2115 = vpack.c.bf16 %v2100, %v2099
        %v2116 = vpack.c.bf16 %v2102, %v2101
        %v2117 = vpack.c.bf16 %v2104, %v2103
        %v2118 = vpack.c.bf16 %v2106, %v2105
        %v2119 = vpack.c.bf16 %v2108, %v2107
        %v2120 = vpack.c.bf16 %v2110, %v2109
        %v2121 = vpack.c.bf16 %v2112, %v2111
        %v2122 = vpack.c.bf16 %v2114, %v2113
        %v2124 = vmul.bf16 %v2115, 1069105081
        %v2125 = vpow.bf16.pop %v2124
        %v2127 = vmul.bf16 %v2116, 1069105081
        %v2128 = vpow.bf16.pop %v2127
        %v2130 = vmul.bf16 %v2117, 1069105081
        %v2131 = vpow.bf16.pop %v2130
        %v2133 = vmul.bf16 %v2118, 1069105081
        %v2134 = vpow.bf16.pop %v2133
        %v2136 = vmul.bf16 %v2119, 1069105081
        %v2137 = vpow.bf16.pop %v2136
        %v2139 = vmul.bf16 %v2120, 1069105081
        %v2140 = vpow.bf16.pop %v2139
        %v2142 = vmul.bf16 %v2121, 1069105081
        %v2143 = vpow.bf16.pop %v2142
        %v2145 = vmul.bf16 %v2122, 1069105081
        %v2146 = vpow.bf16.pop %v2145
        %v2147 = vunpack.c.l.bf16 %v2125
        %v2148 = vunpack.c.h.bf16 %v2125
        %v2149 = vunpack.c.l.bf16 %v2128
        %v2150 = vunpack.c.h.bf16 %v2128
        %v2151 = vunpack.c.l.bf16 %v2131
        %v2152 = vunpack.c.h.bf16 %v2131
        %v2153 = vunpack.c.l.bf16 %v2134
        %v2154 = vunpack.c.h.bf16 %v2134
        %v2155 = vunpack.c.l.bf16 %v2137
        %v2156 = vunpack.c.h.bf16 %v2137
        %v2157 = vunpack.c.l.bf16 %v2140
        %v2158 = vunpack.c.h.bf16 %v2140
        %v2159 = vunpack.c.l.bf16 %v2143
        %v2160 = vunpack.c.h.bf16 %v2143
        %v2161 = vunpack.c.l.bf16 %v2146
        %v2162 = vunpack.c.h.bf16 %v2146
        %2163 = vadd.xlane.f32.xlu0 %v2147
        %v2164 = vpop.xlane.xlu0 %2163
        %2165 = vadd.xlane.f32.xlu0 %v2148
        %v2166 = vpop.xlane.xlu0 %2165
        %2167 = vadd.xlane.f32.xlu0 %v2149
        %v2168 = vpop.xlane.xlu0 %2167
        %2169 = vadd.xlane.f32.xlu0 %v2150
        %v2170 = vpop.xlane.xlu0 %2169
        %2171 = vadd.xlane.f32.xlu0 %v2151
        %v2172 = vpop.xlane.xlu0 %2171
        %2173 = vadd.xlane.f32.xlu0 %v2152
        %v2174 = vpop.xlane.xlu0 %2173
        %2175 = vadd.xlane.f32.xlu0 %v2153
        %v2176 = vpop.xlane.xlu0 %2175
        %2177 = vadd.xlane.f32.xlu0 %v2154
        %v2178 = vpop.xlane.xlu0 %2177
        %2179 = vadd.xlane.f32.xlu0 %v2155
        %v2180 = vpop.xlane.xlu0 %2179
        %2181 = vadd.xlane.f32.xlu0 %v2156
        %v2182 = vpop.xlane.xlu0 %2181
        %2183 = vadd.xlane.f32.xlu0 %v2157
        %v2184 = vpop.xlane.xlu0 %2183
        %2185 = vadd.xlane.f32.xlu0 %v2158
        %v2186 = vpop.xlane.xlu0 %2185
        %2187 = vadd.xlane.f32.xlu0 %v2159
        %v2188 = vpop.xlane.xlu0 %2187
        %2189 = vadd.xlane.f32.xlu0 %v2160
        %v2190 = vpop.xlane.xlu0 %2189
        %2191 = vadd.xlane.f32.xlu0 %v2161
        %v2192 = vpop.xlane.xlu0 %2191
        %2193 = vadd.xlane.f32.xlu0 %v2162
        %v2194 = vpop.xlane.xlu0 %2193
        %v2195 = vrcp.pop %v2164
        %v2196 = vrcp.pop %v2166
        %v2197 = vrcp.pop %v2168
        %v2198 = vrcp.pop %v2170
        %v2199 = vrcp.pop %v2172
        %v2200 = vrcp.pop %v2174
        %v2201 = vrcp.pop %v2176
        %v2202 = vrcp.pop %v2178
        %v2203 = vrcp.pop %v2180
        %v2204 = vrcp.pop %v2182
        %v2205 = vrcp.pop %v2184
        %v2206 = vrcp.pop %v2186
        %v2207 = vrcp.pop %v2188
        %v2208 = vrcp.pop %v2190
        %v2209 = vrcp.pop %v2192
        %v2210 = vrcp.pop %v2194
        %v2211 = vpack.c.bf16 %v2196, %v2195
        %v2212 = vpack.c.bf16 %v2198, %v2197
        %v2213 = vpack.c.bf16 %v2200, %v2199
        %v2214 = vpack.c.bf16 %v2202, %v2201
        %v2215 = vpack.c.bf16 %v2204, %v2203
        %v2216 = vpack.c.bf16 %v2206, %v2205
        %v2217 = vpack.c.bf16 %v2208, %v2207
        %v2218 = vpack.c.bf16 %v2210, %v2209
        %v2219 = vmul.bf16 %v2125, %v2211
        %v2220 = vmul.bf16 %v2128, %v2212
        %v2221 = vmul.bf16 %v2131, %v2213
        %v2222 = vmul.bf16 %v2134, %v2214
        %v2223 = vmul.bf16 %v2137, %v2215
        %v2224 = vmul.bf16 %v2140, %v2216
        %v2225 = vmul.bf16 %v2143, %v2217
        %v2226 = vmul.bf16 %v2146, %v2218
        %v2227 = vunpack.c.l.bf16 %v2219
        %v2228 = vunpack.c.h.bf16 %v2219
        %v2229 = vunpack.c.l.bf16 %v2220
        %v2230 = vunpack.c.h.bf16 %v2220
        %v2231 = vunpack.c.l.bf16 %v2221
        %v2232 = vunpack.c.h.bf16 %v2221
        %v2233 = vunpack.c.l.bf16 %v2222
        %v2234 = vunpack.c.h.bf16 %v2222
        %v2235 = vunpack.c.l.bf16 %v2223
        %v2236 = vunpack.c.h.bf16 %v2223
        %v2237 = vunpack.c.l.bf16 %v2224
        %v2238 = vunpack.c.h.bf16 %v2224
        %v2239 = vunpack.c.l.bf16 %v2225
        %v2240 = vunpack.c.h.bf16 %v2225
        %v2241 = vunpack.c.l.bf16 %v2226
        %v2242 = vunpack.c.h.bf16 %v2226
        %v2243 = vadd.f32 %v1874, %v2227
        %v2244 = vadd.f32 %v1875, %v2228
        %v2245 = vadd.f32 %v1876, %v2229
        %v2246 = vadd.f32 %v1877, %v2230
        %v2247 = vadd.f32 %v1878, %v2231
        %v2248 = vadd.f32 %v1879, %v2232
        %v2249 = vadd.f32 %v1880, %v2233
        %v2250 = vadd.f32 %v1881, %v2234
        %v2251 = vadd.f32 %v1882, %v2235
        %v2252 = vadd.f32 %v1883, %v2236
        %v2253 = vadd.f32 %v1884, %v2237
        %v2254 = vadd.f32 %v1885, %v2238
        %v2255 = vadd.f32 %v1886, %v2239
        %v2256 = vadd.f32 %v1887, %v2240
        %v2257 = vadd.f32 %v1888, %v2241
        %v2258 = vadd.f32 %v1889, %v2242
        %v2259 = vpack.c.bf16 %v2244, %v2243
        %v2260 = vpack.c.bf16 %v2246, %v2245
        %v2261 = vpack.c.bf16 %v2248, %v2247
        %v2262 = vpack.c.bf16 %v2250, %v2249
        %v2263 = vpack.c.bf16 %v2252, %v2251
        %v2264 = vpack.c.bf16 %v2254, %v2253
        %v2265 = vpack.c.bf16 %v2256, %v2255
        %v2266 = vpack.c.bf16 %v2258, %v2257
        %v2267 = vld [vmem:[%s272] sm:$0xff]
        %v2268 = vld [vmem:[%s272 + $0x8] sm:$0xff]
        %v2269 = vld [vmem:[%s272 + $0x10] sm:$0xff]
        %v2270 = vld [vmem:[%s272 + $0x18] sm:$0xff]
        %v2271 = vld [vmem:[%s272 + $0x20] sm:$0xff]
        %v2272 = vld [vmem:[%s272 + $0x28] sm:$0xff]
        %v2273 = vld [vmem:[%s272 + $0x30] sm:$0xff]
        %v2274 = vld [vmem:[%s272 + $0x38] sm:$0xff]
        %v2275 = vld [vmem:[%s272 + $0x40] sm:$0xff]
        %v2276 = vld [vmem:[%s272 + $0x48] sm:$0xff]
        %v2277 = vld [vmem:[%s272 + $0x50] sm:$0xff]
        %v2278 = vld [vmem:[%s272 + $0x58] sm:$0xff]
        %v2279 = vld [vmem:[%s272 + $0x60] sm:$0xff]
        %v2280 = vld [vmem:[%s272 + $0x68] sm:$0xff]
        %v2281 = vld [vmem:[%s272 + $0x70] sm:$0xff]
        %v2282 = vld [vmem:[%s272 + $0x78] sm:$0xff]
        %2284 = vset.pattern.permute.xlu0 0
        %2285 = vperm.xlu0 %2284, %v2267
        %v2286 = vpop.permute.xlu0 %2285
        %2289 = vset.pattern.permute.xlu0 0
        %2290 = vperm.xlu0 %2289, %v2268
        %v2291 = vpop.permute.xlu0 %2290
        %2294 = vset.pattern.permute.xlu0 0
        %2295 = vperm.xlu0 %2294, %v2269
        %v2296 = vpop.permute.xlu0 %2295
        %2299 = vset.pattern.permute.xlu0 0
        %2300 = vperm.xlu0 %2299, %v2270
        %v2301 = vpop.permute.xlu0 %2300
        %2304 = vset.pattern.permute.xlu0 0
        %2305 = vperm.xlu0 %2304, %v2271
        %v2306 = vpop.permute.xlu0 %2305
        %2309 = vset.pattern.permute.xlu0 0
        %2310 = vperm.xlu0 %2309, %v2272
        %v2311 = vpop.permute.xlu0 %2310
        %2314 = vset.pattern.permute.xlu0 0
        %2315 = vperm.xlu0 %2314, %v2273
        %v2316 = vpop.permute.xlu0 %2315
        %2319 = vset.pattern.permute.xlu0 0
        %2320 = vperm.xlu0 %2319, %v2274
        %v2321 = vpop.permute.xlu0 %2320
        %2324 = vset.pattern.permute.xlu0 0
        %2325 = vperm.xlu0 %2324, %v2275
        %v2326 = vpop.permute.xlu0 %2325
        %2329 = vset.pattern.permute.xlu0 0
        %2330 = vperm.xlu0 %2329, %v2276
        %v2331 = vpop.permute.xlu0 %2330
        %2334 = vset.pattern.permute.xlu0 0
        %2335 = vperm.xlu0 %2334, %v2277
        %v2336 = vpop.permute.xlu0 %2335
        %2339 = vset.pattern.permute.xlu0 0
        %2340 = vperm.xlu0 %2339, %v2278
        %v2341 = vpop.permute.xlu0 %2340
        %2344 = vset.pattern.permute.xlu0 0
        %2345 = vperm.xlu0 %2344, %v2279
        %v2346 = vpop.permute.xlu0 %2345
        %2349 = vset.pattern.permute.xlu0 0
        %2350 = vperm.xlu0 %2349, %v2280
        %v2351 = vpop.permute.xlu0 %2350
        %2354 = vset.pattern.permute.xlu0 0
        %2355 = vperm.xlu0 %2354, %v2281
        %v2356 = vpop.permute.xlu0 %2355
        %2359 = vset.pattern.permute.xlu0 0
        %2360 = vperm.xlu0 %2359, %v2282
        %v2361 = vpop.permute.xlu0 %2360
        %v2363 = vmul.f32 %v665, %v2286
        %v2364 = vmul.f32 %v666, %v2291
        %v2365 = vmul.f32 %v667, %v2296
        %v2366 = vmul.f32 %v668, %v2301
        %v2367 = vmul.f32 %v669, %v2306
        %v2368 = vmul.f32 %v670, %v2311
        %v2369 = vmul.f32 %v671, %v2316
        %v2370 = vmul.f32 %v672, %v2321
        %v2371 = vmul.f32 %v673, %v2326
        %v2372 = vmul.f32 %v674, %v2331
        %v2373 = vmul.f32 %v675, %v2336
        %v2374 = vmul.f32 %v676, %v2341
        %v2375 = vmul.f32 %v677, %v2346
        %v2376 = vmul.f32 %v678, %v2351
        %v2377 = vmul.f32 %v679, %v2356
        %v2378 = vmul.f32 %v680, %v2361
        %v2379 = vpack.c.bf16 %v2364, %v2363
        %v2380 = vpack.c.bf16 %v2366, %v2365
        %v2381 = vpack.c.bf16 %v2368, %v2367
        %v2382 = vpack.c.bf16 %v2370, %v2369
        %v2383 = vpack.c.bf16 %v2372, %v2371
        %v2384 = vpack.c.bf16 %v2374, %v2373
        %v2385 = vpack.c.bf16 %v2376, %v2375
        %v2386 = vpack.c.bf16 %v2378, %v2377
        %v2387 = vpack.c.bf16 %v2291, %v2286
        %v2388 = vpack.c.bf16 %v2301, %v2296
        %v2389 = vpack.c.bf16 %v2311, %v2306
        %v2390 = vpack.c.bf16 %v2321, %v2316
        %v2391 = vpack.c.bf16 %v2331, %v2326
        %v2392 = vpack.c.bf16 %v2341, %v2336
        %v2393 = vpack.c.bf16 %v2351, %v2346
        %v2394 = vpack.c.bf16 %v2361, %v2356
        %2395 = vmatprep.subr.bf16.mxu0 %v2394
        %2396 = vmatpush1.bf16.msra.mxu0 %v2386
        %2397 = vmatprep.subr.bf16.mxu0 %v2393
        %2398 = vmatpush1.bf16.msra.mxu0 %v2385
        %2399 = vmatprep.subr.bf16.mxu0 %v2392
        %2400 = vmatpush1.bf16.msra.mxu0 %v2384
        %2401 = vmatprep.subr.bf16.mxu0 %v2391
        %2402 = vmatpush1.bf16.msra.mxu0 %v2383
        %2403 = vmatprep.subr.bf16.mxu0 %v2390
        %2404 = vmatpush1.bf16.msra.mxu0 %v2382
        %2405 = vmatprep.subr.bf16.mxu0 %v2389
        %2406 = vmatpush1.bf16.msra.mxu0 %v2381
        %2407 = vmatprep.subr.bf16.mxu0 %v2388
        %2408 = vmatpush1.bf16.msra.mxu0 %v2380
        %2409 = vmatprep.subr.bf16.mxu0 %v2387
        %2410 = vmatpush1.bf16.msra.mxu0 %v2379
        %2411 = vmatprep.subr.bf16.mxu0 0
        %2412 = vmatpush2.bf16.msra.mxu0 0
        %2413 = vmatprep.subr.bf16.mxu0 0
        %2414 = vmatpush2.bf16.msra.mxu0 0
        %2415 = vmatprep.subr.bf16.mxu0 0
        %2416 = vmatpush2.bf16.msra.mxu0 0
        %2417 = vmatprep.subr.bf16.mxu0 0
        %2418 = vmatpush2.bf16.msra.mxu0 0
        %2419 = vmatprep.subr.bf16.mxu0 0
        %2420 = vmatpush2.bf16.msra.mxu0 0
        %2421 = vmatprep.subr.bf16.mxu0 0
        %2422 = vmatpush2.bf16.msra.mxu0 0
        %2423 = vmatprep.subr.bf16.mxu0 0
        %2424 = vmatpush2.bf16.msra.mxu0 0
        %2425 = vmatprep.subr.bf16.mxu0 0
        %2426 = vmatpush2.bf16.msra.mxu0 0
        %2427 = vmatprep.mubr.bf16.mxu0 0
        %2428 = vmatmul.mubr.bf16.gmra.mxu0 %v2259
        %v2429 = vpop.f32.mrf.mxu0
        %v2430 = vadd.f32 0.0, %v2429
        %v2431 = vpop.f32.mrf.mxu0
        %v2432 = vadd.f32 0.0, %v2431
        %v2433 = vpop.f32.mrf.mxu0
        %v2434 = vadd.f32 0.0, %v2433
        %v2435 = vpop.f32.mrf.mxu0
        %v2436 = vadd.f32 0.0, %v2435
        %2437 = vmatprep.mubr.bf16.mxu0 0
        %2438 = vmatmul.mubr.bf16.gmra.mxu0 %v2260
        %v2439 = vpop.f32.mrf.mxu0
        %v2440 = vadd.f32 0.0, %v2439
        %v2441 = vpop.f32.mrf.mxu0
        %v2442 = vadd.f32 0.0, %v2441
        %v2443 = vpop.f32.mrf.mxu0
        %v2444 = vadd.f32 0.0, %v2443
        %v2445 = vpop.f32.mrf.mxu0
        %v2446 = vadd.f32 0.0, %v2445
        %2447 = vmatprep.mubr.bf16.mxu0 0
        %2448 = vmatmul.mubr.bf16.gmra.mxu0 %v2261
        %v2449 = vpop.f32.mrf.mxu0
        %v2450 = vadd.f32 0.0, %v2449
        %v2451 = vpop.f32.mrf.mxu0
        %v2452 = vadd.f32 0.0, %v2451
        %v2453 = vpop.f32.mrf.mxu0
        %v2454 = vadd.f32 0.0, %v2453
        %v2455 = vpop.f32.mrf.mxu0
        %v2456 = vadd.f32 0.0, %v2455
        %2457 = vmatprep.mubr.bf16.mxu0 0
        %2458 = vmatmul.mubr.bf16.gmra.mxu0 %v2262
        %v2459 = vpop.f32.mrf.mxu0
        %v2460 = vadd.f32 0.0, %v2459
        %v2461 = vpop.f32.mrf.mxu0
        %v2462 = vadd.f32 0.0, %v2461
        %v2463 = vpop.f32.mrf.mxu0
        %v2464 = vadd.f32 0.0, %v2463
        %v2465 = vpop.f32.mrf.mxu0
        %v2466 = vadd.f32 0.0, %v2465
        %2467 = vmatprep.mubr.bf16.mxu0 0
        %2468 = vmatmul.mubr.bf16.gmra.mxu0 %v2263
        %v2469 = vpop.f32.mrf.mxu0
        %v2470 = vadd.f32 0.0, %v2469
        %v2471 = vpop.f32.mrf.mxu0
        %v2472 = vadd.f32 0.0, %v2471
        %v2473 = vpop.f32.mrf.mxu0
        %v2474 = vadd.f32 0.0, %v2473
        %v2475 = vpop.f32.mrf.mxu0
        %v2476 = vadd.f32 0.0, %v2475
        %2477 = vmatprep.mubr.bf16.mxu0 0
        %2478 = vmatmul.mubr.bf16.gmra.mxu0 %v2264
        %v2479 = vpop.f32.mrf.mxu0
        %v2480 = vadd.f32 0.0, %v2479
        %v2481 = vpop.f32.mrf.mxu0
        %v2482 = vadd.f32 0.0, %v2481
        %v2483 = vpop.f32.mrf.mxu0
        %v2484 = vadd.f32 0.0, %v2483
        %v2485 = vpop.f32.mrf.mxu0
        %v2486 = vadd.f32 0.0, %v2485
        %2487 = vmatprep.mubr.bf16.mxu0 0
        %2488 = vmatmul.mubr.bf16.gmra.mxu0 %v2265
        %v2489 = vpop.f32.mrf.mxu0
        %v2490 = vadd.f32 0.0, %v2489
        %v2491 = vpop.f32.mrf.mxu0
        %v2492 = vadd.f32 0.0, %v2491
        %v2493 = vpop.f32.mrf.mxu0
        %v2494 = vadd.f32 0.0, %v2493
        %v2495 = vpop.f32.mrf.mxu0
        %v2496 = vadd.f32 0.0, %v2495
        %2497 = vmatprep.mubr.bf16.mxu0 0
        %2498 = vmatmul.mubr.bf16.gmra.mxu0 %v2266
        %v2499 = vpop.f32.mrf.mxu0
        %v2500 = vadd.f32 0.0, %v2499
        %v2501 = vpop.f32.mrf.mxu0
        %v2502 = vadd.f32 0.0, %v2501
        %v2503 = vpop.f32.mrf.mxu0
        %v2504 = vadd.f32 0.0, %v2503
        %v2505 = vpop.f32.mrf.mxu0
        %v2506 = vadd.f32 0.0, %v2505
        %2507 = vdwg.mxu0
        %v2508 = vrcp.pop %v2432
        %v2509 = vrcp.pop %v2436
        %v2510 = vrcp.pop %v2442
        %v2511 = vrcp.pop %v2446
        %v2512 = vrcp.pop %v2452
        %v2513 = vrcp.pop %v2456
        %v2514 = vrcp.pop %v2462
        %v2515 = vrcp.pop %v2466
        %v2516 = vrcp.pop %v2472
        %v2517 = vrcp.pop %v2476
        %v2518 = vrcp.pop %v2482
        %v2519 = vrcp.pop %v2486
        %v2520 = vrcp.pop %v2492
        %v2521 = vrcp.pop %v2496
        %v2522 = vrcp.pop %v2502
        %v2523 = vrcp.pop %v2506
        %2525 = vset.pattern.permute.xlu0 0
        %2526 = vperm.xlu0 %2525, %v2508
        %v2527 = vpop.permute.xlu0 %2526
        %2530 = vset.pattern.permute.xlu0 0
        %2531 = vperm.xlu0 %2530, %v2509
        %v2532 = vpop.permute.xlu0 %2531
        %2535 = vset.pattern.permute.xlu0 0
        %2536 = vperm.xlu0 %2535, %v2510
        %v2537 = vpop.permute.xlu0 %2536
        %2540 = vset.pattern.permute.xlu0 0
        %2541 = vperm.xlu0 %2540, %v2511
        %v2542 = vpop.permute.xlu0 %2541
        %2545 = vset.pattern.permute.xlu0 0
        %2546 = vperm.xlu0 %2545, %v2512
        %v2547 = vpop.permute.xlu0 %2546
        %2550 = vset.pattern.permute.xlu0 0
        %2551 = vperm.xlu0 %2550, %v2513
        %v2552 = vpop.permute.xlu0 %2551
        %2555 = vset.pattern.permute.xlu0 0
        %2556 = vperm.xlu0 %2555, %v2514
        %v2557 = vpop.permute.xlu0 %2556
        %2560 = vset.pattern.permute.xlu0 0
        %2561 = vperm.xlu0 %2560, %v2515
        %v2562 = vpop.permute.xlu0 %2561
        %2565 = vset.pattern.permute.xlu0 0
        %2566 = vperm.xlu0 %2565, %v2516
        %v2567 = vpop.permute.xlu0 %2566
        %2570 = vset.pattern.permute.xlu0 0
        %2571 = vperm.xlu0 %2570, %v2517
        %v2572 = vpop.permute.xlu0 %2571
        %2575 = vset.pattern.permute.xlu0 0
        %2576 = vperm.xlu0 %2575, %v2518
        %v2577 = vpop.permute.xlu0 %2576
        %2580 = vset.pattern.permute.xlu0 0
        %2581 = vperm.xlu0 %2580, %v2519
        %v2582 = vpop.permute.xlu0 %2581
        %2585 = vset.pattern.permute.xlu0 0
        %2586 = vperm.xlu0 %2585, %v2520
        %v2587 = vpop.permute.xlu0 %2586
        %2590 = vset.pattern.permute.xlu0 0
        %2591 = vperm.xlu0 %2590, %v2521
        %v2592 = vpop.permute.xlu0 %2591
        %2595 = vset.pattern.permute.xlu0 0
        %2596 = vperm.xlu0 %2595, %v2522
        %v2597 = vpop.permute.xlu0 %2596
        %2600 = vset.pattern.permute.xlu0 0
        %2601 = vperm.xlu0 %2600, %v2523
        %v2602 = vpop.permute.xlu0 %2601
        %v2604 = vmul.f32 %v2430, %v2527
        %v2605 = vmul.f32 %v2434, %v2532
        %v2606 = vmul.f32 %v2440, %v2537
        %v2607 = vmul.f32 %v2444, %v2542
        %v2608 = vmul.f32 %v2450, %v2547
        %v2609 = vmul.f32 %v2454, %v2552
        %v2610 = vmul.f32 %v2460, %v2557
        %v2611 = vmul.f32 %v2464, %v2562
        %v2612 = vmul.f32 %v2470, %v2567
        %v2613 = vmul.f32 %v2474, %v2572
        %v2614 = vmul.f32 %v2480, %v2577
        %v2615 = vmul.f32 %v2484, %v2582
        %v2616 = vmul.f32 %v2490, %v2587
        %v2617 = vmul.f32 %v2494, %v2592
        %v2618 = vmul.f32 %v2500, %v2597
        %v2619 = vmul.f32 %v2504, %v2602
        %vm2620 = vcmp.gt.f32.partialorder %v2604, 20.0
        %vm2621 = vcmp.gt.f32.partialorder %v2605, 20.0
        %vm2622 = vcmp.gt.f32.partialorder %v2606, 20.0
        %vm2623 = vcmp.gt.f32.partialorder %v2607, 20.0
        %vm2624 = vcmp.gt.f32.partialorder %v2608, 20.0
        %vm2625 = vcmp.gt.f32.partialorder %v2609, 20.0
        %vm2626 = vcmp.gt.f32.partialorder %v2610, 20.0
        %vm2627 = vcmp.gt.f32.partialorder %v2611, 20.0
        %vm2628 = vcmp.gt.f32.partialorder %v2612, 20.0
        %vm2629 = vcmp.gt.f32.partialorder %v2613, 20.0
        %vm2630 = vcmp.gt.f32.partialorder %v2614, 20.0
        %vm2631 = vcmp.gt.f32.partialorder %v2615, 20.0
        %vm2632 = vcmp.gt.f32.partialorder %v2616, 20.0
        %vm2633 = vcmp.gt.f32.partialorder %v2617, 20.0
        %vm2634 = vcmp.gt.f32.partialorder %v2618, 20.0
        %vm2635 = vcmp.gt.f32.partialorder %v2619, 20.0
        %v2636 = vmin.f32 %v2604, 20.0
        %v2637 = vmin.f32 %v2605, 20.0
        %v2638 = vmin.f32 %v2606, 20.0
        %v2639 = vmin.f32 %v2607, 20.0
        %v2640 = vmin.f32 %v2608, 20.0
        %v2641 = vmin.f32 %v2609, 20.0
        %v2642 = vmin.f32 %v2610, 20.0
        %v2643 = vmin.f32 %v2611, 20.0
        %v2644 = vmin.f32 %v2612, 20.0
        %v2645 = vmin.f32 %v2613, 20.0
        %v2646 = vmin.f32 %v2614, 20.0
        %v2647 = vmin.f32 %v2615, 20.0
        %v2648 = vmin.f32 %v2616, 20.0
        %v2649 = vmin.f32 %v2617, 20.0
        %v2650 = vmin.f32 %v2618, 20.0
        %v2651 = vmin.f32 %v2619, 20.0
        %v2652 = vmul.f32 %v2636, 1.442695
        %v2653 = vpow.pop %v2652
        %v2654 = vmul.f32 %v2637, 1.442695
        %v2655 = vpow.pop %v2654
        %v2656 = vmul.f32 %v2638, 1.442695
        %v2657 = vpow.pop %v2656
        %v2658 = vmul.f32 %v2639, 1.442695
        %v2659 = vpow.pop %v2658
        %v2660 = vmul.f32 %v2640, 1.442695
        %v2661 = vpow.pop %v2660
        %v2662 = vmul.f32 %v2641, 1.442695
        %v2663 = vpow.pop %v2662
        %v2664 = vmul.f32 %v2642, 1.442695
        %v2665 = vpow.pop %v2664
        %v2666 = vmul.f32 %v2643, 1.442695
        %v2667 = vpow.pop %v2666
        %v2668 = vmul.f32 %v2644, 1.442695
        %v2669 = vpow.pop %v2668
        %v2670 = vmul.f32 %v2645, 1.442695
        %v2671 = vpow.pop %v2670
        %v2672 = vmul.f32 %v2646, 1.442695
        %v2673 = vpow.pop %v2672
        %v2674 = vmul.f32 %v2647, 1.442695
        %v2675 = vpow.pop %v2674
        %v2676 = vmul.f32 %v2648, 1.442695
        %v2677 = vpow.pop %v2676
        %v2678 = vmul.f32 %v2649, 1.442695
        %v2679 = vpow.pop %v2678
        %v2680 = vmul.f32 %v2650, 1.442695
        %v2681 = vpow.pop %v2680
        %v2682 = vmul.f32 %v2651, 1.442695
        %v2683 = vpow.pop %v2682
        %v2684 = vadd.f32 %v2653, 1.0
        %v2685 = vlog2.pop %v2684
        %v2686 = vmul.f32 %v2685, 0.6931472
        %v2687 = vmul.f32 -0.5, %v2653
        %v2688 = vadd.f32 %v2687, 1.0
        %v2689 = vmul.f32 %v2688, %v2653
        %v2690 = vand.u32 2147483647, %v2653
        %vm2691 = vcmp.lt.f32.partialorder %v2690, 0.0004427343
        %v2692 = vsel %vm2691, %v2689, %v2686
        %v2693 = vadd.f32 %v2655, 1.0
        %v2694 = vlog2.pop %v2693
        %v2695 = vmul.f32 %v2694, 0.6931472
        %v2696 = vmul.f32 -0.5, %v2655
        %v2697 = vadd.f32 %v2696, 1.0
        %v2698 = vmul.f32 %v2697, %v2655
        %v2699 = vand.u32 2147483647, %v2655
        %vm2700 = vcmp.lt.f32.partialorder %v2699, 0.0004427343
        %v2701 = vsel %vm2700, %v2698, %v2695
        %v2702 = vadd.f32 %v2657, 1.0
        %v2703 = vlog2.pop %v2702
        %v2704 = vmul.f32 %v2703, 0.6931472
        %v2705 = vmul.f32 -0.5, %v2657
        %v2706 = vadd.f32 %v2705, 1.0
        %v2707 = vmul.f32 %v2706, %v2657
        %v2708 = vand.u32 2147483647, %v2657
        %vm2709 = vcmp.lt.f32.partialorder %v2708, 0.0004427343
        %v2710 = vsel %vm2709, %v2707, %v2704
        %v2711 = vadd.f32 %v2659, 1.0
        %v2712 = vlog2.pop %v2711
        %v2713 = vmul.f32 %v2712, 0.6931472
        %v2714 = vmul.f32 -0.5, %v2659
        %v2715 = vadd.f32 %v2714, 1.0
        %v2716 = vmul.f32 %v2715, %v2659
        %v2717 = vand.u32 2147483647, %v2659
        %vm2718 = vcmp.lt.f32.partialorder %v2717, 0.0004427343
        %v2719 = vsel %vm2718, %v2716, %v2713
        %v2720 = vadd.f32 %v2661, 1.0
        %v2721 = vlog2.pop %v2720
        %v2722 = vmul.f32 %v2721, 0.6931472
        %v2723 = vmul.f32 -0.5, %v2661
        %v2724 = vadd.f32 %v2723, 1.0
        %v2725 = vmul.f32 %v2724, %v2661
        %v2726 = vand.u32 2147483647, %v2661
        %vm2727 = vcmp.lt.f32.partialorder %v2726, 0.0004427343
        %v2728 = vsel %vm2727, %v2725, %v2722
        %v2729 = vadd.f32 %v2663, 1.0
        %v2730 = vlog2.pop %v2729
        %v2731 = vmul.f32 %v2730, 0.6931472
        %v2732 = vmul.f32 -0.5, %v2663
        %v2733 = vadd.f32 %v2732, 1.0
        %v2734 = vmul.f32 %v2733, %v2663
        %v2735 = vand.u32 2147483647, %v2663
        %vm2736 = vcmp.lt.f32.partialorder %v2735, 0.0004427343
        %v2737 = vsel %vm2736, %v2734, %v2731
        %v2738 = vadd.f32 %v2665, 1.0
        %v2739 = vlog2.pop %v2738
        %v2740 = vmul.f32 %v2739, 0.6931472
        %v2741 = vmul.f32 -0.5, %v2665
        %v2742 = vadd.f32 %v2741, 1.0
        %v2743 = vmul.f32 %v2742, %v2665
        %v2744 = vand.u32 2147483647, %v2665
        %vm2745 = vcmp.lt.f32.partialorder %v2744, 0.0004427343
        %v2746 = vsel %vm2745, %v2743, %v2740
        %v2747 = vadd.f32 %v2667, 1.0
        %v2748 = vlog2.pop %v2747
        %v2749 = vmul.f32 %v2748, 0.6931472
        %v2750 = vmul.f32 -0.5, %v2667
        %v2751 = vadd.f32 %v2750, 1.0
        %v2752 = vmul.f32 %v2751, %v2667
        %v2753 = vand.u32 2147483647, %v2667
        %vm2754 = vcmp.lt.f32.partialorder %v2753, 0.0004427343
        %v2755 = vsel %vm2754, %v2752, %v2749
        %v2756 = vadd.f32 %v2669, 1.0
        %v2757 = vlog2.pop %v2756
        %v2758 = vmul.f32 %v2757, 0.6931472
        %v2759 = vmul.f32 -0.5, %v2669
        %v2760 = vadd.f32 %v2759, 1.0
        %v2761 = vmul.f32 %v2760, %v2669
        %v2762 = vand.u32 2147483647, %v2669
        %vm2763 = vcmp.lt.f32.partialorder %v2762, 0.0004427343
        %v2764 = vsel %vm2763, %v2761, %v2758
        %v2765 = vadd.f32 %v2671, 1.0
        %v2766 = vlog2.pop %v2765
        %v2767 = vmul.f32 %v2766, 0.6931472
        %v2768 = vmul.f32 -0.5, %v2671
        %v2769 = vadd.f32 %v2768, 1.0
        %v2770 = vmul.f32 %v2769, %v2671
        %v2771 = vand.u32 2147483647, %v2671
        %vm2772 = vcmp.lt.f32.partialorder %v2771, 0.0004427343
        %v2773 = vsel %vm2772, %v2770, %v2767
        %v2774 = vadd.f32 %v2673, 1.0
        %v2775 = vlog2.pop %v2774
        %v2776 = vmul.f32 %v2775, 0.6931472
        %v2777 = vmul.f32 -0.5, %v2673
        %v2778 = vadd.f32 %v2777, 1.0
        %v2779 = vmul.f32 %v2778, %v2673
        %v2780 = vand.u32 2147483647, %v2673
        %vm2781 = vcmp.lt.f32.partialorder %v2780, 0.0004427343
        %v2782 = vsel %vm2781, %v2779, %v2776
        %v2783 = vadd.f32 %v2675, 1.0
        %v2784 = vlog2.pop %v2783
        %v2785 = vmul.f32 %v2784, 0.6931472
        %v2786 = vmul.f32 -0.5, %v2675
        %v2787 = vadd.f32 %v2786, 1.0
        %v2788 = vmul.f32 %v2787, %v2675
        %v2789 = vand.u32 2147483647, %v2675
        %vm2790 = vcmp.lt.f32.partialorder %v2789, 0.0004427343
        %v2791 = vsel %vm2790, %v2788, %v2785
        %v2792 = vadd.f32 %v2677, 1.0
        %v2793 = vlog2.pop %v2792
        %v2794 = vmul.f32 %v2793, 0.6931472
        %v2795 = vmul.f32 -0.5, %v2677
        %v2796 = vadd.f32 %v2795, 1.0
        %v2797 = vmul.f32 %v2796, %v2677
        %v2798 = vand.u32 2147483647, %v2677
        %vm2799 = vcmp.lt.f32.partialorder %v2798, 0.0004427343
        %v2800 = vsel %vm2799, %v2797, %v2794
        %v2801 = vadd.f32 %v2679, 1.0
        %v2802 = vlog2.pop %v2801
        %v2803 = vmul.f32 %v2802, 0.6931472
        %v2804 = vmul.f32 -0.5, %v2679
        %v2805 = vadd.f32 %v2804, 1.0
        %v2806 = vmul.f32 %v2805, %v2679
        %v2807 = vand.u32 2147483647, %v2679
        %vm2808 = vcmp.lt.f32.partialorder %v2807, 0.0004427343
        %v2809 = vsel %vm2808, %v2806, %v2803
        %v2810 = vadd.f32 %v2681, 1.0
        %v2811 = vlog2.pop %v2810
        %v2812 = vmul.f32 %v2811, 0.6931472
        %v2813 = vmul.f32 -0.5, %v2681
        %v2814 = vadd.f32 %v2813, 1.0
        %v2815 = vmul.f32 %v2814, %v2681
        %v2816 = vand.u32 2147483647, %v2681
        %vm2817 = vcmp.lt.f32.partialorder %v2816, 0.0004427343
        %v2818 = vsel %vm2817, %v2815, %v2812
        %v2819 = vadd.f32 %v2683, 1.0
        %v2820 = vlog2.pop %v2819
        %v2821 = vmul.f32 %v2820, 0.6931472
        %v2822 = vmul.f32 -0.5, %v2683
        %v2823 = vadd.f32 %v2822, 1.0
        %v2824 = vmul.f32 %v2823, %v2683
        %v2825 = vand.u32 2147483647, %v2683
        %vm2826 = vcmp.lt.f32.partialorder %v2825, 0.0004427343
        %v2827 = vsel %vm2826, %v2824, %v2821
        %v2828 = vsel %vm2620, %v2604, %v2692
        %v2829 = vsel %vm2621, %v2605, %v2701
        %v2830 = vsel %vm2622, %v2606, %v2710
        %v2831 = vsel %vm2623, %v2607, %v2719
        %v2832 = vsel %vm2624, %v2608, %v2728
        %v2833 = vsel %vm2625, %v2609, %v2737
        %v2834 = vsel %vm2626, %v2610, %v2746
        %v2835 = vsel %vm2627, %v2611, %v2755
        %v2836 = vsel %vm2628, %v2612, %v2764
        %v2837 = vsel %vm2629, %v2613, %v2773
        %v2838 = vsel %vm2630, %v2614, %v2782
        %v2839 = vsel %vm2631, %v2615, %v2791
        %v2840 = vsel %vm2632, %v2616, %v2800
        %v2841 = vsel %vm2633, %v2617, %v2809
        %v2842 = vsel %vm2634, %v2618, %v2818
        %v2843 = vsel %vm2635, %v2619, %v2827
        %v2844 = vadd.f32 %v605, %v2828
        %v2845 = vadd.f32 %v606, %v2829
        %v2846 = vadd.f32 %v607, %v2830
        %v2847 = vadd.f32 %v608, %v2831
        %v2848 = vadd.f32 %v609, %v2832
        %v2849 = vadd.f32 %v610, %v2833
        %v2850 = vadd.f32 %v611, %v2834
        %v2851 = vadd.f32 %v612, %v2835
        %v2852 = vadd.f32 %v613, %v2836
        %v2853 = vadd.f32 %v614, %v2837
        %v2854 = vadd.f32 %v615, %v2838
        %v2855 = vadd.f32 %v616, %v2839
        %v2856 = vadd.f32 %v617, %v2840
        %v2857 = vadd.f32 %v618, %v2841
        %v2858 = vadd.f32 %v619, %v2842
        %v2859 = vadd.f32 %v620, %v2843
        %2860 = vadd.xlane.f32.xlu0 %v2844
        %v2861 = vpop.xlane.xlu0 %2860
        %2862 = vadd.xlane.f32.xlu0 %v2845
        %v2863 = vpop.xlane.xlu0 %2862
        %2864 = vadd.xlane.f32.xlu0 %v2846
        %v2865 = vpop.xlane.xlu0 %2864
        %2866 = vadd.xlane.f32.xlu0 %v2847
        %v2867 = vpop.xlane.xlu0 %2866
        %2868 = vadd.xlane.f32.xlu0 %v2848
        %v2869 = vpop.xlane.xlu0 %2868
        %2870 = vadd.xlane.f32.xlu0 %v2849
        %v2871 = vpop.xlane.xlu0 %2870
        %2872 = vadd.xlane.f32.xlu0 %v2850
        %v2873 = vpop.xlane.xlu0 %2872
        %2874 = vadd.xlane.f32.xlu0 %v2851
        %v2875 = vpop.xlane.xlu0 %2874
        %2876 = vadd.xlane.f32.xlu0 %v2852
        %v2877 = vpop.xlane.xlu0 %2876
        %2878 = vadd.xlane.f32.xlu0 %v2853
        %v2879 = vpop.xlane.xlu0 %2878
        %2880 = vadd.xlane.f32.xlu0 %v2854
        %v2881 = vpop.xlane.xlu0 %2880
        %2882 = vadd.xlane.f32.xlu0 %v2855
        %v2883 = vpop.xlane.xlu0 %2882
        %2884 = vadd.xlane.f32.xlu0 %v2856
        %v2885 = vpop.xlane.xlu0 %2884
        %2886 = vadd.xlane.f32.xlu0 %v2857
        %v2887 = vpop.xlane.xlu0 %2886
        %2888 = vadd.xlane.f32.xlu0 %v2858
        %v2889 = vpop.xlane.xlu0 %2888
        %2890 = vadd.xlane.f32.xlu0 %v2859
        %v2891 = vpop.xlane.xlu0 %2890
        %v2892 = vrcp.pop 128.0
        %v2893 = vmul.f32 %v2861, %v2892
        %v2894 = vmul.f32 %v2863, %v2892
        %v2895 = vmul.f32 %v2865, %v2892
        %v2896 = vmul.f32 %v2867, %v2892
        %v2897 = vmul.f32 %v2869, %v2892
        %v2898 = vmul.f32 %v2871, %v2892
        %v2899 = vmul.f32 %v2873, %v2892
        %v2900 = vmul.f32 %v2875, %v2892
        %v2901 = vmul.f32 %v2877, %v2892
        %v2902 = vmul.f32 %v2879, %v2892
        %v2903 = vmul.f32 %v2881, %v2892
        %v2904 = vmul.f32 %v2883, %v2892
        %v2905 = vmul.f32 %v2885, %v2892
        %v2906 = vmul.f32 %v2887, %v2892
        %v2907 = vmul.f32 %v2889, %v2892
        %v2908 = vmul.f32 %v2891, %v2892
        %v2909 = vsub.f32 %v2844, %v2893
        %v2910 = vsub.f32 %v2845, %v2894
        %v2911 = vsub.f32 %v2846, %v2895
        %v2912 = vsub.f32 %v2847, %v2896
        %v2913 = vsub.f32 %v2848, %v2897
        %v2914 = vsub.f32 %v2849, %v2898
        %v2915 = vsub.f32 %v2850, %v2899
        %v2916 = vsub.f32 %v2851, %v2900
        %v2917 = vsub.f32 %v2852, %v2901
        %v2918 = vsub.f32 %v2853, %v2902
        %v2919 = vsub.f32 %v2854, %v2903
        %v2920 = vsub.f32 %v2855, %v2904
        %v2921 = vsub.f32 %v2856, %v2905
        %v2922 = vsub.f32 %v2857, %v2906
        %v2923 = vsub.f32 %v2858, %v2907
        %v2924 = vsub.f32 %v2859, %v2908
        %v2925 = vmul.f32 %v2909, %v2909
        %v2926 = vmul.f32 %v2910, %v2910
        %v2927 = vmul.f32 %v2911, %v2911
        %v2928 = vmul.f32 %v2912, %v2912
        %v2929 = vmul.f32 %v2913, %v2913
        %v2930 = vmul.f32 %v2914, %v2914
        %v2931 = vmul.f32 %v2915, %v2915
        %v2932 = vmul.f32 %v2916, %v2916
        %v2933 = vmul.f32 %v2917, %v2917
        %v2934 = vmul.f32 %v2918, %v2918
        %v2935 = vmul.f32 %v2919, %v2919
        %v2936 = vmul.f32 %v2920, %v2920
        %v2937 = vmul.f32 %v2921, %v2921
        %v2938 = vmul.f32 %v2922, %v2922
        %v2939 = vmul.f32 %v2923, %v2923
        %v2940 = vmul.f32 %v2924, %v2924
        %2941 = vadd.xlane.f32.xlu0 %v2925
        %v2942 = vpop.xlane.xlu0 %2941
        %2943 = vadd.xlane.f32.xlu0 %v2926
        %v2944 = vpop.xlane.xlu0 %2943
        %2945 = vadd.xlane.f32.xlu0 %v2927
        %v2946 = vpop.xlane.xlu0 %2945
        %2947 = vadd.xlane.f32.xlu0 %v2928
        %v2948 = vpop.xlane.xlu0 %2947
        %2949 = vadd.xlane.f32.xlu0 %v2929
        %v2950 = vpop.xlane.xlu0 %2949
        %2951 = vadd.xlane.f32.xlu0 %v2930
        %v2952 = vpop.xlane.xlu0 %2951
        %2953 = vadd.xlane.f32.xlu0 %v2931
        %v2954 = vpop.xlane.xlu0 %2953
        %2955 = vadd.xlane.f32.xlu0 %v2932
        %v2956 = vpop.xlane.xlu0 %2955
        %2957 = vadd.xlane.f32.xlu0 %v2933
        %v2958 = vpop.xlane.xlu0 %2957
        %2959 = vadd.xlane.f32.xlu0 %v2934
        %v2960 = vpop.xlane.xlu0 %2959
        %2961 = vadd.xlane.f32.xlu0 %v2935
        %v2962 = vpop.xlane.xlu0 %2961
        %2963 = vadd.xlane.f32.xlu0 %v2936
        %v2964 = vpop.xlane.xlu0 %2963
        %2965 = vadd.xlane.f32.xlu0 %v2937
        %v2966 = vpop.xlane.xlu0 %2965
        %2967 = vadd.xlane.f32.xlu0 %v2938
        %v2968 = vpop.xlane.xlu0 %2967
        %2969 = vadd.xlane.f32.xlu0 %v2939
        %v2970 = vpop.xlane.xlu0 %2969
        %2971 = vadd.xlane.f32.xlu0 %v2940
        %v2972 = vpop.xlane.xlu0 %2971
        %v2973 = vmul.f32 %v2942, %v2892
        %v2974 = vmul.f32 %v2944, %v2892
        %v2975 = vmul.f32 %v2946, %v2892
        %v2976 = vmul.f32 %v2948, %v2892
        %v2977 = vmul.f32 %v2950, %v2892
        %v2978 = vmul.f32 %v2952, %v2892
        %v2979 = vmul.f32 %v2954, %v2892
        %v2980 = vmul.f32 %v2956, %v2892
        %v2981 = vmul.f32 %v2958, %v2892
        %v2982 = vmul.f32 %v2960, %v2892
        %v2983 = vmul.f32 %v2962, %v2892
        %v2984 = vmul.f32 %v2964, %v2892
        %v2985 = vmul.f32 %v2966, %v2892
        %v2986 = vmul.f32 %v2968, %v2892
        %v2987 = vmul.f32 %v2970, %v2892
        %v2988 = vmul.f32 %v2972, %v2892
        %v2989 = vadd.f32 %v2973, 1e-05
        %v2990 = vadd.f32 %v2974, 1e-05
        %v2991 = vadd.f32 %v2975, 1e-05
        %v2992 = vadd.f32 %v2976, 1e-05
        %v2993 = vadd.f32 %v2977, 1e-05
        %v2994 = vadd.f32 %v2978, 1e-05
        %v2995 = vadd.f32 %v2979, 1e-05
        %v2996 = vadd.f32 %v2980, 1e-05
        %v2997 = vadd.f32 %v2981, 1e-05
        %v2998 = vadd.f32 %v2982, 1e-05
        %v2999 = vadd.f32 %v2983, 1e-05
        %v3000 = vadd.f32 %v2984, 1e-05
        %v3001 = vadd.f32 %v2985, 1e-05
        %v3002 = vadd.f32 %v2986, 1e-05
        %v3003 = vadd.f32 %v2987, 1e-05
        %v3004 = vadd.f32 %v2988, 1e-05
        %v3005 = vrsqrt.pop %v2989
        %v3006 = vrsqrt.pop %v2990
        %v3007 = vrsqrt.pop %v2991
        %v3008 = vrsqrt.pop %v2992
        %v3009 = vrsqrt.pop %v2993
        %v3010 = vrsqrt.pop %v2994
        %v3011 = vrsqrt.pop %v2995
        %v3012 = vrsqrt.pop %v2996
        %v3013 = vrsqrt.pop %v2997
        %v3014 = vrsqrt.pop %v2998
        %v3015 = vrsqrt.pop %v2999
        %v3016 = vrsqrt.pop %v3000
        %v3017 = vrsqrt.pop %v3001
        %v3018 = vrsqrt.pop %v3002
        %v3019 = vrsqrt.pop %v3003
        %v3020 = vrsqrt.pop %v3004
        %v3021 = vmul.f32 %v2909, %v3005
        %v3022 = vmul.f32 %v2910, %v3006
        %v3023 = vmul.f32 %v2911, %v3007
        %v3024 = vmul.f32 %v2912, %v3008
        %v3025 = vmul.f32 %v2913, %v3009
        %v3026 = vmul.f32 %v2914, %v3010
        %v3027 = vmul.f32 %v2915, %v3011
        %v3028 = vmul.f32 %v2916, %v3012
        %v3029 = vmul.f32 %v2917, %v3013
        %v3030 = vmul.f32 %v2918, %v3014
        %v3031 = vmul.f32 %v2919, %v3015
        %v3032 = vmul.f32 %v2920, %v3016
        %v3033 = vmul.f32 %v2921, %v3017
        %v3034 = vmul.f32 %v2922, %v3018
        %v3035 = vmul.f32 %v2923, %v3019
        %v3036 = vmul.f32 %v2924, %v3020
        %v3037 = vlaneseq
        %v3038 = vshrl.u32 %v3037, 7
        %v3039 = vsub.s32 4, %v3038
        %v3040 = vrot.slane %v277, %v3039
        %v3041 = vmul.f32 %v3021, %v3040
        %v3042 = vmul.f32 %v3022, %v3040
        %v3043 = vmul.f32 %v3023, %v3040
        %v3044 = vmul.f32 %v3024, %v3040
        %v3045 = vmul.f32 %v3025, %v3040
        %v3046 = vmul.f32 %v3026, %v3040
        %v3047 = vmul.f32 %v3027, %v3040
        %v3048 = vmul.f32 %v3028, %v3040
        %v3049 = vmul.f32 %v3029, %v3040
        %v3050 = vmul.f32 %v3030, %v3040
        %v3051 = vmul.f32 %v3031, %v3040
        %v3052 = vmul.f32 %v3032, %v3040
        %v3053 = vmul.f32 %v3033, %v3040
        %v3054 = vmul.f32 %v3034, %v3040
        %v3055 = vmul.f32 %v3035, %v3040
        %v3056 = vmul.f32 %v3036, %v3040
        %v3057 = vlaneseq
        %v3058 = vshrl.u32 %v3057, 7
        %v3059 = vsub.s32 5, %v3058
        %v3060 = vrot.slane %v277, %v3059
        %v3061 = vadd.f32 %v3041, %v3060
        %v3062 = vadd.f32 %v3042, %v3060
        %v3063 = vadd.f32 %v3043, %v3060
        %v3064 = vadd.f32 %v3044, %v3060
        %v3065 = vadd.f32 %v3045, %v3060
        %v3066 = vadd.f32 %v3046, %v3060
        %v3067 = vadd.f32 %v3047, %v3060
        %v3068 = vadd.f32 %v3048, %v3060
        %v3069 = vadd.f32 %v3049, %v3060
        %v3070 = vadd.f32 %v3050, %v3060
        %v3071 = vadd.f32 %v3051, %v3060
        %v3072 = vadd.f32 %v3052, %v3060
        %v3073 = vadd.f32 %v3053, %v3060
        %v3074 = vadd.f32 %v3054, %v3060
        %v3075 = vadd.f32 %v3055, %v3060
        %v3076 = vadd.f32 %v3056, %v3060
        %v3077 = vpack.c.bf16 %v3062, %v3061
        %v3078 = vpack.c.bf16 %v3064, %v3063
        %v3079 = vpack.c.bf16 %v3066, %v3065
        %v3080 = vpack.c.bf16 %v3068, %v3067
        %v3081 = vpack.c.bf16 %v3070, %v3069
        %v3082 = vpack.c.bf16 %v3072, %v3071
        %v3083 = vpack.c.bf16 %v3074, %v3073
        %v3084 = vpack.c.bf16 %v3076, %v3075
        %v3085 = vld [vmem:[%s4] sm:$0xf]
        %v3086 = vld [vmem:[%s4 + $0x4] sm:$0xf]
        %v3087 = vld [vmem:[%s4 + $0x8] sm:$0xf]
        %v3088 = vld [vmem:[%s4 + $0xc] sm:$0xf]
        %v3089 = vld [vmem:[%s4 + $0x10] sm:$0xf]
        %v3090 = vld [vmem:[%s4 + $0x14] sm:$0xf]
        %v3091 = vld [vmem:[%s4 + $0x18] sm:$0xf]
        %v3092 = vld [vmem:[%s4 + $0x1c] sm:$0xf]
        %v3093 = vld [vmem:[%s4 + $0x20] sm:$0xf]
        %v3094 = vld [vmem:[%s4 + $0x24] sm:$0xf]
        %v3095 = vld [vmem:[%s4 + $0x28] sm:$0xf]
        %v3096 = vld [vmem:[%s4 + $0x2c] sm:$0xf]
        %v3097 = vld [vmem:[%s4 + $0x30] sm:$0xf]
        %v3098 = vld [vmem:[%s4 + $0x34] sm:$0xf]
        %v3099 = vld [vmem:[%s4 + $0x38] sm:$0xf]
        %v3100 = vld [vmem:[%s4 + $0x3c] sm:$0xf]
        %v3101 = vlaneseq
        %v3102 = vshrl.u32 %v3101, 7
        %v3103 = vsub.s32 6, %v3102
        %v3104 = vrot.slane %v277, %v3103
        %v3121 = vunpack.c.l.b16 %v3085
        %v3122 = vunpack.c.l.b16 %v3086
        %v3123 = vunpack.c.l.b16 %v3087
        %v3124 = vunpack.c.l.b16 %v3088
        %v3125 = vunpack.c.l.b16 %v3089
        %v3126 = vunpack.c.l.b16 %v3090
        %v3127 = vunpack.c.l.b16 %v3091
        %v3128 = vunpack.c.l.b16 %v3092
        %v3129 = vunpack.c.l.b16 %v3093
        %v3130 = vunpack.c.l.b16 %v3094
        %v3131 = vunpack.c.l.b16 %v3095
        %v3132 = vunpack.c.l.b16 %v3096
        %v3133 = vunpack.c.l.b16 %v3097
        %v3134 = vunpack.c.l.b16 %v3098
        %v3135 = vunpack.c.l.b16 %v3099
        %v3136 = vunpack.c.l.b16 %v3100
        %v3137 = vpack.c.b16 %v3122, %v3121
        %v3138 = vpack.c.b16 %v3124, %v3123
        %v3139 = vpack.c.b16 %v3126, %v3125
        %v3140 = vpack.c.b16 %v3128, %v3127
        %v3141 = vpack.c.b16 %v3130, %v3129
        %v3142 = vpack.c.b16 %v3132, %v3131
        %v3143 = vpack.c.b16 %v3134, %v3133
        %v3144 = vpack.c.b16 %v3136, %v3135
        %3153 = vmatprep.subr.bf16.mxu0 0
        %3154 = vmatpush1.bf16.msra.mxu0 %v3144
        %3155 = vmatprep.subr.bf16.mxu0 0
        %3156 = vmatpush1.bf16.msra.mxu0 %v3143
        %3157 = vmatprep.subr.bf16.mxu0 0
        %3158 = vmatpush1.bf16.msra.mxu0 %v3142
        %3159 = vmatprep.subr.bf16.mxu0 0
        %3160 = vmatpush1.bf16.msra.mxu0 %v3141
        %3161 = vmatprep.subr.bf16.mxu0 0
        %3162 = vmatpush1.bf16.msra.mxu0 %v3140
        %3163 = vmatprep.subr.bf16.mxu0 0
        %3164 = vmatpush1.bf16.msra.mxu0 %v3139
        %3165 = vmatprep.subr.bf16.mxu0 0
        %3166 = vmatpush1.bf16.msra.mxu0 %v3138
        %3167 = vmatprep.subr.bf16.mxu0 0
        %3168 = vmatpush1.bf16.msra.mxu0 %v3137
        %3169 = vmatprep.subr.bf16.mxu0 0
        %3170 = vmatpush2.bf16.msra.mxu0 0
        %3171 = vmatprep.subr.bf16.mxu0 0
        %3172 = vmatpush2.bf16.msra.mxu0 0
        %3173 = vmatprep.subr.bf16.mxu0 0
        %3174 = vmatpush2.bf16.msra.mxu0 0
        %3175 = vmatprep.subr.bf16.mxu0 0
        %3176 = vmatpush2.bf16.msra.mxu0 0
        %3177 = vmatprep.subr.bf16.mxu0 0
        %3178 = vmatpush2.bf16.msra.mxu0 0
        %3179 = vmatprep.subr.bf16.mxu0 0
        %3180 = vmatpush2.bf16.msra.mxu0 0
        %3181 = vmatprep.subr.bf16.mxu0 0
        %3182 = vmatpush2.bf16.msra.mxu0 0
        %3183 = vmatprep.subr.bf16.mxu0 0
        %3184 = vmatpush2.bf16.msra.mxu0 0
        %3185 = vmatprep.mubr.bf16.mxu0 0
        %3186 = vmatmul.mubr.bf16.gmra.mxu0 %v3077
        %v3187 = vpop.f32.mrf.mxu0
        %v3188 = vadd.f32 %v3104, %v3187
        %v3189 = vpop.f32.mrf.mxu0
        %v3190 = vpop.f32.mrf.mxu0
        %v3191 = vadd.f32 %v3104, %v3190
        %v3192 = vpop.f32.mrf.mxu0
        %3193 = vmatprep.mubr.bf16.mxu0 0
        %3194 = vmatmul.mubr.bf16.gmra.mxu0 %v3078
        %v3195 = vpop.f32.mrf.mxu0
        %v3196 = vadd.f32 %v3104, %v3195
        %v3197 = vpop.f32.mrf.mxu0
        %v3198 = vpop.f32.mrf.mxu0
        %v3199 = vadd.f32 %v3104, %v3198
        %v3200 = vpop.f32.mrf.mxu0
        %3201 = vmatprep.mubr.bf16.mxu0 0
        %3202 = vmatmul.mubr.bf16.gmra.mxu0 %v3079
        %v3203 = vpop.f32.mrf.mxu0
        %v3204 = vadd.f32 %v3104, %v3203
        %v3205 = vpop.f32.mrf.mxu0
        %v3206 = vpop.f32.mrf.mxu0
        %v3207 = vadd.f32 %v3104, %v3206
        %v3208 = vpop.f32.mrf.mxu0
        %3209 = vmatprep.mubr.bf16.mxu0 0
        %3210 = vmatmul.mubr.bf16.gmra.mxu0 %v3080
        %v3211 = vpop.f32.mrf.mxu0
        %v3212 = vadd.f32 %v3104, %v3211
        %v3213 = vpop.f32.mrf.mxu0
        %v3214 = vpop.f32.mrf.mxu0
        %v3215 = vadd.f32 %v3104, %v3214
        %v3216 = vpop.f32.mrf.mxu0
        %3217 = vmatprep.mubr.bf16.mxu0 0
        %3218 = vmatmul.mubr.bf16.gmra.mxu0 %v3081
        %v3219 = vpop.f32.mrf.mxu0
        %v3220 = vadd.f32 %v3104, %v3219
        %v3221 = vpop.f32.mrf.mxu0
        %v3222 = vpop.f32.mrf.mxu0
        %v3223 = vadd.f32 %v3104, %v3222
        %v3224 = vpop.f32.mrf.mxu0
        %3225 = vmatprep.mubr.bf16.mxu0 0
        %3226 = vmatmul.mubr.bf16.gmra.mxu0 %v3082
        %v3227 = vpop.f32.mrf.mxu0
        %v3228 = vadd.f32 %v3104, %v3227
        %v3229 = vpop.f32.mrf.mxu0
        %v3230 = vpop.f32.mrf.mxu0
        %v3231 = vadd.f32 %v3104, %v3230
        %v3232 = vpop.f32.mrf.mxu0
        %3233 = vmatprep.mubr.bf16.mxu0 0
        %3234 = vmatmul.mubr.bf16.gmra.mxu0 %v3083
        %v3235 = vpop.f32.mrf.mxu0
        %v3236 = vadd.f32 %v3104, %v3235
        %v3237 = vpop.f32.mrf.mxu0
        %v3238 = vpop.f32.mrf.mxu0
        %v3239 = vadd.f32 %v3104, %v3238
        %v3240 = vpop.f32.mrf.mxu0
        %3241 = vmatprep.mubr.bf16.mxu0 0
        %3242 = vmatmul.mubr.bf16.gmra.mxu0 %v3084
        %v3243 = vpop.f32.mrf.mxu0
        %v3244 = vadd.f32 %v3104, %v3243
        %v3245 = vpop.f32.mrf.mxu0
        %v3246 = vpop.f32.mrf.mxu0
        %v3247 = vadd.f32 %v3104, %v3246
        %v3248 = vpop.f32.mrf.mxu0
        %3249 = vdwg.mxu0
        %3250 = vst [vmem:[%s261] sm:$0xff] %v3188
        %3251 = vst [vmem:[%s261 + $0x8] sm:$0xff] %v3191
        %3252 = vst [vmem:[%s261 + $0x10] sm:$0xff] %v3196
        %3253 = vst [vmem:[%s261 + $0x18] sm:$0xff] %v3199
        %3254 = vst [vmem:[%s261 + $0x20] sm:$0xff] %v3204
        %3255 = vst [vmem:[%s261 + $0x28] sm:$0xff] %v3207
        %3256 = vst [vmem:[%s261 + $0x30] sm:$0xff] %v3212
        %3257 = vst [vmem:[%s261 + $0x38] sm:$0xff] %v3215
        %3258 = vst [vmem:[%s261 + $0x40] sm:$0xff] %v3220
        %3259 = vst [vmem:[%s261 + $0x48] sm:$0xff] %v3223
        %3260 = vst [vmem:[%s261 + $0x50] sm:$0xff] %v3228
        %3261 = vst [vmem:[%s261 + $0x58] sm:$0xff] %v3231
        %3262 = vst [vmem:[%s261 + $0x60] sm:$0xff] %v3236
        %3263 = vst [vmem:[%s261 + $0x68] sm:$0xff] %v3239
        %3264 = vst [vmem:[%s261 + $0x70] sm:$0xff] %v3244
        %3265 = vst [vmem:[%s261 + $0x78] sm:$0xff] %v3247
        %s3266 = sand.u32 %s164, 1
        %s3267 = scalar_lea.sflag [#allocation3], %s3266
        %s3268 = sand.u32 %s164, 1
        %s3269 = smul.addr %s3268, 128
        %s3270 = scalar_lea.vmem [#allocation2], %s3269
        // Predicated region
        $region45: #{tpu_custom_call.1} parent=43 // pred_check
          %p3271 = pneg %p174
        $region46: #{tpu_custom_call.1} parent=43 // pred_check_branch
          %3273 = sbr.rel (%p3271) target = $region48
        $region47: #{tpu_custom_call.1} parent=43 // pred_region
          %s3274 = smul.u32 16, %s20
          %s3276 = ssub.s32 2048, 2048
          %3277 = vsyncadd %s3267, %s3276
          %s3278 = smul.addr %s3274, 128
          %s3279 = scalar_lea.hbm %s6, %s3278
          %s3280 = sshll.u32 %s3270, 4
          %s3281 = int_to_ptr.vmem [resolvable:$true] %s3280
          %3286 = dma.vmem_to_hbm [thread:$0]  %s3281, 2048, %s3279, %s3267, 128, 128, 8
        $region48: #{tpu_custom_call.1} parent=43 // pred_fallthru
          _
      $region44: #{tpu_custom_call.1} parent=5 // pred_fallthru
        _
      %p3287 = scmp.le.s32.totalorder 2, %s15
      // Predicated region
      $region49: #{tpu_custom_call.1} parent=5 // pred_check
        %p3288 = pneg %p3287
      $region50: #{tpu_custom_call.1} parent=5 // pred_check_branch
        %3290 = sbr.rel (%p3288) target = $region52
      $region51: #{tpu_custom_call.1} parent=5 // pred_region
        %s3291 = ssub.s32 %s15, 2
        // Predicated region
        $region53: #{tpu_custom_call.1} parent=51 // pred_check
          %p3292 = pneg %p180
        $region54: #{tpu_custom_call.1} parent=51 // pred_check_branch
          %3294 = sbr.rel (%p3292) target = $region56
        $region55: #{tpu_custom_call.1} parent=51 // pred_region
          %s3295 = sand.u32 %s165, 1
          %s3296 = scalar_lea.sflag [#allocation3], %s3295
          %s3297 = sand.u32 %s165, 1
          %s3298 = smul.addr %s3297, 128
          %s3299 = scalar_lea.vmem [#allocation2], %s3298
          %3300 = dma.done %s3296, 2048
        $region56: #{tpu_custom_call.1} parent=51 // pred_fallthru
          _
      $region52: #{tpu_custom_call.1} parent=5 // pred_fallthru
        _
    $region6: #{tpu_custom_call.1} parent=1 // loop_footer
      %s19 = sadd.s32 1, %s15
    $region7: #{tpu_custom_call.1} parent=1 // loop_footer_branch
      %14 = sbr.rel target = $region3
    $region8: #{tpu_custom_call.1} parent=1 // loop_exit
      _
    %3301 = vsyncpa [#allocation3], 1
    %s3302 = scalar_lea.sflag [#allocation3], 1
    %3303 = vsyncpa %s3302, 1

</llo_original>
